<compile_context>
chip_gen: v5e
topology: v5e:2x2
jax: 0.10.0
libtpu: 0.0.40
codegen_flags: <defaults>
</compile_context>

<pallas_src>
import numpy as np

import jax
import jax.numpy as jnp
from jax import lax
from jax.experimental import pallas as pl
from jax.experimental.pallas import tpu as pltpu


_BN_EPS = 1e-5
_ROUND = 16          # row-padding multiple (bf16 packs 16 sublanes per vreg)

# (name, kh, kw, pad, cin, cout, act, bn_name) — mirrors Net4Group3.__init__
_FIRST_PART = [
    ("fp1", 2, 2, 1, 3, 8, "relu", None),
    ("fp2", 1, 3, 1, 8, 8, "relu", None),
    ("fp3", 2, 2, 0, 8, 16, "relu", "bn3"),
    ("fp4", 1, 3, 0, 16, 16, "relu", None),
    ("fp5", 3, 3, 0, 16, 16, "relu", None),
]
_CONV_1 = [
    ("c1", 2, 2, 0, 64, 64, "relu", None),
    ("c2", 2, 2, 0, 64, 64, "relu", "bnc2"),
    ("c3", 2, 2, 0, 64, 3, "sigmoid", None),
]


def _pad_up(n, m=_ROUND):
    return ((n + m - 1) // m) * m


# -----------------------------------------------------------------------------
# Host-side constants: per-batch-block selection matrices
# -----------------------------------------------------------------------------
def _conv_taps(nb, H, W, kh, kw, ph, pw, mi_stored):
    """Block-level (nb samples) 0/1 per-tap selection matrices for a stride-1
    conv with zero padding.

    Activations are 2-D (rows = nb*H*W real rows then zero-padding rows,
    lanes = C) with real row index (n*H + y)*W + x.  For tap t = i*kw + j:
    (S[t] @ X)[r_out, :] is the input row feeding output position r_out, or
    zeros where the tap lands in zero padding / row padding.
    Returns S of shape (kh*kw, Mo_blk, mi_stored) with Mo_blk a multiple of 16.
    """
    Ho = H + 2 * ph - kh + 1
    Wo = W + 2 * pw - kw + 1
    mo = _pad_up(nb * Ho * Wo)
    S = np.zeros((kh * kw, mo, mi_stored), np.float32)
    for n in range(nb):
        for oy in range(Ho):
            for ox in range(Wo):
                r = (n * Ho + oy) * Wo + ox
                for i in range(kh):
                    for j in range(kw):
                        iy, ix = oy + i - ph, ox + j - pw
                        if 0 <= iy < H and 0 <= ix < W:
                            S[i * kw + j, r, (n * H + iy) * W + ix] = 1.0
    return S, Ho, Wo


def _upsample_scatter(nb, H, W):
    """Scatter matrix of ConvTranspose2d(kernel=1, stride=2): output spatial is
    (2H-1, 2W-1); even positions take the matching input row, odd positions are
    all-zero rows (bias only).  Only used host-side for composition into c1."""
    Ho, Wo = 2 * H - 1, 2 * W - 1
    S = np.zeros((nb * Ho * Wo, nb * H * W), np.float32)
    for n in range(nb):
        for y in range(H):
            for x in range(W):
                S[(n * Ho + 2 * y) * Wo + 2 * x, (n * H + y) * W + x] = 1.0
    return S, Ho, Wo


def _fold(params, name, bn_name, kh, kw, cin, cout):
    """Fold conv bias + (optional) BatchNorm (inference) into weight/bias."""
    w = np.asarray(params[name]["w"], np.float32)          # (kh*kw*cin, cout)
    b = np.asarray(params[name]["b"], np.float32)
    if bn_name is not None:
        bn = params[bn_name]
        scale = np.asarray(bn["gamma"], np.float32) / np.sqrt(
            np.asarray(bn["var"], np.float32) + _BN_EPS)
        w = w * scale[None, :]
        b = b * scale + (np.asarray(bn["beta"], np.float32)
                         - np.asarray(bn["mean"], np.float32) * scale)
    # Row order of w is (kh, kw, cin) — torch (cout,cin,kh,kw) permuted to
    # (kh,kw,cin,cout) and flattened.
    return w.reshape(kh * kw, cin, cout), b.reshape(1, cout)


def prepare_kernel_inputs(params, nb):
    """Build the ordered list of kernel constants for a batch block of `nb`
    samples (shared by every grid step).  S / W are bf16, biases f32."""
    consts = []
    H, W = 4, 8
    mi = nb * H * W                                         # stored input rows

    for name, kh, kw, pad, cin, cout, _act, bn in _FIRST_PART:
        S, Ho, Wo = _conv_taps(nb, H, W, kh, kw, pad, pad, mi)
        wt, b = _fold(params, name, bn, kh, kw, cin, cout)
        T, mo = S.shape[0], S.shape[1]
        consts += [jnp.asarray(S.reshape(T * mo, mi), jnp.bfloat16),
                   jnp.asarray(wt, jnp.bfloat16),
                   jnp.asarray(b, jnp.float32)]
        H, W, mi = Ho, Wo, mo

    # --- up_1 channel mix: cat((h, keypoints, embeddings), C) folded into the
    #     three 16-row blocks of the 48x64 ConvTranspose2d weight -------------
    wu = np.asarray(params["up1"]["w"], np.float32).reshape(3, 16, 64)
    bu = np.asarray(params["up1"]["b"], np.float32)
    consts.append(jnp.asarray(wu, jnp.bfloat16))

    # --- stride-2 scatter (4x4 -> 7x7), composed directly into c1 -----------
    S_up, Hup, Wup = _upsample_scatter(nb, H, W)            # (nb*49, nb*16)
    my = mi                                                 # rows of y (= nb*16)

    name, kh, kw, pad, cin, cout, _act, bn = _CONV_1[0]
    S_c1, Ho, Wo = _conv_taps(nb, Hup, Wup, kh, kw, pad, pad, nb * Hup * Wup)
    wt, b = _fold(params, name, bn, kh, kw, cin, cout)
    T, mo = S_c1.shape[0], S_c1.shape[1]
    S_comp = np.einsum("tom,mk->tok", S_c1, S_up)           # gather from y; still 0/1
    hit = S_c1.sum(axis=2, keepdims=True)                   # (T, mo, 1) in {0, 1}
    bw = np.einsum("c,tcd->td", bu, wt)                     # b_up routed through W_c1
    bias_c1 = (hit * bw[:, None, :]).sum(axis=0) + b        # (mo, 64), incl. c1 bias
    consts += [jnp.asarray(S_comp.reshape(T * mo, my), jnp.bfloat16),
               jnp.asarray(wt, jnp.bfloat16),
               jnp.asarray(bias_c1, jnp.float32)]
    H, W, mi = Ho, Wo, mo

    for name, kh, kw, pad, cin, cout, _act, bn in _CONV_1[1:]:
        S, Ho, Wo = _conv_taps(nb, H, W, kh, kw, pad, pad, mi)
        wt, b = _fold(params, name, bn, kh, kw, cin, cout)
        T, mo = S.shape[0], S.shape[1]
        if cout == 3:                                       # pad Cout 3 -> 8
            wt = np.concatenate([wt, np.zeros((T, cin, 5), np.float32)], axis=2)
            b = np.concatenate([b, np.zeros((1, 5), np.float32)], axis=1)
        consts += [jnp.asarray(S.reshape(T * mo, mi), jnp.bfloat16),
                   jnp.asarray(wt, jnp.bfloat16),
                   jnp.asarray(b, jnp.float32)]
        H, W, mi = Ho, Wo, mo

    assert (H, W, mi) == (4, 4, nb * 16), (H, W, mi)
    return consts


# -----------------------------------------------------------------------------
# The fused Pallas kernel (one batch block of `nb` samples per grid step)
# -----------------------------------------------------------------------------
def _gather_conv(h_bf16, s_ref, w_ref, b_row, act):
    """act( sum_t rows_all[t-block] @ W_t + b ) with a single combined gather
    matmul: rows_all = S_layer @ h (exact, since S rows have <= one 1)."""
    T = w_ref.shape[0]
    mo = s_ref.shape[0] // T
    rows = jnp.dot(s_ref[...], h_bf16,
                   preferred_element_type=jnp.float32).astype(jnp.bfloat16)
    acc = None
    for t in range(T):                                      # static unroll, aligned slices
        part = jnp.dot(rows[t * mo:(t + 1) * mo, :], w_ref[t],
                       preferred_element_type=jnp.float32)
        acc = part if acc is None else acc + part
    acc = acc + b_row
    if act == "relu":
        return jnp.maximum(acc, 0.0)
    if act == "sigmoid":
        return 1.0 / (1.0 + jnp.exp(-acc))
    return acc


def _net4group3_kernel(x_ref, kp_ref, em_ref,
                       s1, w1, b1, s2, w2, b2, s3, w3, b3,
                       s4, w4, b4, s5, w5, b5,
                       wu,
                       sc1, wc1, bc1, sc2, wc2, bc2, sc3, wc3, bc3,
                       o_ref):
    bf16 = jnp.bfloat16

    # ---- first_part (BN of fp3 folded host-side) ---------------------------
    h = _gather_conv(x_ref[...], s1, w1, b1[...], "relu").astype(bf16)
    h = _gather_conv(h, s2, w2, b2[...], "relu").astype(bf16)
    h = _gather_conv(h, s3, w3, b3[...], "relu").astype(bf16)
    h = _gather_conv(h, s4, w4, b4[...], "relu").astype(bf16)
    h = _gather_conv(h, s5, w5, b5[...], "relu").astype(bf16)

    # ---- cat((h, keypoints, embeddings), C) @ W_up (concat = 3 row blocks) --
    y = (jnp.dot(h, wu[0], preferred_element_type=jnp.float32)
         + jnp.dot(kp_ref[...], wu[1], preferred_element_type=jnp.float32)
         + jnp.dot(em_ref[...], wu[2], preferred_element_type=jnp.float32))
    y = y.astype(bf16)

    # ---- conv_1 -------------------------------------------------------------
    # c1's gather is composed host-side with the stride-2 scatter (so no
    # scatter matmul, no 7x7 tensor materialized); bc1 is a per-row bias that
    # already contains b_up routed through W_c1 plus c1's own bias (+ folded BN
    # on c2; Cout of c3 padded 3 -> 8).
    h = _gather_conv(y, sc1, wc1, bc1[...], "relu").astype(bf16)
    h = _gather_conv(h, sc2, wc2, bc2[...], "relu").astype(bf16)
    o_ref[...] = _gather_conv(h, sc3, wc3, bc3[...], "sigmoid")


# -----------------------------------------------------------------------------
# Forward wrapper (one pallas_call, batch blocked on a "parallel" grid axis)
# -----------------------------------------------------------------------------
def _const_spec(c):
    nd = c.ndim
    return pl.BlockSpec(tuple(c.shape), lambda i: (0,) * nd)


def net4group3_forward(consts, x, keypoints, embeddings, nb):
    """x: (N,3,4,8), keypoints/embeddings: (N,16,4,4)  ->  (N,3,4,4)."""
    N, _Cx, Hx, Wx = x.shape
    assert N % nb == 0, (N, nb)
    steps = N // nb
    rows_x = Hx * Wx                                        # 32
    rows_o = 16                                             # 4*4

    # NCHW -> NHWC -> (rows = N*H*W, lanes = C), bf16 MXU operands.
    x2d = jnp.transpose(x, (0, 2, 3, 1)).reshape(N * rows_x, 3).astype(jnp.bfloat16)
    kp2d = jnp.transpose(keypoints, (0, 2, 3, 1)).reshape(N * rows_o, 16).astype(jnp.bfloat16)
    em2d = jnp.transpose(embeddings, (0, 2, 3, 1)).reshape(N * rows_o, 16).astype(jnp.bfloat16)

    act_specs = [
        pl.BlockSpec((nb * rows_x, 3), lambda i: (i, 0)),
        pl.BlockSpec((nb * rows_o, 16), lambda i: (i, 0)),
        pl.BlockSpec((nb * rows_o, 16), lambda i: (i, 0)),
    ]
    const_specs = [_const_spec(c) for c in consts]          # constant block across grid
    out_spec = pl.BlockSpec((nb * rows_o, 8), lambda i: (i, 0))

    # Explicit VMEM budget: constants + one activation/output block, double
    # buffered, + headroom for intermediates.  Stays well under v7x's 64 MiB.
    block_bytes = sum(int(c.size) * c.dtype.itemsize for c in consts)
    for a in (x2d, kp2d, em2d):
        block_bytes += (int(a.size) // steps) * a.dtype.itemsize
    block_bytes += (N * rows_o * 8 // steps) * 4
    vmem_limit = int(min(60 * 2**20, max(16 * 2**20, 2 * block_bytes + 4 * 2**20)))

    out2d = pl.pallas_call(
        _net4group3_kernel,
        out_shape=jax.ShapeDtypeStruct((N * rows_o, 8), jnp.float32),
        grid=(steps,),
        in_specs=act_specs + const_specs,
        out_specs=out_spec,
        compiler_params=pltpu.CompilerParams(
            dimension_semantics=("parallel",),              # megacore / v7x 2-TC sharding
            vmem_limit_bytes=vmem_limit),
    )(x2d, kp2d, em2d, *consts)

    out = out2d[:, :3].reshape(N, 4, 4, 3)                  # drop padded channels
    return jnp.transpose(out, (0, 3, 1, 2))


# -----------------------------------------------------------------------------
# Parameters (deterministic synthetic init; shapes follow Net4Group3.__init__)
# -----------------------------------------------------------------------------
def init_params(key):
    keys = iter(jax.random.split(key, 32))

    def conv_p(cin, cout, kh, kw):
        std = float(np.sqrt(2.0 / (kh * kw * cin)))
        return {"w": std * jax.random.normal(next(keys), (kh * kw * cin, cout), jnp.float32),
                "b": 0.05 * jax.random.normal(next(keys), (cout,), jnp.float32)}

    def bn_p(c):
        return {"gamma": 1.0 + 0.1 * jax.random.normal(next(keys), (c,), jnp.float32),
                "beta": 0.05 * jax.random.normal(next(keys), (c,), jnp.float32),
                "mean": 0.05 * jax.random.normal(next(keys), (c,), jnp.float32),
                "var": jnp.abs(1.0 + 0.1 * jax.random.normal(next(keys), (c,), jnp.float32))}

    return {
        "fp1": conv_p(3, 8, 2, 2),
        "fp2": conv_p(8, 8, 1, 3),
        "fp3": conv_p(8, 16, 2, 2), "bn3": bn_p(16),
        "fp4": conv_p(16, 16, 1, 3),
        "fp5": conv_p(16, 16, 3, 3),
        "up1": {"w": float(np.sqrt(1.0 / 48.0))
                * jax.random.normal(next(keys), (48, 64), jnp.float32),
                "b": 0.05 * jax.random.normal(next(keys), (64,), jnp.float32)},
        "c1": conv_p(64, 64, 2, 2),
        "c2": conv_p(64, 64, 2, 2), "bnc2": bn_p(64),
        "c3": conv_p(64, 3, 2, 2),
    }


# -----------------------------------------------------------------------------
# Pure-JAX/XLA f32 reference (same math) for an in-script correctness check
# -----------------------------------------------------------------------------
def reference_forward(params, x, keypoints, embeddings):
    def conv(h, name, kh, kw, pad, act, bn_name=None):
        p = params[name]
        cin, cout = h.shape[-1], p["b"].shape[0]
        w = p["w"].reshape(kh, kw, cin, cout)               # HWIO
        y = lax.conv_general_dilated(h, w, (1, 1), ((pad, pad), (pad, pad)),
                                     dimension_numbers=("NHWC", "HWIO", "NHWC"))
        y = y + p["b"]
        if bn_name is not None:
            bn = params[bn_name]
            y = (y - bn["mean"]) / jnp.sqrt(bn["var"] + _BN_EPS) * bn["gamma"] + bn["beta"]
        if act == "relu":
            return jnp.maximum(y, 0.0)
        if act == "sigmoid":
            return jax.nn.sigmoid(y)
        return y

    h = jnp.transpose(x, (0, 2, 3, 1))
    kp = jnp.transpose(keypoints, (0, 2, 3, 1))
    em = jnp.transpose(embeddings, (0, 2, 3, 1))
    for name, kh, kw, pad, _ci, _co, act, bn_name in _FIRST_PART:
        h = conv(h, name, kh, kw, pad, act, bn_name)
    h = jnp.concatenate([h, kp, em], axis=-1)
    # ConvTranspose2d(48, 64, 1, stride=2): even positions = x@W + b, rest = b.
    N, H, W, _ = h.shape
    y = jnp.einsum("nhwc,cd->nhwd", h, params["up1"]["w"]) + params["up1"]["b"]
    out = jnp.broadcast_to(params["up1"]["b"], (N, 2 * H - 1, 2 * W - 1, 64))
    h = out.at[:, ::2, ::2, :].set(y)
    for name, kh, kw, pad, _ci, _co, act, bn_name in _CONV_1:
        h = conv(h, name, kh, kw, pad, act, bn_name)
    return jnp.transpose(h, (0, 3, 1, 2))


if __name__ == "__main__":
    key = jax.random.PRNGKey(0)
    k_x, k_kp, k_em, k_p = jax.random.split(key, 4)

    N = 2
    x = jax.random.normal(k_x, (N, 3, 4, 8), jnp.float32)
    keypoints = jax.random.normal(k_kp, (N, 16, 4, 4), jnp.float32)
    embeddings = jax.random.normal(k_em, (N, 16, 4, 4), jnp.float32)

    params = init_params(k_p)

    # Batch block per grid step (largest divisor of N that is <= 8); at serving
    # batches raise toward 8-16 so matmul row dims approach 128/256.
    nb = max(d for d in range(1, min(N, 8) + 1) if N % d == 0)
    kernel_consts = prepare_kernel_inputs(params, nb)       # host-side, done once

    fwd = jax.jit(net4group3_forward, static_argnames=("nb",))
    out = jax.block_until_ready(fwd(kernel_consts, x, keypoints, embeddings, nb=nb))

    assert out.shape == (N, 3, 4, 4), out.shape
    assert bool(jnp.all(jnp.isfinite(out)))
    assert bool(jnp.all((out >= -1e-6) & (out <= 1.0 + 1e-6)))

    ref = jax.block_until_ready(jax.jit(reference_forward)(params, x, keypoints, embeddings))
    # bf16 MXU operands (f32 accumulation) vs. the f32 reference.
    np.testing.assert_allclose(np.asarray(out), np.asarray(ref), atol=2e-2, rtol=0.0)

    print("KERNEL_OK")
</pallas_src>

<mosaic_0001>
module attributes {stable_mosaic.version = 11 : i64} {
  func.func @_net4group3_kernel(%arg0: i32, %arg1: memref<64x3xbf16, #tpu.memory_space<vmem>>, %arg2: memref<32x16xbf16, #tpu.memory_space<vmem>>, %arg3: memref<32x16xbf16, #tpu.memory_space<vmem>>, %arg4: memref<384x64xbf16, #tpu.memory_space<vmem>>, %arg5: memref<4x3x8xbf16, #tpu.memory_space<vmem>>, %arg6: memref<1x8xf32, #tpu.memory_space<vmem>>, %arg7: memref<384x96xbf16, #tpu.memory_space<vmem>>, %arg8: memref<3x8x8xbf16, #tpu.memory_space<vmem>>, %arg9: memref<1x8xf32, #tpu.memory_space<vmem>>, %arg10: memref<384x128xbf16, #tpu.memory_space<vmem>>, %arg11: memref<4x8x16xbf16, #tpu.memory_space<vmem>>, %arg12: memref<1x16xf32, #tpu.memory_space<vmem>>, %arg13: memref<240x96xbf16, #tpu.memory_space<vmem>>, %arg14: memref<3x16x16xbf16, #tpu.memory_space<vmem>>, %arg15: memref<1x16xf32, #tpu.memory_space<vmem>>, %arg16: memref<288x80xbf16, #tpu.memory_space<vmem>>, %arg17: memref<9x16x16xbf16, #tpu.memory_space<vmem>>, %arg18: memref<1x16xf32, #tpu.memory_space<vmem>>, %arg19: memref<3x16x64xbf16, #tpu.memory_space<vmem>>, %arg20: memref<320x32xbf16, #tpu.memory_space<vmem>>, %arg21: memref<4x64x64xbf16, #tpu.memory_space<vmem>>, %arg22: memref<80x64xf32, #tpu.memory_space<vmem>>, %arg23: memref<256x80xbf16, #tpu.memory_space<vmem>>, %arg24: memref<4x64x64xbf16, #tpu.memory_space<vmem>>, %arg25: memref<1x64xf32, #tpu.memory_space<vmem>>, %arg26: memref<128x64xbf16, #tpu.memory_space<vmem>>, %arg27: memref<4x64x8xbf16, #tpu.memory_space<vmem>>, %arg28: memref<1x8xf32, #tpu.memory_space<vmem>>, %arg29: memref<32x8xf32, #tpu.memory_space<vmem>>) attributes {dimension_semantics = [#tpu.dimension_semantics<parallel>], iteration_bounds = array<i64: 1>, scalar_prefetch = 0 : i64, scratch_operands = 0 : i64, tpu.core_type = #tpu.core_type<tc>, window_params = [{transform_indices = @transform_0, window_bounds = array<i64: 64, 3>}, {transform_indices = @transform_1, window_bounds = array<i64: 32, 16>}, {transform_indices = @transform_2, window_bounds = array<i64: 32, 16>}, {pipeline_mode = #tpu.pipeline_mode<synchronous>, transform_indices = @transform_3, window_bounds = array<i64: 384, 64>}, {pipeline_mode = #tpu.pipeline_mode<synchronous>, transform_indices = @transform_4, window_bounds = array<i64: 4, 3, 8>}, {pipeline_mode = #tpu.pipeline_mode<synchronous>, transform_indices = @transform_5, window_bounds = array<i64: 1, 8>}, {pipeline_mode = #tpu.pipeline_mode<synchronous>, transform_indices = @transform_6, window_bounds = array<i64: 384, 96>}, {pipeline_mode = #tpu.pipeline_mode<synchronous>, transform_indices = @transform_7, window_bounds = array<i64: 3, 8, 8>}, {pipeline_mode = #tpu.pipeline_mode<synchronous>, transform_indices = @transform_8, window_bounds = array<i64: 1, 8>}, {pipeline_mode = #tpu.pipeline_mode<synchronous>, transform_indices = @transform_9, window_bounds = array<i64: 384, 128>}, {pipeline_mode = #tpu.pipeline_mode<synchronous>, transform_indices = @transform_10, window_bounds = array<i64: 4, 8, 16>}, {pipeline_mode = #tpu.pipeline_mode<synchronous>, transform_indices = @transform_11, window_bounds = array<i64: 1, 16>}, {pipeline_mode = #tpu.pipeline_mode<synchronous>, transform_indices = @transform_12, window_bounds = array<i64: 240, 96>}, {pipeline_mode = #tpu.pipeline_mode<synchronous>, transform_indices = @transform_13, window_bounds = array<i64: 3, 16, 16>}, {pipeline_mode = #tpu.pipeline_mode<synchronous>, transform_indices = @transform_14, window_bounds = array<i64: 1, 16>}, {pipeline_mode = #tpu.pipeline_mode<synchronous>, transform_indices = @transform_15, window_bounds = array<i64: 288, 80>}, {pipeline_mode = #tpu.pipeline_mode<synchronous>, transform_indices = @transform_16, window_bounds = array<i64: 9, 16, 16>}, {pipeline_mode = #tpu.pipeline_mode<synchronous>, transform_indices = @transform_17, window_bounds = array<i64: 1, 16>}, {pipeline_mode = #tpu.pipeline_mode<synchronous>, transform_indices = @transform_18, window_bounds = array<i64: 3, 16, 64>}, {pipeline_mode = #tpu.pipeline_mode<synchronous>, transform_indices = @transform_19, window_bounds = array<i64: 320, 32>}, {pipeline_mode = #tpu.pipeline_mode<synchronous>, transform_indices = @transform_20, window_bounds = array<i64: 4, 64, 64>}, {pipeline_mode = #tpu.pipeline_mode<synchronous>, transform_indices = @transform_21, window_bounds = array<i64: 80, 64>}, {pipeline_mode = #tpu.pipeline_mode<synchronous>, transform_indices = @transform_22, window_bounds = array<i64: 256, 80>}, {pipeline_mode = #tpu.pipeline_mode<synchronous>, transform_indices = @transform_23, window_bounds = array<i64: 4, 64, 64>}, {pipeline_mode = #tpu.pipeline_mode<synchronous>, transform_indices = @transform_24, window_bounds = array<i64: 1, 64>}, {pipeline_mode = #tpu.pipeline_mode<synchronous>, transform_indices = @transform_25, window_bounds = array<i64: 128, 64>}, {pipeline_mode = #tpu.pipeline_mode<synchronous>, transform_indices = @transform_26, window_bounds = array<i64: 4, 64, 8>}, {pipeline_mode = #tpu.pipeline_mode<synchronous>, transform_indices = @transform_27, window_bounds = array<i64: 1, 8>}, {transform_indices = @transform_28, window_bounds = array<i64: 32, 8>}]} {
    %c0 = arith.constant 0 : index
    %c0_0 = arith.constant 0 : index
    %0 = vector.load %arg1[%c0, %c0_0] : memref<64x3xbf16, #tpu.memory_space<vmem>>, vector<64x3xbf16>
    %c0_1 = arith.constant 0 : index
    %c0_2 = arith.constant 0 : index
    %1 = vector.load %arg6[%c0_1, %c0_2] : memref<1x8xf32, #tpu.memory_space<vmem>>, vector<1x8xf32>
    %c0_3 = arith.constant 0 : index
    %c0_4 = arith.constant 0 : index
    %2 = vector.load %arg4[%c0_3, %c0_4] : memref<384x64xbf16, #tpu.memory_space<vmem>>, vector<384x64xbf16>
    %cst = arith.constant dense<0.000000e+00> : vector<384x3xf32>
    %3 = tpu.matmul %2, %0, %cst {dimension_numbers = #tpu.dot_dimension_numbers<[1], [0], [0], [1], [0, 0, 1, 1], [], []>} : vector<384x64xbf16>, vector<64x3xbf16>, vector<384x3xf32> -> vector<384x3xf32>
    %4 = arith.truncf %3 : vector<384x3xf32> to vector<384x3xbf16>
    %5 = vector.extract_strided_slice %4 {offsets = [0, 0], sizes = [96, 3], strides = [1, 1]} : vector<384x3xbf16> to vector<96x3xbf16>
    %c0_5 = arith.constant 0 : index
    %c0_6 = arith.constant 0 : index
    %c0_7 = arith.constant 0 : index
    %6 = vector.load %arg5[%c0_5, %c0_6, %c0_7] : memref<4x3x8xbf16, #tpu.memory_space<vmem>>, vector<1x3x8xbf16>
    %7 = vector.shape_cast %6 : vector<1x3x8xbf16> to vector<3x8xbf16>
    %cst_8 = arith.constant dense<0.000000e+00> : vector<96x8xf32>
    %8 = tpu.matmul %5, %7, %cst_8 {dimension_numbers = #tpu.dot_dimension_numbers<[1], [0], [0], [1], [0, 0, 1, 1], [], []>} : vector<96x3xbf16>, vector<3x8xbf16>, vector<96x8xf32> -> vector<96x8xf32>
    %9 = vector.extract_strided_slice %4 {offsets = [96, 0], sizes = [96, 3], strides = [1, 1]} : vector<384x3xbf16> to vector<96x3xbf16>
    %c1 = arith.constant 1 : index
    %c0_9 = arith.constant 0 : index
    %c0_10 = arith.constant 0 : index
    %10 = vector.load %arg5[%c1, %c0_9, %c0_10] : memref<4x3x8xbf16, #tpu.memory_space<vmem>>, vector<1x3x8xbf16>
    %11 = vector.shape_cast %10 : vector<1x3x8xbf16> to vector<3x8xbf16>
    %cst_11 = arith.constant dense<0.000000e+00> : vector<96x8xf32>
    %12 = tpu.matmul %9, %11, %cst_11 {dimension_numbers = #tpu.dot_dimension_numbers<[1], [0], [0], [1], [0, 0, 1, 1], [], []>} : vector<96x3xbf16>, vector<3x8xbf16>, vector<96x8xf32> -> vector<96x8xf32>
    %13 = arith.addf %8, %12 : vector<96x8xf32>
    %14 = vector.extract_strided_slice %4 {offsets = [192, 0], sizes = [96, 3], strides = [1, 1]} : vector<384x3xbf16> to vector<96x3xbf16>
    %c2 = arith.constant 2 : index
    %c0_12 = arith.constant 0 : index
    %c0_13 = arith.constant 0 : index
    %15 = vector.load %arg5[%c2, %c0_12, %c0_13] : memref<4x3x8xbf16, #tpu.memory_space<vmem>>, vector<1x3x8xbf16>
    %16 = vector.shape_cast %15 : vector<1x3x8xbf16> to vector<3x8xbf16>
    %cst_14 = arith.constant dense<0.000000e+00> : vector<96x8xf32>
    %17 = tpu.matmul %14, %16, %cst_14 {dimension_numbers = #tpu.dot_dimension_numbers<[1], [0], [0], [1], [0, 0, 1, 1], [], []>} : vector<96x3xbf16>, vector<3x8xbf16>, vector<96x8xf32> -> vector<96x8xf32>
    %18 = arith.addf %13, %17 : vector<96x8xf32>
    %19 = vector.extract_strided_slice %4 {offsets = [288, 0], sizes = [96, 3], strides = [1, 1]} : vector<384x3xbf16> to vector<96x3xbf16>
    %c3 = arith.constant 3 : index
    %c0_15 = arith.constant 0 : index
    %c0_16 = arith.constant 0 : index
    %20 = vector.load %arg5[%c3, %c0_15, %c0_16] : memref<4x3x8xbf16, #tpu.memory_space<vmem>>, vector<1x3x8xbf16>
    %21 = vector.shape_cast %20 : vector<1x3x8xbf16> to vector<3x8xbf16>
    %cst_17 = arith.constant dense<0.000000e+00> : vector<96x8xf32>
    %22 = tpu.matmul %19, %21, %cst_17 {dimension_numbers = #tpu.dot_dimension_numbers<[1], [0], [0], [1], [0, 0, 1, 1], [], []>} : vector<96x3xbf16>, vector<3x8xbf16>, vector<96x8xf32> -> vector<96x8xf32>
    %23 = arith.addf %18, %22 : vector<96x8xf32>
    %24 = vector.broadcast %1 : vector<1x8xf32> to vector<96x8xf32>
    %25 = arith.addf %23, %24 : vector<96x8xf32>
    %cst_18 = arith.constant 0.000000e+00 : f32
    %26 = vector.broadcast %cst_18 : f32 to vector<96x8xf32>
    %27 = arith.maximumf %25, %26 : vector<96x8xf32>
    %28 = arith.truncf %27 : vector<96x8xf32> to vector<96x8xbf16>
    %c0_19 = arith.constant 0 : index
    %c0_20 = arith.constant 0 : index
    %29 = vector.load %arg9[%c0_19, %c0_20] : memref<1x8xf32, #tpu.memory_space<vmem>>, vector<1x8xf32>
    %c0_21 = arith.constant 0 : index
    %c0_22 = arith.constant 0 : index
    %30 = vector.load %arg7[%c0_21, %c0_22] : memref<384x96xbf16, #tpu.memory_space<vmem>>, vector<384x96xbf16>
    %cst_23 = arith.constant dense<0.000000e+00> : vector<384x8xf32>
    %31 = tpu.matmul %30, %28, %cst_23 {dimension_numbers = #tpu.dot_dimension_numbers<[1], [0], [0], [1], [0, 0, 1, 1], [], []>} : vector<384x96xbf16>, vector<96x8xbf16>, vector<384x8xf32> -> vector<384x8xf32>
    %32 = arith.truncf %31 : vector<384x8xf32> to vector<384x8xbf16>
    %33 = vector.extract_strided_slice %32 {offsets = [0, 0], sizes = [128, 8], strides = [1, 1]} : vector<384x8xbf16> to vector<128x8xbf16>
    %c0_24 = arith.constant 0 : index
    %c0_25 = arith.constant 0 : index
    %c0_26 = arith.constant 0 : index
    %34 = vector.load %arg8[%c0_24, %c0_25, %c0_26] : memref<3x8x8xbf16, #tpu.memory_space<vmem>>, vector<1x8x8xbf16>
    %35 = vector.shape_cast %34 : vector<1x8x8xbf16> to vector<8x8xbf16>
    %cst_27 = arith.constant dense<0.000000e+00> : vector<128x8xf32>
    %36 = tpu.matmul %33, %35, %cst_27 {dimension_numbers = #tpu.dot_dimension_numbers<[1], [0], [0], [1], [0, 0, 1, 1], [], []>} : vector<128x8xbf16>, vector<8x8xbf16>, vector<128x8xf32> -> vector<128x8xf32>
    %37 = vector.extract_strided_slice %32 {offsets = [128, 0], sizes = [128, 8], strides = [1, 1]} : vector<384x8xbf16> to vector<128x8xbf16>
    %c1_28 = arith.constant 1 : index
    %c0_29 = arith.constant 0 : index
    %c0_30 = arith.constant 0 : index
    %38 = vector.load %arg8[%c1_28, %c0_29, %c0_30] : memref<3x8x8xbf16, #tpu.memory_space<vmem>>, vector<1x8x8xbf16>
    %39 = vector.shape_cast %38 : vector<1x8x8xbf16> to vector<8x8xbf16>
    %cst_31 = arith.constant dense<0.000000e+00> : vector<128x8xf32>
    %40 = tpu.matmul %37, %39, %cst_31 {dimension_numbers = #tpu.dot_dimension_numbers<[1], [0], [0], [1], [0, 0, 1, 1], [], []>} : vector<128x8xbf16>, vector<8x8xbf16>, vector<128x8xf32> -> vector<128x8xf32>
    %41 = arith.addf %36, %40 : vector<128x8xf32>
    %42 = vector.extract_strided_slice %32 {offsets = [256, 0], sizes = [128, 8], strides = [1, 1]} : vector<384x8xbf16> to vector<128x8xbf16>
    %c2_32 = arith.constant 2 : index
    %c0_33 = arith.constant 0 : index
    %c0_34 = arith.constant 0 : index
    %43 = vector.load %arg8[%c2_32, %c0_33, %c0_34] : memref<3x8x8xbf16, #tpu.memory_space<vmem>>, vector<1x8x8xbf16>
    %44 = vector.shape_cast %43 : vector<1x8x8xbf16> to vector<8x8xbf16>
    %cst_35 = arith.constant dense<0.000000e+00> : vector<128x8xf32>
    %45 = tpu.matmul %42, %44, %cst_35 {dimension_numbers = #tpu.dot_dimension_numbers<[1], [0], [0], [1], [0, 0, 1, 1], [], []>} : vector<128x8xbf16>, vector<8x8xbf16>, vector<128x8xf32> -> vector<128x8xf32>
    %46 = arith.addf %41, %45 : vector<128x8xf32>
    %47 = vector.broadcast %29 : vector<1x8xf32> to vector<128x8xf32>
    %48 = arith.addf %46, %47 : vector<128x8xf32>
    %cst_36 = arith.constant 0.000000e+00 : f32
    %49 = vector.broadcast %cst_36 : f32 to vector<128x8xf32>
    %50 = arith.maximumf %48, %49 : vector<128x8xf32>
    %51 = arith.truncf %50 : vector<128x8xf32> to vector<128x8xbf16>
    %c0_37 = arith.constant 0 : index
    %c0_38 = arith.constant 0 : index
    %52 = vector.load %arg12[%c0_37, %c0_38] : memref<1x16xf32, #tpu.memory_space<vmem>>, vector<1x16xf32>
    %c0_39 = arith.constant 0 : index
    %c0_40 = arith.constant 0 : index
    %53 = vector.load %arg10[%c0_39, %c0_40] : memref<384x128xbf16, #tpu.memory_space<vmem>>, vector<384x128xbf16>
    %cst_41 = arith.constant dense<0.000000e+00> : vector<384x8xf32>
    %54 = tpu.matmul %53, %51, %cst_41 {dimension_numbers = #tpu.dot_dimension_numbers<[1], [0], [0], [1], [0, 0, 1, 1], [], []>} : vector<384x128xbf16>, vector<128x8xbf16>, vector<384x8xf32> -> vector<384x8xf32>
    %55 = arith.truncf %54 : vector<384x8xf32> to vector<384x8xbf16>
    %56 = vector.extract_strided_slice %55 {offsets = [0, 0], sizes = [96, 8], strides = [1, 1]} : vector<384x8xbf16> to vector<96x8xbf16>
    %c0_42 = arith.constant 0 : index
    %c0_43 = arith.constant 0 : index
    %c0_44 = arith.constant 0 : index
    %57 = vector.load %arg11[%c0_42, %c0_43, %c0_44] : memref<4x8x16xbf16, #tpu.memory_space<vmem>>, vector<1x8x16xbf16>
    %58 = vector.shape_cast %57 : vector<1x8x16xbf16> to vector<8x16xbf16>
    %cst_45 = arith.constant dense<0.000000e+00> : vector<96x16xf32>
    %59 = tpu.matmul %56, %58, %cst_45 {dimension_numbers = #tpu.dot_dimension_numbers<[1], [0], [0], [1], [0, 0, 1, 1], [], []>} : vector<96x8xbf16>, vector<8x16xbf16>, vector<96x16xf32> -> vector<96x16xf32>
    %60 = vector.extract_strided_slice %55 {offsets = [96, 0], sizes = [96, 8], strides = [1, 1]} : vector<384x8xbf16> to vector<96x8xbf16>
    %c1_46 = arith.constant 1 : index
    %c0_47 = arith.constant 0 : index
    %c0_48 = arith.constant 0 : index
    %61 = vector.load %arg11[%c1_46, %c0_47, %c0_48] : memref<4x8x16xbf16, #tpu.memory_space<vmem>>, vector<1x8x16xbf16>
    %62 = vector.shape_cast %61 : vector<1x8x16xbf16> to vector<8x16xbf16>
    %cst_49 = arith.constant dense<0.000000e+00> : vector<96x16xf32>
    %63 = tpu.matmul %60, %62, %cst_49 {dimension_numbers = #tpu.dot_dimension_numbers<[1], [0], [0], [1], [0, 0, 1, 1], [], []>} : vector<96x8xbf16>, vector<8x16xbf16>, vector<96x16xf32> -> vector<96x16xf32>
    %64 = arith.addf %59, %63 : vector<96x16xf32>
    %65 = vector.extract_strided_slice %55 {offsets = [192, 0], sizes = [96, 8], strides = [1, 1]} : vector<384x8xbf16> to vector<96x8xbf16>
    %c2_50 = arith.constant 2 : index
    %c0_51 = arith.constant 0 : index
    %c0_52 = arith.constant 0 : index
    %66 = vector.load %arg11[%c2_50, %c0_51, %c0_52] : memref<4x8x16xbf16, #tpu.memory_space<vmem>>, vector<1x8x16xbf16>
    %67 = vector.shape_cast %66 : vector<1x8x16xbf16> to vector<8x16xbf16>
    %cst_53 = arith.constant dense<0.000000e+00> : vector<96x16xf32>
    %68 = tpu.matmul %65, %67, %cst_53 {dimension_numbers = #tpu.dot_dimension_numbers<[1], [0], [0], [1], [0, 0, 1, 1], [], []>} : vector<96x8xbf16>, vector<8x16xbf16>, vector<96x16xf32> -> vector<96x16xf32>
    %69 = arith.addf %64, %68 : vector<96x16xf32>
    %70 = vector.extract_strided_slice %55 {offsets = [288, 0], sizes = [96, 8], strides = [1, 1]} : vector<384x8xbf16> to vector<96x8xbf16>
    %c3_54 = arith.constant 3 : index
    %c0_55 = arith.constant 0 : index
    %c0_56 = arith.constant 0 : index
    %71 = vector.load %arg11[%c3_54, %c0_55, %c0_56] : memref<4x8x16xbf16, #tpu.memory_space<vmem>>, vector<1x8x16xbf16>
    %72 = vector.shape_cast %71 : vector<1x8x16xbf16> to vector<8x16xbf16>
    %cst_57 = arith.constant dense<0.000000e+00> : vector<96x16xf32>
    %73 = tpu.matmul %70, %72, %cst_57 {dimension_numbers = #tpu.dot_dimension_numbers<[1], [0], [0], [1], [0, 0, 1, 1], [], []>} : vector<96x8xbf16>, vector<8x16xbf16>, vector<96x16xf32> -> vector<96x16xf32>
    %74 = arith.addf %69, %73 : vector<96x16xf32>
    %75 = vector.broadcast %52 : vector<1x16xf32> to vector<96x16xf32>
    %76 = arith.addf %74, %75 : vector<96x16xf32>
    %cst_58 = arith.constant 0.000000e+00 : f32
    %77 = vector.broadcast %cst_58 : f32 to vector<96x16xf32>
    %78 = arith.maximumf %76, %77 : vector<96x16xf32>
    %79 = arith.truncf %78 : vector<96x16xf32> to vector<96x16xbf16>
    %c0_59 = arith.constant 0 : index
    %c0_60 = arith.constant 0 : index
    %80 = vector.load %arg15[%c0_59, %c0_60] : memref<1x16xf32, #tpu.memory_space<vmem>>, vector<1x16xf32>
    %c0_61 = arith.constant 0 : index
    %c0_62 = arith.constant 0 : index
    %81 = vector.load %arg13[%c0_61, %c0_62] : memref<240x96xbf16, #tpu.memory_space<vmem>>, vector<240x96xbf16>
    %cst_63 = arith.constant dense<0.000000e+00> : vector<240x16xf32>
    %82 = tpu.matmul %81, %79, %cst_63 {dimension_numbers = #tpu.dot_dimension_numbers<[1], [0], [0], [1], [0, 0, 1, 1], [], []>} : vector<240x96xbf16>, vector<96x16xbf16>, vector<240x16xf32> -> vector<240x16xf32>
    %83 = arith.truncf %82 : vector<240x16xf32> to vector<240x16xbf16>
    %84 = vector.extract_strided_slice %83 {offsets = [0, 0], sizes = [80, 16], strides = [1, 1]} : vector<240x16xbf16> to vector<80x16xbf16>
    %c0_64 = arith.constant 0 : index
    %c0_65 = arith.constant 0 : index
    %c0_66 = arith.constant 0 : index
    %85 = vector.load %arg14[%c0_64, %c0_65, %c0_66] : memref<3x16x16xbf16, #tpu.memory_space<vmem>>, vector<1x16x16xbf16>
    %86 = vector.shape_cast %85 : vector<1x16x16xbf16> to vector<16x16xbf16>
    %cst_67 = arith.constant dense<0.000000e+00> : vector<80x16xf32>
    %87 = tpu.matmul %84, %86, %cst_67 {dimension_numbers = #tpu.dot_dimension_numbers<[1], [0], [0], [1], [0, 0, 1, 1], [], []>} : vector<80x16xbf16>, vector<16x16xbf16>, vector<80x16xf32> -> vector<80x16xf32>
    %88 = vector.extract_strided_slice %83 {offsets = [80, 0], sizes = [80, 16], strides = [1, 1]} : vector<240x16xbf16> to vector<80x16xbf16>
    %c1_68 = arith.constant 1 : index
    %c0_69 = arith.constant 0 : index
    %c0_70 = arith.constant 0 : index
    %89 = vector.load %arg14[%c1_68, %c0_69, %c0_70] : memref<3x16x16xbf16, #tpu.memory_space<vmem>>, vector<1x16x16xbf16>
    %90 = vector.shape_cast %89 : vector<1x16x16xbf16> to vector<16x16xbf16>
    %cst_71 = arith.constant dense<0.000000e+00> : vector<80x16xf32>
    %91 = tpu.matmul %88, %90, %cst_71 {dimension_numbers = #tpu.dot_dimension_numbers<[1], [0], [0], [1], [0, 0, 1, 1], [], []>} : vector<80x16xbf16>, vector<16x16xbf16>, vector<80x16xf32> -> vector<80x16xf32>
    %92 = arith.addf %87, %91 : vector<80x16xf32>
    %93 = vector.extract_strided_slice %83 {offsets = [160, 0], sizes = [80, 16], strides = [1, 1]} : vector<240x16xbf16> to vector<80x16xbf16>
    %c2_72 = arith.constant 2 : index
    %c0_73 = arith.constant 0 : index
    %c0_74 = arith.constant 0 : index
    %94 = vector.load %arg14[%c2_72, %c0_73, %c0_74] : memref<3x16x16xbf16, #tpu.memory_space<vmem>>, vector<1x16x16xbf16>
    %95 = vector.shape_cast %94 : vector<1x16x16xbf16> to vector<16x16xbf16>
    %cst_75 = arith.constant dense<0.000000e+00> : vector<80x16xf32>
    %96 = tpu.matmul %93, %95, %cst_75 {dimension_numbers = #tpu.dot_dimension_numbers<[1], [0], [0], [1], [0, 0, 1, 1], [], []>} : vector<80x16xbf16>, vector<16x16xbf16>, vector<80x16xf32> -> vector<80x16xf32>
    %97 = arith.addf %92, %96 : vector<80x16xf32>
    %98 = vector.broadcast %80 : vector<1x16xf32> to vector<80x16xf32>
    %99 = arith.addf %97, %98 : vector<80x16xf32>
    %cst_76 = arith.constant 0.000000e+00 : f32
    %100 = vector.broadcast %cst_76 : f32 to vector<80x16xf32>
    %101 = arith.maximumf %99, %100 : vector<80x16xf32>
    %102 = arith.truncf %101 : vector<80x16xf32> to vector<80x16xbf16>
    %c0_77 = arith.constant 0 : index
    %c0_78 = arith.constant 0 : index
    %103 = vector.load %arg18[%c0_77, %c0_78] : memref<1x16xf32, #tpu.memory_space<vmem>>, vector<1x16xf32>
    %c0_79 = arith.constant 0 : index
    %c0_80 = arith.constant 0 : index
    %104 = vector.load %arg16[%c0_79, %c0_80] : memref<288x80xbf16, #tpu.memory_space<vmem>>, vector<288x80xbf16>
    %cst_81 = arith.constant dense<0.000000e+00> : vector<288x16xf32>
    %105 = tpu.matmul %104, %102, %cst_81 {dimension_numbers = #tpu.dot_dimension_numbers<[1], [0], [0], [1], [0, 0, 1, 1], [], []>} : vector<288x80xbf16>, vector<80x16xbf16>, vector<288x16xf32> -> vector<288x16xf32>
    %106 = arith.truncf %105 : vector<288x16xf32> to vector<288x16xbf16>
    %107 = vector.extract_strided_slice %106 {offsets = [0, 0], sizes = [32, 16], strides = [1, 1]} : vector<288x16xbf16> to vector<32x16xbf16>
    %c0_82 = arith.constant 0 : index
    %c0_83 = arith.constant 0 : index
    %c0_84 = arith.constant 0 : index
    %108 = vector.load %arg17[%c0_82, %c0_83, %c0_84] : memref<9x16x16xbf16, #tpu.memory_space<vmem>>, vector<1x16x16xbf16>
    %109 = vector.shape_cast %108 : vector<1x16x16xbf16> to vector<16x16xbf16>
    %cst_85 = arith.constant dense<0.000000e+00> : vector<32x16xf32>
    %110 = tpu.matmul %107, %109, %cst_85 {dimension_numbers = #tpu.dot_dimension_numbers<[1], [0], [0], [1], [0, 0, 1, 1], [], []>} : vector<32x16xbf16>, vector<16x16xbf16>, vector<32x16xf32> -> vector<32x16xf32>
    %111 = vector.extract_strided_slice %106 {offsets = [32, 0], sizes = [32, 16], strides = [1, 1]} : vector<288x16xbf16> to vector<32x16xbf16>
    %c1_86 = arith.constant 1 : index
    %c0_87 = arith.constant 0 : index
    %c0_88 = arith.constant 0 : index
    %112 = vector.load %arg17[%c1_86, %c0_87, %c0_88] : memref<9x16x16xbf16, #tpu.memory_space<vmem>>, vector<1x16x16xbf16>
    %113 = vector.shape_cast %112 : vector<1x16x16xbf16> to vector<16x16xbf16>
    %cst_89 = arith.constant dense<0.000000e+00> : vector<32x16xf32>
    %114 = tpu.matmul %111, %113, %cst_89 {dimension_numbers = #tpu.dot_dimension_numbers<[1], [0], [0], [1], [0, 0, 1, 1], [], []>} : vector<32x16xbf16>, vector<16x16xbf16>, vector<32x16xf32> -> vector<32x16xf32>
    %115 = arith.addf %110, %114 : vector<32x16xf32>
    %116 = vector.extract_strided_slice %106 {offsets = [64, 0], sizes = [32, 16], strides = [1, 1]} : vector<288x16xbf16> to vector<32x16xbf16>
    %c2_90 = arith.constant 2 : index
    %c0_91 = arith.constant 0 : index
    %c0_92 = arith.constant 0 : index
    %117 = vector.load %arg17[%c2_90, %c0_91, %c0_92] : memref<9x16x16xbf16, #tpu.memory_space<vmem>>, vector<1x16x16xbf16>
    %118 = vector.shape_cast %117 : vector<1x16x16xbf16> to vector<16x16xbf16>
    %cst_93 = arith.constant dense<0.000000e+00> : vector<32x16xf32>
    %119 = tpu.matmul %116, %118, %cst_93 {dimension_numbers = #tpu.dot_dimension_numbers<[1], [0], [0], [1], [0, 0, 1, 1], [], []>} : vector<32x16xbf16>, vector<16x16xbf16>, vector<32x16xf32> -> vector<32x16xf32>
    %120 = arith.addf %115, %119 : vector<32x16xf32>
    %121 = vector.extract_strided_slice %106 {offsets = [96, 0], sizes = [32, 16], strides = [1, 1]} : vector<288x16xbf16> to vector<32x16xbf16>
    %c3_94 = arith.constant 3 : index
    %c0_95 = arith.constant 0 : index
    %c0_96 = arith.constant 0 : index
    %122 = vector.load %arg17[%c3_94, %c0_95, %c0_96] : memref<9x16x16xbf16, #tpu.memory_space<vmem>>, vector<1x16x16xbf16>
    %123 = vector.shape_cast %122 : vector<1x16x16xbf16> to vector<16x16xbf16>
    %cst_97 = arith.constant dense<0.000000e+00> : vector<32x16xf32>
    %124 = tpu.matmul %121, %123, %cst_97 {dimension_numbers = #tpu.dot_dimension_numbers<[1], [0], [0], [1], [0, 0, 1, 1], [], []>} : vector<32x16xbf16>, vector<16x16xbf16>, vector<32x16xf32> -> vector<32x16xf32>
    %125 = arith.addf %120, %124 : vector<32x16xf32>
    %126 = vector.extract_strided_slice %106 {offsets = [128, 0], sizes = [32, 16], strides = [1, 1]} : vector<288x16xbf16> to vector<32x16xbf16>
    %c4 = arith.constant 4 : index
    %c0_98 = arith.constant 0 : index
    %c0_99 = arith.constant 0 : index
    %127 = vector.load %arg17[%c4, %c0_98, %c0_99] : memref<9x16x16xbf16, #tpu.memory_space<vmem>>, vector<1x16x16xbf16>
    %128 = vector.shape_cast %127 : vector<1x16x16xbf16> to vector<16x16xbf16>
    %cst_100 = arith.constant dense<0.000000e+00> : vector<32x16xf32>
    %129 = tpu.matmul %126, %128, %cst_100 {dimension_numbers = #tpu.dot_dimension_numbers<[1], [0], [0], [1], [0, 0, 1, 1], [], []>} : vector<32x16xbf16>, vector<16x16xbf16>, vector<32x16xf32> -> vector<32x16xf32>
    %130 = arith.addf %125, %129 : vector<32x16xf32>
    %131 = vector.extract_strided_slice %106 {offsets = [160, 0], sizes = [32, 16], strides = [1, 1]} : vector<288x16xbf16> to vector<32x16xbf16>
    %c5 = arith.constant 5 : index
    %c0_101 = arith.constant 0 : index
    %c0_102 = arith.constant 0 : index
    %132 = vector.load %arg17[%c5, %c0_101, %c0_102] : memref<9x16x16xbf16, #tpu.memory_space<vmem>>, vector<1x16x16xbf16>
    %133 = vector.shape_cast %132 : vector<1x16x16xbf16> to vector<16x16xbf16>
    %cst_103 = arith.constant dense<0.000000e+00> : vector<32x16xf32>
    %134 = tpu.matmul %131, %133, %cst_103 {dimension_numbers = #tpu.dot_dimension_numbers<[1], [0], [0], [1], [0, 0, 1, 1], [], []>} : vector<32x16xbf16>, vector<16x16xbf16>, vector<32x16xf32> -> vector<32x16xf32>
    %135 = arith.addf %130, %134 : vector<32x16xf32>
    %136 = vector.extract_strided_slice %106 {offsets = [192, 0], sizes = [32, 16], strides = [1, 1]} : vector<288x16xbf16> to vector<32x16xbf16>
    %c6 = arith.constant 6 : index
    %c0_104 = arith.constant 0 : index
    %c0_105 = arith.constant 0 : index
    %137 = vector.load %arg17[%c6, %c0_104, %c0_105] : memref<9x16x16xbf16, #tpu.memory_space<vmem>>, vector<1x16x16xbf16>
    %138 = vector.shape_cast %137 : vector<1x16x16xbf16> to vector<16x16xbf16>
    %cst_106 = arith.constant dense<0.000000e+00> : vector<32x16xf32>
    %139 = tpu.matmul %136, %138, %cst_106 {dimension_numbers = #tpu.dot_dimension_numbers<[1], [0], [0], [1], [0, 0, 1, 1], [], []>} : vector<32x16xbf16>, vector<16x16xbf16>, vector<32x16xf32> -> vector<32x16xf32>
    %140 = arith.addf %135, %139 : vector<32x16xf32>
    %141 = vector.extract_strided_slice %106 {offsets = [224, 0], sizes = [32, 16], strides = [1, 1]} : vector<288x16xbf16> to vector<32x16xbf16>
    %c7 = arith.constant 7 : index
    %c0_107 = arith.constant 0 : index
    %c0_108 = arith.constant 0 : index
    %142 = vector.load %arg17[%c7, %c0_107, %c0_108] : memref<9x16x16xbf16, #tpu.memory_space<vmem>>, vector<1x16x16xbf16>
    %143 = vector.shape_cast %142 : vector<1x16x16xbf16> to vector<16x16xbf16>
    %cst_109 = arith.constant dense<0.000000e+00> : vector<32x16xf32>
    %144 = tpu.matmul %141, %143, %cst_109 {dimension_numbers = #tpu.dot_dimension_numbers<[1], [0], [0], [1], [0, 0, 1, 1], [], []>} : vector<32x16xbf16>, vector<16x16xbf16>, vector<32x16xf32> -> vector<32x16xf32>
    %145 = arith.addf %140, %144 : vector<32x16xf32>
    %146 = vector.extract_strided_slice %106 {offsets = [256, 0], sizes = [32, 16], strides = [1, 1]} : vector<288x16xbf16> to vector<32x16xbf16>
    %c8 = arith.constant 8 : index
    %c0_110 = arith.constant 0 : index
    %c0_111 = arith.constant 0 : index
    %147 = vector.load %arg17[%c8, %c0_110, %c0_111] : memref<9x16x16xbf16, #tpu.memory_space<vmem>>, vector<1x16x16xbf16>
    %148 = vector.shape_cast %147 : vector<1x16x16xbf16> to vector<16x16xbf16>
    %cst_112 = arith.constant dense<0.000000e+00> : vector<32x16xf32>
    %149 = tpu.matmul %146, %148, %cst_112 {dimension_numbers = #tpu.dot_dimension_numbers<[1], [0], [0], [1], [0, 0, 1, 1], [], []>} : vector<32x16xbf16>, vector<16x16xbf16>, vector<32x16xf32> -> vector<32x16xf32>
    %150 = arith.addf %145, %149 : vector<32x16xf32>
    %151 = vector.broadcast %103 : vector<1x16xf32> to vector<32x16xf32>
    %152 = arith.addf %150, %151 : vector<32x16xf32>
    %cst_113 = arith.constant 0.000000e+00 : f32
    %153 = vector.broadcast %cst_113 : f32 to vector<32x16xf32>
    %154 = arith.maximumf %152, %153 : vector<32x16xf32>
    %155 = arith.truncf %154 : vector<32x16xf32> to vector<32x16xbf16>
    %c0_114 = arith.constant 0 : index
    %c0_115 = arith.constant 0 : index
    %c0_116 = arith.constant 0 : index
    %156 = vector.load %arg19[%c0_114, %c0_115, %c0_116] : memref<3x16x64xbf16, #tpu.memory_space<vmem>>, vector<1x16x64xbf16>
    %157 = vector.shape_cast %156 : vector<1x16x64xbf16> to vector<16x64xbf16>
    %cst_117 = arith.constant dense<0.000000e+00> : vector<32x64xf32>
    %158 = tpu.matmul %155, %157, %cst_117 {dimension_numbers = #tpu.dot_dimension_numbers<[1], [0], [0], [1], [0, 0, 1, 1], [], []>} : vector<32x16xbf16>, vector<16x64xbf16>, vector<32x64xf32> -> vector<32x64xf32>
    %c0_118 = arith.constant 0 : index
    %c0_119 = arith.constant 0 : index
    %159 = vector.load %arg2[%c0_118, %c0_119] : memref<32x16xbf16, #tpu.memory_space<vmem>>, vector<32x16xbf16>
    %c1_120 = arith.constant 1 : index
    %c0_121 = arith.constant 0 : index
    %c0_122 = arith.constant 0 : index
    %160 = vector.load %arg19[%c1_120, %c0_121, %c0_122] : memref<3x16x64xbf16, #tpu.memory_space<vmem>>, vector<1x16x64xbf16>
    %161 = vector.shape_cast %160 : vector<1x16x64xbf16> to vector<16x64xbf16>
    %cst_123 = arith.constant dense<0.000000e+00> : vector<32x64xf32>
    %162 = tpu.matmul %159, %161, %cst_123 {dimension_numbers = #tpu.dot_dimension_numbers<[1], [0], [0], [1], [0, 0, 1, 1], [], []>} : vector<32x16xbf16>, vector<16x64xbf16>, vector<32x64xf32> -> vector<32x64xf32>
    %163 = arith.addf %158, %162 : vector<32x64xf32>
    %c0_124 = arith.constant 0 : index
    %c0_125 = arith.constant 0 : index
    %164 = vector.load %arg3[%c0_124, %c0_125] : memref<32x16xbf16, #tpu.memory_space<vmem>>, vector<32x16xbf16>
    %c2_126 = arith.constant 2 : index
    %c0_127 = arith.constant 0 : index
    %c0_128 = arith.constant 0 : index
    %165 = vector.load %arg19[%c2_126, %c0_127, %c0_128] : memref<3x16x64xbf16, #tpu.memory_space<vmem>>, vector<1x16x64xbf16>
    %166 = vector.shape_cast %165 : vector<1x16x64xbf16> to vector<16x64xbf16>
    %cst_129 = arith.constant dense<0.000000e+00> : vector<32x64xf32>
    %167 = tpu.matmul %164, %166, %cst_129 {dimension_numbers = #tpu.dot_dimension_numbers<[1], [0], [0], [1], [0, 0, 1, 1], [], []>} : vector<32x16xbf16>, vector<16x64xbf16>, vector<32x64xf32> -> vector<32x64xf32>
    %168 = arith.addf %163, %167 : vector<32x64xf32>
    %169 = arith.truncf %168 : vector<32x64xf32> to vector<32x64xbf16>
    %c0_130 = arith.constant 0 : index
    %c0_131 = arith.constant 0 : index
    %170 = vector.load %arg22[%c0_130, %c0_131] : memref<80x64xf32, #tpu.memory_space<vmem>>, vector<80x64xf32>
    %c0_132 = arith.constant 0 : index
    %c0_133 = arith.constant 0 : index
    %171 = vector.load %arg20[%c0_132, %c0_133] : memref<320x32xbf16, #tpu.memory_space<vmem>>, vector<320x32xbf16>
    %cst_134 = arith.constant dense<0.000000e+00> : vector<320x64xf32>
    %172 = tpu.matmul %171, %169, %cst_134 {dimension_numbers = #tpu.dot_dimension_numbers<[1], [0], [0], [1], [0, 0, 1, 1], [], []>} : vector<320x32xbf16>, vector<32x64xbf16>, vector<320x64xf32> -> vector<320x64xf32>
    %173 = arith.truncf %172 : vector<320x64xf32> to vector<320x64xbf16>
    %174 = vector.extract_strided_slice %173 {offsets = [0, 0], sizes = [80, 64], strides = [1, 1]} : vector<320x64xbf16> to vector<80x64xbf16>
    %c0_135 = arith.constant 0 : index
    %c0_136 = arith.constant 0 : index
    %c0_137 = arith.constant 0 : index
    %175 = vector.load %arg21[%c0_135, %c0_136, %c0_137] : memref<4x64x64xbf16, #tpu.memory_space<vmem>>, vector<1x64x64xbf16>
    %176 = vector.shape_cast %175 : vector<1x64x64xbf16> to vector<64x64xbf16>
    %cst_138 = arith.constant dense<0.000000e+00> : vector<80x64xf32>
    %177 = tpu.matmul %174, %176, %cst_138 {dimension_numbers = #tpu.dot_dimension_numbers<[1], [0], [0], [1], [0, 0, 1, 1], [], []>} : vector<80x64xbf16>, vector<64x64xbf16>, vector<80x64xf32> -> vector<80x64xf32>
    %178 = vector.extract_strided_slice %173 {offsets = [80, 0], sizes = [80, 64], strides = [1, 1]} : vector<320x64xbf16> to vector<80x64xbf16>
    %c1_139 = arith.constant 1 : index
    %c0_140 = arith.constant 0 : index
    %c0_141 = arith.constant 0 : index
    %179 = vector.load %arg21[%c1_139, %c0_140, %c0_141] : memref<4x64x64xbf16, #tpu.memory_space<vmem>>, vector<1x64x64xbf16>
    %180 = vector.shape_cast %179 : vector<1x64x64xbf16> to vector<64x64xbf16>
    %cst_142 = arith.constant dense<0.000000e+00> : vector<80x64xf32>
    %181 = tpu.matmul %178, %180, %cst_142 {dimension_numbers = #tpu.dot_dimension_numbers<[1], [0], [0], [1], [0, 0, 1, 1], [], []>} : vector<80x64xbf16>, vector<64x64xbf16>, vector<80x64xf32> -> vector<80x64xf32>
    %182 = arith.addf %177, %181 : vector<80x64xf32>
    %183 = vector.extract_strided_slice %173 {offsets = [160, 0], sizes = [80, 64], strides = [1, 1]} : vector<320x64xbf16> to vector<80x64xbf16>
    %c2_143 = arith.constant 2 : index
    %c0_144 = arith.constant 0 : index
    %c0_145 = arith.constant 0 : index
    %184 = vector.load %arg21[%c2_143, %c0_144, %c0_145] : memref<4x64x64xbf16, #tpu.memory_space<vmem>>, vector<1x64x64xbf16>
    %185 = vector.shape_cast %184 : vector<1x64x64xbf16> to vector<64x64xbf16>
    %cst_146 = arith.constant dense<0.000000e+00> : vector<80x64xf32>
    %186 = tpu.matmul %183, %185, %cst_146 {dimension_numbers = #tpu.dot_dimension_numbers<[1], [0], [0], [1], [0, 0, 1, 1], [], []>} : vector<80x64xbf16>, vector<64x64xbf16>, vector<80x64xf32> -> vector<80x64xf32>
    %187 = arith.addf %182, %186 : vector<80x64xf32>
    %188 = vector.extract_strided_slice %173 {offsets = [240, 0], sizes = [80, 64], strides = [1, 1]} : vector<320x64xbf16> to vector<80x64xbf16>
    %c3_147 = arith.constant 3 : index
    %c0_148 = arith.constant 0 : index
    %c0_149 = arith.constant 0 : index
    %189 = vector.load %arg21[%c3_147, %c0_148, %c0_149] : memref<4x64x64xbf16, #tpu.memory_space<vmem>>, vector<1x64x64xbf16>
    %190 = vector.shape_cast %189 : vector<1x64x64xbf16> to vector<64x64xbf16>
    %cst_150 = arith.constant dense<0.000000e+00> : vector<80x64xf32>
    %191 = tpu.matmul %188, %190, %cst_150 {dimension_numbers = #tpu.dot_dimension_numbers<[1], [0], [0], [1], [0, 0, 1, 1], [], []>} : vector<80x64xbf16>, vector<64x64xbf16>, vector<80x64xf32> -> vector<80x64xf32>
    %192 = arith.addf %187, %191 : vector<80x64xf32>
    %193 = arith.addf %192, %170 : vector<80x64xf32>
    %cst_151 = arith.constant 0.000000e+00 : f32
    %194 = vector.broadcast %cst_151 : f32 to vector<80x64xf32>
    %195 = arith.maximumf %193, %194 : vector<80x64xf32>
    %196 = arith.truncf %195 : vector<80x64xf32> to vector<80x64xbf16>
    %c0_152 = arith.constant 0 : index
    %c0_153 = arith.constant 0 : index
    %197 = vector.load %arg25[%c0_152, %c0_153] : memref<1x64xf32, #tpu.memory_space<vmem>>, vector<1x64xf32>
    %c0_154 = arith.constant 0 : index
    %c0_155 = arith.constant 0 : index
    %198 = vector.load %arg23[%c0_154, %c0_155] : memref<256x80xbf16, #tpu.memory_space<vmem>>, vector<256x80xbf16>
    %cst_156 = arith.constant dense<0.000000e+00> : vector<256x64xf32>
    %199 = tpu.matmul %198, %196, %cst_156 {dimension_numbers = #tpu.dot_dimension_numbers<[1], [0], [0], [1], [0, 0, 1, 1], [], []>} : vector<256x80xbf16>, vector<80x64xbf16>, vector<256x64xf32> -> vector<256x64xf32>
    %200 = arith.truncf %199 : vector<256x64xf32> to vector<256x64xbf16>
    %201 = vector.extract_strided_slice %200 {offsets = [0, 0], sizes = [64, 64], strides = [1, 1]} : vector<256x64xbf16> to vector<64x64xbf16>
    %c0_157 = arith.constant 0 : index
    %c0_158 = arith.constant 0 : index
    %c0_159 = arith.constant 0 : index
    %202 = vector.load %arg24[%c0_157, %c0_158, %c0_159] : memref<4x64x64xbf16, #tpu.memory_space<vmem>>, vector<1x64x64xbf16>
    %203 = vector.shape_cast %202 : vector<1x64x64xbf16> to vector<64x64xbf16>
    %cst_160 = arith.constant dense<0.000000e+00> : vector<64x64xf32>
    %204 = tpu.matmul %201, %203, %cst_160 {dimension_numbers = #tpu.dot_dimension_numbers<[1], [0], [0], [1], [0, 0, 1, 1], [], []>} : vector<64x64xbf16>, vector<64x64xbf16>, vector<64x64xf32> -> vector<64x64xf32>
    %205 = vector.extract_strided_slice %200 {offsets = [64, 0], sizes = [64, 64], strides = [1, 1]} : vector<256x64xbf16> to vector<64x64xbf16>
    %c1_161 = arith.constant 1 : index
    %c0_162 = arith.constant 0 : index
    %c0_163 = arith.constant 0 : index
    %206 = vector.load %arg24[%c1_161, %c0_162, %c0_163] : memref<4x64x64xbf16, #tpu.memory_space<vmem>>, vector<1x64x64xbf16>
    %207 = vector.shape_cast %206 : vector<1x64x64xbf16> to vector<64x64xbf16>
    %cst_164 = arith.constant dense<0.000000e+00> : vector<64x64xf32>
    %208 = tpu.matmul %205, %207, %cst_164 {dimension_numbers = #tpu.dot_dimension_numbers<[1], [0], [0], [1], [0, 0, 1, 1], [], []>} : vector<64x64xbf16>, vector<64x64xbf16>, vector<64x64xf32> -> vector<64x64xf32>
    %209 = arith.addf %204, %208 : vector<64x64xf32>
    %210 = vector.extract_strided_slice %200 {offsets = [128, 0], sizes = [64, 64], strides = [1, 1]} : vector<256x64xbf16> to vector<64x64xbf16>
    %c2_165 = arith.constant 2 : index
    %c0_166 = arith.constant 0 : index
    %c0_167 = arith.constant 0 : index
    %211 = vector.load %arg24[%c2_165, %c0_166, %c0_167] : memref<4x64x64xbf16, #tpu.memory_space<vmem>>, vector<1x64x64xbf16>
    %212 = vector.shape_cast %211 : vector<1x64x64xbf16> to vector<64x64xbf16>
    %cst_168 = arith.constant dense<0.000000e+00> : vector<64x64xf32>
    %213 = tpu.matmul %210, %212, %cst_168 {dimension_numbers = #tpu.dot_dimension_numbers<[1], [0], [0], [1], [0, 0, 1, 1], [], []>} : vector<64x64xbf16>, vector<64x64xbf16>, vector<64x64xf32> -> vector<64x64xf32>
    %214 = arith.addf %209, %213 : vector<64x64xf32>
    %215 = vector.extract_strided_slice %200 {offsets = [192, 0], sizes = [64, 64], strides = [1, 1]} : vector<256x64xbf16> to vector<64x64xbf16>
    %c3_169 = arith.constant 3 : index
    %c0_170 = arith.constant 0 : index
    %c0_171 = arith.constant 0 : index
    %216 = vector.load %arg24[%c3_169, %c0_170, %c0_171] : memref<4x64x64xbf16, #tpu.memory_space<vmem>>, vector<1x64x64xbf16>
    %217 = vector.shape_cast %216 : vector<1x64x64xbf16> to vector<64x64xbf16>
    %cst_172 = arith.constant dense<0.000000e+00> : vector<64x64xf32>
    %218 = tpu.matmul %215, %217, %cst_172 {dimension_numbers = #tpu.dot_dimension_numbers<[1], [0], [0], [1], [0, 0, 1, 1], [], []>} : vector<64x64xbf16>, vector<64x64xbf16>, vector<64x64xf32> -> vector<64x64xf32>
    %219 = arith.addf %214, %218 : vector<64x64xf32>
    %220 = vector.broadcast %197 : vector<1x64xf32> to vector<64x64xf32>
    %221 = arith.addf %219, %220 : vector<64x64xf32>
    %cst_173 = arith.constant 0.000000e+00 : f32
    %222 = vector.broadcast %cst_173 : f32 to vector<64x64xf32>
    %223 = arith.maximumf %221, %222 : vector<64x64xf32>
    %224 = arith.truncf %223 : vector<64x64xf32> to vector<64x64xbf16>
    %c0_174 = arith.constant 0 : index
    %c0_175 = arith.constant 0 : index
    %225 = vector.load %arg28[%c0_174, %c0_175] : memref<1x8xf32, #tpu.memory_space<vmem>>, vector<1x8xf32>
    %c0_176 = arith.constant 0 : index
    %c0_177 = arith.constant 0 : index
    %226 = vector.load %arg26[%c0_176, %c0_177] : memref<128x64xbf16, #tpu.memory_space<vmem>>, vector<128x64xbf16>
    %cst_178 = arith.constant dense<0.000000e+00> : vector<128x64xf32>
    %227 = tpu.matmul %226, %224, %cst_178 {dimension_numbers = #tpu.dot_dimension_numbers<[1], [0], [0], [1], [0, 0, 1, 1], [], []>} : vector<128x64xbf16>, vector<64x64xbf16>, vector<128x64xf32> -> vector<128x64xf32>
    %228 = arith.truncf %227 : vector<128x64xf32> to vector<128x64xbf16>
    %229 = vector.extract_strided_slice %228 {offsets = [0, 0], sizes = [32, 64], strides = [1, 1]} : vector<128x64xbf16> to vector<32x64xbf16>
    %c0_179 = arith.constant 0 : index
    %c0_180 = arith.constant 0 : index
    %c0_181 = arith.constant 0 : index
    %230 = vector.load %arg27[%c0_179, %c0_180, %c0_181] : memref<4x64x8xbf16, #tpu.memory_space<vmem>>, vector<1x64x8xbf16>
    %231 = vector.shape_cast %230 : vector<1x64x8xbf16> to vector<64x8xbf16>
    %cst_182 = arith.constant dense<0.000000e+00> : vector<32x8xf32>
    %232 = tpu.matmul %229, %231, %cst_182 {dimension_numbers = #tpu.dot_dimension_numbers<[1], [0], [0], [1], [0, 0, 1, 1], [], []>} : vector<32x64xbf16>, vector<64x8xbf16>, vector<32x8xf32> -> vector<32x8xf32>
    %233 = vector.extract_strided_slice %228 {offsets = [32, 0], sizes = [32, 64], strides = [1, 1]} : vector<128x64xbf16> to vector<32x64xbf16>
    %c1_183 = arith.constant 1 : index
    %c0_184 = arith.constant 0 : index
    %c0_185 = arith.constant 0 : index
    %234 = vector.load %arg27[%c1_183, %c0_184, %c0_185] : memref<4x64x8xbf16, #tpu.memory_space<vmem>>, vector<1x64x8xbf16>
    %235 = vector.shape_cast %234 : vector<1x64x8xbf16> to vector<64x8xbf16>
    %cst_186 = arith.constant dense<0.000000e+00> : vector<32x8xf32>
    %236 = tpu.matmul %233, %235, %cst_186 {dimension_numbers = #tpu.dot_dimension_numbers<[1], [0], [0], [1], [0, 0, 1, 1], [], []>} : vector<32x64xbf16>, vector<64x8xbf16>, vector<32x8xf32> -> vector<32x8xf32>
    %237 = arith.addf %232, %236 : vector<32x8xf32>
    %238 = vector.extract_strided_slice %228 {offsets = [64, 0], sizes = [32, 64], strides = [1, 1]} : vector<128x64xbf16> to vector<32x64xbf16>
    %c2_187 = arith.constant 2 : index
    %c0_188 = arith.constant 0 : index
    %c0_189 = arith.constant 0 : index
    %239 = vector.load %arg27[%c2_187, %c0_188, %c0_189] : memref<4x64x8xbf16, #tpu.memory_space<vmem>>, vector<1x64x8xbf16>
    %240 = vector.shape_cast %239 : vector<1x64x8xbf16> to vector<64x8xbf16>
    %cst_190 = arith.constant dense<0.000000e+00> : vector<32x8xf32>
    %241 = tpu.matmul %238, %240, %cst_190 {dimension_numbers = #tpu.dot_dimension_numbers<[1], [0], [0], [1], [0, 0, 1, 1], [], []>} : vector<32x64xbf16>, vector<64x8xbf16>, vector<32x8xf32> -> vector<32x8xf32>
    %242 = arith.addf %237, %241 : vector<32x8xf32>
    %243 = vector.extract_strided_slice %228 {offsets = [96, 0], sizes = [32, 64], strides = [1, 1]} : vector<128x64xbf16> to vector<32x64xbf16>
    %c3_191 = arith.constant 3 : index
    %c0_192 = arith.constant 0 : index
    %c0_193 = arith.constant 0 : index
    %244 = vector.load %arg27[%c3_191, %c0_192, %c0_193] : memref<4x64x8xbf16, #tpu.memory_space<vmem>>, vector<1x64x8xbf16>
    %245 = vector.shape_cast %244 : vector<1x64x8xbf16> to vector<64x8xbf16>
    %cst_194 = arith.constant dense<0.000000e+00> : vector<32x8xf32>
    %246 = tpu.matmul %243, %245, %cst_194 {dimension_numbers = #tpu.dot_dimension_numbers<[1], [0], [0], [1], [0, 0, 1, 1], [], []>} : vector<32x64xbf16>, vector<64x8xbf16>, vector<32x8xf32> -> vector<32x8xf32>
    %247 = arith.addf %242, %246 : vector<32x8xf32>
    %248 = vector.broadcast %225 : vector<1x8xf32> to vector<32x8xf32>
    %249 = arith.addf %247, %248 : vector<32x8xf32>
    %cst_195 = arith.constant 0.000000e+00 : f32
    %250 = vector.broadcast %cst_195 : f32 to vector<32x8xf32>
    %251 = arith.subf %250, %249 : vector<32x8xf32>
    %252 = math.exp %251 : vector<32x8xf32>
    %cst_196 = arith.constant 1.000000e+00 : f32
    %253 = vector.broadcast %cst_196 : f32 to vector<32x8xf32>
    %254 = arith.addf %253, %252 : vector<32x8xf32>
    %cst_197 = arith.constant 1.000000e+00 : f32
    %255 = vector.broadcast %cst_197 : f32 to vector<32x8xf32>
    %256 = arith.divf %255, %254 : vector<32x8xf32>
    %c0_198 = arith.constant 0 : index
    %c0_199 = arith.constant 0 : index
    %257 = vector.load %arg29[%c0_198, %c0_199] : memref<32x8xf32, #tpu.memory_space<vmem>>, vector<32x8xf32>
    tpu.vector_store %arg29[%c0_198, %c0_199], %256 {strides = array<i32>} : memref<32x8xf32, #tpu.memory_space<vmem>>, vector<32x8xf32>,
    return
  }
  func.func @transform_0(%arg0: i32) -> (i32, i32) {
    %c0_i32 = arith.constant 0 : i32
    %c0_i32_0 = arith.constant 0 : i32
    return %arg0, %c0_i32 : i32, i32
  }
  func.func @transform_1(%arg0: i32) -> (i32, i32) {
    %c0_i32 = arith.constant 0 : i32
    %c0_i32_0 = arith.constant 0 : i32
    return %arg0, %c0_i32 : i32, i32
  }
  func.func @transform_2(%arg0: i32) -> (i32, i32) {
    %c0_i32 = arith.constant 0 : i32
    %c0_i32_0 = arith.constant 0 : i32
    return %arg0, %c0_i32 : i32, i32
  }
  func.func @transform_3(%arg0: i32) -> (i32, i32) {
    %c0_i32 = arith.constant 0 : i32
    %c0_i32_0 = arith.constant 0 : i32
    %c0_i32_1 = arith.constant 0 : i32
    return %c0_i32, %c0_i32_0 : i32, i32
  }
  func.func @transform_4(%arg0: i32) -> (i32, i32, i32) {
    %c0_i32 = arith.constant 0 : i32
    %c0_i32_0 = arith.constant 0 : i32
    %c0_i32_1 = arith.constant 0 : i32
    %c0_i32_2 = arith.constant 0 : i32
    return %c0_i32, %c0_i32_0, %c0_i32_1 : i32, i32, i32
  }
  func.func @transform_5(%arg0: i32) -> (i32, i32) {
    %c0_i32 = arith.constant 0 : i32
    %c0_i32_0 = arith.constant 0 : i32
    %c0_i32_1 = arith.constant 0 : i32
    return %c0_i32, %c0_i32_0 : i32, i32
  }
  func.func @transform_6(%arg0: i32) -> (i32, i32) {
    %c0_i32 = arith.constant 0 : i32
    %c0_i32_0 = arith.constant 0 : i32
    %c0_i32_1 = arith.constant 0 : i32
    return %c0_i32, %c0_i32_0 : i32, i32
  }
  func.func @transform_7(%arg0: i32) -> (i32, i32, i32) {
    %c0_i32 = arith.constant 0 : i32
    %c0_i32_0 = arith.constant 0 : i32
    %c0_i32_1 = arith.constant 0 : i32
    %c0_i32_2 = arith.constant 0 : i32
    return %c0_i32, %c0_i32_0, %c0_i32_1 : i32, i32, i32
  }
  func.func @transform_8(%arg0: i32) -> (i32, i32) {
    %c0_i32 = arith.constant 0 : i32
    %c0_i32_0 = arith.constant 0 : i32
    %c0_i32_1 = arith.constant 0 : i32
    return %c0_i32, %c0_i32_0 : i32, i32
  }
  func.func @transform_9(%arg0: i32) -> (i32, i32) {
    %c0_i32 = arith.constant 0 : i32
    %c0_i32_0 = arith.constant 0 : i32
    %c0_i32_1 = arith.constant 0 : i32
    return %c0_i32, %c0_i32_0 : i32, i32
  }
  func.func @transform_10(%arg0: i32) -> (i32, i32, i32) {
    %c0_i32 = arith.constant 0 : i32
    %c0_i32_0 = arith.constant 0 : i32
    %c0_i32_1 = arith.constant 0 : i32
    %c0_i32_2 = arith.constant 0 : i32
    return %c0_i32, %c0_i32_0, %c0_i32_1 : i32, i32, i32
  }
  func.func @transform_11(%arg0: i32) -> (i32, i32) {
    %c0_i32 = arith.constant 0 : i32
    %c0_i32_0 = arith.constant 0 : i32
    %c0_i32_1 = arith.constant 0 : i32
    return %c0_i32, %c0_i32_0 : i32, i32
  }
  func.func @transform_12(%arg0: i32) -> (i32, i32) {
    %c0_i32 = arith.constant 0 : i32
    %c0_i32_0 = arith.constant 0 : i32
    %c0_i32_1 = arith.constant 0 : i32
    return %c0_i32, %c0_i32_0 : i32, i32
  }
  func.func @transform_13(%arg0: i32) -> (i32, i32, i32) {
    %c0_i32 = arith.constant 0 : i32
    %c0_i32_0 = arith.constant 0 : i32
    %c0_i32_1 = arith.constant 0 : i32
    %c0_i32_2 = arith.constant 0 : i32
    return %c0_i32, %c0_i32_0, %c0_i32_1 : i32, i32, i32
  }
  func.func @transform_14(%arg0: i32) -> (i32, i32) {
    %c0_i32 = arith.constant 0 : i32
    %c0_i32_0 = arith.constant 0 : i32
    %c0_i32_1 = arith.constant 0 : i32
    return %c0_i32, %c0_i32_0 : i32, i32
  }
  func.func @transform_15(%arg0: i32) -> (i32, i32) {
    %c0_i32 = arith.constant 0 : i32
    %c0_i32_0 = arith.constant 0 : i32
    %c0_i32_1 = arith.constant 0 : i32
    return %c0_i32, %c0_i32_0 : i32, i32
  }
  func.func @transform_16(%arg0: i32) -> (i32, i32, i32) {
    %c0_i32 = arith.constant 0 : i32
    %c0_i32_0 = arith.constant 0 : i32
    %c0_i32_1 = arith.constant 0 : i32
    %c0_i32_2 = arith.constant 0 : i32
    return %c0_i32, %c0_i32_0, %c0_i32_1 : i32, i32, i32
  }
  func.func @transform_17(%arg0: i32) -> (i32, i32) {
    %c0_i32 = arith.constant 0 : i32
    %c0_i32_0 = arith.constant 0 : i32
    %c0_i32_1 = arith.constant 0 : i32
    return %c0_i32, %c0_i32_0 : i32, i32
  }
  func.func @transform_18(%arg0: i32) -> (i32, i32, i32) {
    %c0_i32 = arith.constant 0 : i32
    %c0_i32_0 = arith.constant 0 : i32
    %c0_i32_1 = arith.constant 0 : i32
    %c0_i32_2 = arith.constant 0 : i32
    return %c0_i32, %c0_i32_0, %c0_i32_1 : i32, i32, i32
  }
  func.func @transform_19(%arg0: i32) -> (i32, i32) {
    %c0_i32 = arith.constant 0 : i32
    %c0_i32_0 = arith.constant 0 : i32
    %c0_i32_1 = arith.constant 0 : i32
    return %c0_i32, %c0_i32_0 : i32, i32
  }
  func.func @transform_20(%arg0: i32) -> (i32, i32, i32) {
    %c0_i32 = arith.constant 0 : i32
    %c0_i32_0 = arith.constant 0 : i32
    %c0_i32_1 = arith.constant 0 : i32
    %c0_i32_2 = arith.constant 0 : i32
    return %c0_i32, %c0_i32_0, %c0_i32_1 : i32, i32, i32
  }
  func.func @transform_21(%arg0: i32) -> (i32, i32) {
    %c0_i32 = arith.constant 0 : i32
    %c0_i32_0 = arith.constant 0 : i32
    %c0_i32_1 = arith.constant 0 : i32
    return %c0_i32, %c0_i32_0 : i32, i32
  }
  func.func @transform_22(%arg0: i32) -> (i32, i32) {
    %c0_i32 = arith.constant 0 : i32
    %c0_i32_0 = arith.constant 0 : i32
    %c0_i32_1 = arith.constant 0 : i32
    return %c0_i32, %c0_i32_0 : i32, i32
  }
  func.func @transform_23(%arg0: i32) -> (i32, i32, i32) {
    %c0_i32 = arith.constant 0 : i32
    %c0_i32_0 = arith.constant 0 : i32
    %c0_i32_1 = arith.constant 0 : i32
    %c0_i32_2 = arith.constant 0 : i32
    return %c0_i32, %c0_i32_0, %c0_i32_1 : i32, i32, i32
  }
  func.func @transform_24(%arg0: i32) -> (i32, i32) {
    %c0_i32 = arith.constant 0 : i32
    %c0_i32_0 = arith.constant 0 : i32
    %c0_i32_1 = arith.constant 0 : i32
    return %c0_i32, %c0_i32_0 : i32, i32
  }
  func.func @transform_25(%arg0: i32) -> (i32, i32) {
    %c0_i32 = arith.constant 0 : i32
    %c0_i32_0 = arith.constant 0 : i32
    %c0_i32_1 = arith.constant 0 : i32
    return %c0_i32, %c0_i32_0 : i32, i32
  }
  func.func @transform_26(%arg0: i32) -> (i32, i32, i32) {
    %c0_i32 = arith.constant 0 : i32
    %c0_i32_0 = arith.constant 0 : i32
    %c0_i32_1 = arith.constant 0 : i32
    %c0_i32_2 = arith.constant 0 : i32
    return %c0_i32, %c0_i32_0, %c0_i32_1 : i32, i32, i32
  }
  func.func @transform_27(%arg0: i32) -> (i32, i32) {
    %c0_i32 = arith.constant 0 : i32
    %c0_i32_0 = arith.constant 0 : i32
    %c0_i32_1 = arith.constant 0 : i32
    return %c0_i32, %c0_i32_0 : i32, i32
  }
  func.func @transform_28(%arg0: i32) -> (i32, i32) {
    %c0_i32 = arith.constant 0 : i32
    %c0_i32_0 = arith.constant 0 : i32
    return %arg0, %c0_i32 : i32, i32
  }
}

</mosaic_0001>

<llo_original>
// kernel: net4group3_forward.1
$region0: #{net4group3_forward.1}
  #allocation0 [shape = 'u32[]', space=smem, size = 0x4, offset = 0x4, fixed_abs, tag = 'smem constant byte address 0x4 - core index']
  #allocation1 [shape = 'u32[72,128]{1,0:T(1,128)}', space=vmem, size = 0x9000, scoped, tag = 'internal scratch']
  %s0 = inlined_call_operand.vmem [shape: bf16[64,3], index: 0, kind: input, shape index: {}]
  %s1 = inlined_call_operand.vmem [shape: bf16[32,16], index: 1, kind: input, shape index: {}]
  %s2 = inlined_call_operand.vmem [shape: bf16[32,16], index: 2, kind: input, shape index: {}]
  %s3 = inlined_call_operand.vmem [shape: bf16[384,64], index: 3, kind: input, shape index: {}]
  %s4 = inlined_call_operand.vmem [shape: bf16[4,3,8], index: 4, kind: input, shape index: {}]
  %s5 = inlined_call_operand.vmem [shape: f32[1,8], index: 5, kind: input, shape index: {}]
  %s6 = inlined_call_operand.vmem [shape: bf16[384,96], index: 6, kind: input, shape index: {}]
  %s7 = inlined_call_operand.vmem [shape: bf16[3,8,8], index: 7, kind: input, shape index: {}]
  %s8 = inlined_call_operand.vmem [shape: f32[1,8], index: 8, kind: input, shape index: {}]
  %s9 = inlined_call_operand.vmem [shape: bf16[384,128], index: 9, kind: input, shape index: {}]
  %s10 = inlined_call_operand.vmem [shape: bf16[4,8,16], index: 10, kind: input, shape index: {}]
  %s11 = inlined_call_operand.vmem [shape: f32[1,16], index: 11, kind: input, shape index: {}]
  %s12 = inlined_call_operand.vmem [shape: bf16[240,96], index: 12, kind: input, shape index: {}]
  %s13 = inlined_call_operand.vmem [shape: bf16[3,16,16], index: 13, kind: input, shape index: {}]
  %s14 = inlined_call_operand.vmem [shape: f32[1,16], index: 14, kind: input, shape index: {}]
  %s15 = inlined_call_operand.vmem [shape: bf16[288,80], index: 15, kind: input, shape index: {}]
  %s16 = inlined_call_operand.vmem [shape: bf16[9,16,16], index: 16, kind: input, shape index: {}]
  %s17 = inlined_call_operand.vmem [shape: f32[1,16], index: 17, kind: input, shape index: {}]
  %s18 = inlined_call_operand.vmem [shape: bf16[3,16,64], index: 18, kind: input, shape index: {}]
  %s19 = inlined_call_operand.vmem [shape: bf16[320,32], index: 19, kind: input, shape index: {}]
  %s20 = inlined_call_operand.vmem [shape: bf16[4,64,64], index: 20, kind: input, shape index: {}]
  %s21 = inlined_call_operand.vmem [shape: f32[80,64], index: 21, kind: input, shape index: {}]
  %s22 = inlined_call_operand.vmem [shape: bf16[256,80], index: 22, kind: input, shape index: {}]
  %s23 = inlined_call_operand.vmem [shape: bf16[4,64,64], index: 23, kind: input, shape index: {}]
  %s24 = inlined_call_operand.vmem [shape: f32[1,64], index: 24, kind: input, shape index: {}]
  %s25 = inlined_call_operand.vmem [shape: bf16[128,64], index: 25, kind: input, shape index: {}]
  %s26 = inlined_call_operand.vmem [shape: bf16[4,64,8], index: 26, kind: input, shape index: {}]
  %s27 = inlined_call_operand.vmem [shape: f32[1,8], index: 27, kind: input, shape index: {}]
  %s28 = inlined_call_operand.vmem [shape: f32[32,8], index: 28, kind: output, shape index: {}]
  %s29 = sld [smem:[#allocation0]]
  $region122: #{net4group3_forward.1} parent=0
    _
  %s31 = ssub.s32 1, %s29
  %s32 = scalar_select 0, %s31, %s29
  // Predicated region
  $region2: #{net4group3_forward.1} parent=0 // pred_check
    _
  $region3: #{net4group3_forward.1} parent=0 // pred_check_branch
    %34 = sbr.rel (0) target = $region5
  $region4: #{net4group3_forward.1} parent=0 // pred_region
    _
  $region5: #{net4group3_forward.1} parent=0 // pred_fallthru
    _
  // Predicated region
  $region6: #{net4group3_forward.1} parent=0 // pred_check
    _
  $region7: #{net4group3_forward.1} parent=0 // pred_check_branch
    %36 = sbr.rel (0) target = $region9
  $region8: #{net4group3_forward.1} parent=0 // pred_region
    _
  $region9: #{net4group3_forward.1} parent=0 // pred_fallthru
    _
  // Predicated region
  $region10: #{net4group3_forward.1} parent=0 // pred_check
    _
  $region11: #{net4group3_forward.1} parent=0 // pred_check_branch
    %38 = sbr.rel (0) target = $region13
  $region12: #{net4group3_forward.1} parent=0 // pred_region
    _
  $region13: #{net4group3_forward.1} parent=0 // pred_fallthru
    _
  // Predicated region
  $region14: #{net4group3_forward.1} parent=0 // pred_check
    _
  $region15: #{net4group3_forward.1} parent=0 // pred_check_branch
    %40 = sbr.rel (0) target = $region17
  $region16: #{net4group3_forward.1} parent=0 // pred_region
    _
  $region17: #{net4group3_forward.1} parent=0 // pred_fallthru
    _
  // Predicated region
  $region18: #{net4group3_forward.1} parent=0 // pred_check
    _
  $region19: #{net4group3_forward.1} parent=0 // pred_check_branch
    %42 = sbr.rel (0) target = $region21
  $region20: #{net4group3_forward.1} parent=0 // pred_region
    _
  $region21: #{net4group3_forward.1} parent=0 // pred_fallthru
    _
  // Predicated region
  $region22: #{net4group3_forward.1} parent=0 // pred_check
    _
  $region23: #{net4group3_forward.1} parent=0 // pred_check_branch
    %44 = sbr.rel (0) target = $region25
  $region24: #{net4group3_forward.1} parent=0 // pred_region
    _
  $region25: #{net4group3_forward.1} parent=0 // pred_fallthru
    _
  // Predicated region
  $region26: #{net4group3_forward.1} parent=0 // pred_check
    _
  $region27: #{net4group3_forward.1} parent=0 // pred_check_branch
    %46 = sbr.rel (0) target = $region29
  $region28: #{net4group3_forward.1} parent=0 // pred_region
    _
  $region29: #{net4group3_forward.1} parent=0 // pred_fallthru
    _
  // Predicated region
  $region30: #{net4group3_forward.1} parent=0 // pred_check
    _
  $region31: #{net4group3_forward.1} parent=0 // pred_check_branch
    %48 = sbr.rel (0) target = $region33
  $region32: #{net4group3_forward.1} parent=0 // pred_region
    _
  $region33: #{net4group3_forward.1} parent=0 // pred_fallthru
    _
  // Predicated region
  $region34: #{net4group3_forward.1} parent=0 // pred_check
    _
  $region35: #{net4group3_forward.1} parent=0 // pred_check_branch
    %50 = sbr.rel (0) target = $region37
  $region36: #{net4group3_forward.1} parent=0 // pred_region
    _
  $region37: #{net4group3_forward.1} parent=0 // pred_fallthru
    _
  // Predicated region
  $region38: #{net4group3_forward.1} parent=0 // pred_check
    _
  $region39: #{net4group3_forward.1} parent=0 // pred_check_branch
    %52 = sbr.rel (0) target = $region41
  $region40: #{net4group3_forward.1} parent=0 // pred_region
    _
  $region41: #{net4group3_forward.1} parent=0 // pred_fallthru
    _
  // Predicated region
  $region42: #{net4group3_forward.1} parent=0 // pred_check
    _
  $region43: #{net4group3_forward.1} parent=0 // pred_check_branch
    %54 = sbr.rel (0) target = $region45
  $region44: #{net4group3_forward.1} parent=0 // pred_region
    _
  $region45: #{net4group3_forward.1} parent=0 // pred_fallthru
    _
  // Predicated region
  $region46: #{net4group3_forward.1} parent=0 // pred_check
    _
  $region47: #{net4group3_forward.1} parent=0 // pred_check_branch
    %56 = sbr.rel (0) target = $region49
  $region48: #{net4group3_forward.1} parent=0 // pred_region
    _
  $region49: #{net4group3_forward.1} parent=0 // pred_fallthru
    _
  // Predicated region
  $region50: #{net4group3_forward.1} parent=0 // pred_check
    _
  $region51: #{net4group3_forward.1} parent=0 // pred_check_branch
    %58 = sbr.rel (0) target = $region53
  $region52: #{net4group3_forward.1} parent=0 // pred_region
    _
  $region53: #{net4group3_forward.1} parent=0 // pred_fallthru
    _
  // Predicated region
  $region54: #{net4group3_forward.1} parent=0 // pred_check
    _
  $region55: #{net4group3_forward.1} parent=0 // pred_check_branch
    %60 = sbr.rel (0) target = $region57
  $region56: #{net4group3_forward.1} parent=0 // pred_region
    _
  $region57: #{net4group3_forward.1} parent=0 // pred_fallthru
    _
  // Predicated region
  $region58: #{net4group3_forward.1} parent=0 // pred_check
    _
  $region59: #{net4group3_forward.1} parent=0 // pred_check_branch
    %62 = sbr.rel (0) target = $region61
  $region60: #{net4group3_forward.1} parent=0 // pred_region
    _
  $region61: #{net4group3_forward.1} parent=0 // pred_fallthru
    _
  // Predicated region
  $region62: #{net4group3_forward.1} parent=0 // pred_check
    _
  $region63: #{net4group3_forward.1} parent=0 // pred_check_branch
    %64 = sbr.rel (0) target = $region65
  $region64: #{net4group3_forward.1} parent=0 // pred_region
    _
  $region65: #{net4group3_forward.1} parent=0 // pred_fallthru
    _
  // Predicated region
  $region66: #{net4group3_forward.1} parent=0 // pred_check
    _
  $region67: #{net4group3_forward.1} parent=0 // pred_check_branch
    %66 = sbr.rel (0) target = $region69
  $region68: #{net4group3_forward.1} parent=0 // pred_region
    _
  $region69: #{net4group3_forward.1} parent=0 // pred_fallthru
    _
  // Predicated region
  $region70: #{net4group3_forward.1} parent=0 // pred_check
    _
  $region71: #{net4group3_forward.1} parent=0 // pred_check_branch
    %68 = sbr.rel (0) target = $region73
  $region72: #{net4group3_forward.1} parent=0 // pred_region
    _
  $region73: #{net4group3_forward.1} parent=0 // pred_fallthru
    _
  // Predicated region
  $region74: #{net4group3_forward.1} parent=0 // pred_check
    _
  $region75: #{net4group3_forward.1} parent=0 // pred_check_branch
    %70 = sbr.rel (0) target = $region77
  $region76: #{net4group3_forward.1} parent=0 // pred_region
    _
  $region77: #{net4group3_forward.1} parent=0 // pred_fallthru
    _
  // Predicated region
  $region78: #{net4group3_forward.1} parent=0 // pred_check
    _
  $region79: #{net4group3_forward.1} parent=0 // pred_check_branch
    %72 = sbr.rel (0) target = $region81
  $region80: #{net4group3_forward.1} parent=0 // pred_region
    _
  $region81: #{net4group3_forward.1} parent=0 // pred_fallthru
    _
  // Predicated region
  $region82: #{net4group3_forward.1} parent=0 // pred_check
    _
  $region83: #{net4group3_forward.1} parent=0 // pred_check_branch
    %74 = sbr.rel (0) target = $region85
  $region84: #{net4group3_forward.1} parent=0 // pred_region
    _
  $region85: #{net4group3_forward.1} parent=0 // pred_fallthru
    _
  // Predicated region
  $region86: #{net4group3_forward.1} parent=0 // pred_check
    _
  $region87: #{net4group3_forward.1} parent=0 // pred_check_branch
    %76 = sbr.rel (0) target = $region89
  $region88: #{net4group3_forward.1} parent=0 // pred_region
    _
  $region89: #{net4group3_forward.1} parent=0 // pred_fallthru
    _
  // Predicated region
  $region90: #{net4group3_forward.1} parent=0 // pred_check
    _
  $region91: #{net4group3_forward.1} parent=0 // pred_check_branch
    %78 = sbr.rel (0) target = $region93
  $region92: #{net4group3_forward.1} parent=0 // pred_region
    _
  $region93: #{net4group3_forward.1} parent=0 // pred_fallthru
    _
  // Predicated region
  $region94: #{net4group3_forward.1} parent=0 // pred_check
    _
  $region95: #{net4group3_forward.1} parent=0 // pred_check_branch
    %80 = sbr.rel (0) target = $region97
  $region96: #{net4group3_forward.1} parent=0 // pred_region
    _
  $region97: #{net4group3_forward.1} parent=0 // pred_fallthru
    _
  // Predicated region
  $region98: #{net4group3_forward.1} parent=0 // pred_check
    _
  $region99: #{net4group3_forward.1} parent=0 // pred_check_branch
    %82 = sbr.rel (0) target = $region101
  $region100: #{net4group3_forward.1} parent=0 // pred_region
    _
  $region101: #{net4group3_forward.1} parent=0 // pred_fallthru
    _
  // Predicated region
  $region102: #{net4group3_forward.1} parent=0 // pred_check
    _
  $region103: #{net4group3_forward.1} parent=0 // pred_check_branch
    %84 = sbr.rel (0) target = $region105
  $region104: #{net4group3_forward.1} parent=0 // pred_region
    _
  $region105: #{net4group3_forward.1} parent=0 // pred_fallthru
    _
  // Predicated region
  $region106: #{net4group3_forward.1} parent=0 // pred_check
    _
  $region107: #{net4group3_forward.1} parent=0 // pred_check_branch
    %86 = sbr.rel (0) target = $region109
  $region108: #{net4group3_forward.1} parent=0 // pred_region
    _
  $region109: #{net4group3_forward.1} parent=0 // pred_fallthru
    _
  // Predicated region
  $region110: #{net4group3_forward.1} parent=0 // pred_check
    _
  $region111: #{net4group3_forward.1} parent=0 // pred_check_branch
    %88 = sbr.rel (0) target = $region113
  $region112: #{net4group3_forward.1} parent=0 // pred_region
    _
  $region113: #{net4group3_forward.1} parent=0 // pred_fallthru
    _
  %v90 = vld [vmem:[%s0] sm:$0xf]
  %v91 = vld [vmem:[%s0 + $0x4] sm:$0xf]
  %v92 = vld [vmem:[%s0 + $0x8] sm:$0xf]
  %v93 = vld [vmem:[%s0 + $0xc] sm:$0xf]
  %v94 = vld [vmem:[%s0 + $0x10] sm:$0xf]
  %v95 = vld [vmem:[%s0 + $0x14] sm:$0xf]
  %v96 = vld [vmem:[%s0 + $0x18] sm:$0xf]
  %v97 = vld [vmem:[%s0 + $0x1c] sm:$0xf]
  %v98 = vld [vmem:[%s5] sm:$0x1]
  %v99 = vld [vmem:[%s3] sm:$0xf]
  %v100 = vld [vmem:[%s3 + $0x4] sm:$0xf]
  %v101 = vld [vmem:[%s3 + $0x8] sm:$0xf]
  %v102 = vld [vmem:[%s3 + $0xc] sm:$0xf]
  %v103 = vld [vmem:[%s3 + $0x10] sm:$0xf]
  %v104 = vld [vmem:[%s3 + $0x14] sm:$0xf]
  %v105 = vld [vmem:[%s3 + $0x18] sm:$0xf]
  %v106 = vld [vmem:[%s3 + $0x1c] sm:$0xf]
  %v107 = vld [vmem:[%s3 + $0x20] sm:$0xf]
  %v108 = vld [vmem:[%s3 + $0x24] sm:$0xf]
  %v109 = vld [vmem:[%s3 + $0x28] sm:$0xf]
  %v110 = vld [vmem:[%s3 + $0x2c] sm:$0xf]
  %v111 = vld [vmem:[%s3 + $0x30] sm:$0xf]
  %v112 = vld [vmem:[%s3 + $0x34] sm:$0xf]
  %v113 = vld [vmem:[%s3 + $0x38] sm:$0xf]
  %v114 = vld [vmem:[%s3 + $0x3c] sm:$0xf]
  %v115 = vld [vmem:[%s3 + $0x40] sm:$0xf]
  %v116 = vld [vmem:[%s3 + $0x44] sm:$0xf]
  %v117 = vld [vmem:[%s3 + $0x48] sm:$0xf]
  %v118 = vld [vmem:[%s3 + $0x4c] sm:$0xf]
  %v119 = vld [vmem:[%s3 + $0x50] sm:$0xf]
  %v120 = vld [vmem:[%s3 + $0x54] sm:$0xf]
  %v121 = vld [vmem:[%s3 + $0x58] sm:$0xf]
  %v122 = vld [vmem:[%s3 + $0x5c] sm:$0xf]
  %v123 = vld [vmem:[%s3 + $0x60] sm:$0xf]
  %v124 = vld [vmem:[%s3 + $0x64] sm:$0xf]
  %v125 = vld [vmem:[%s3 + $0x68] sm:$0xf]
  %v126 = vld [vmem:[%s3 + $0x6c] sm:$0xf]
  %v127 = vld [vmem:[%s3 + $0x70] sm:$0xf]
  %v128 = vld [vmem:[%s3 + $0x74] sm:$0xf]
  %v129 = vld [vmem:[%s3 + $0x78] sm:$0xf]
  %v130 = vld [vmem:[%s3 + $0x7c] sm:$0xf]
  %v131 = vld [vmem:[%s3 + $0x80] sm:$0xf]
  %v132 = vld [vmem:[%s3 + $0x84] sm:$0xf]
  %v133 = vld [vmem:[%s3 + $0x88] sm:$0xf]
  %v134 = vld [vmem:[%s3 + $0x8c] sm:$0xf]
  %v135 = vld [vmem:[%s3 + $0x90] sm:$0xf]
  %v136 = vld [vmem:[%s3 + $0x94] sm:$0xf]
  %v137 = vld [vmem:[%s3 + $0x98] sm:$0xf]
  %v138 = vld [vmem:[%s3 + $0x9c] sm:$0xf]
  %v139 = vld [vmem:[%s3 + $0xa0] sm:$0xf]
  %v140 = vld [vmem:[%s3 + $0xa4] sm:$0xf]
  %v141 = vld [vmem:[%s3 + $0xa8] sm:$0xf]
  %v142 = vld [vmem:[%s3 + $0xac] sm:$0xf]
  %v143 = vld [vmem:[%s3 + $0xb0] sm:$0xf]
  %v144 = vld [vmem:[%s3 + $0xb4] sm:$0xf]
  %v145 = vld [vmem:[%s3 + $0xb8] sm:$0xf]
  %v146 = vld [vmem:[%s3 + $0xbc] sm:$0xf]
  %v195 = vunpack.c.l.b16 %v99
  %v196 = vunpack.c.l.b16 %v100
  %v197 = vunpack.c.l.b16 %v101
  %v198 = vunpack.c.l.b16 %v102
  %v199 = vunpack.c.l.b16 %v103
  %v200 = vunpack.c.l.b16 %v104
  %v201 = vunpack.c.l.b16 %v105
  %v202 = vunpack.c.l.b16 %v106
  %v203 = vunpack.c.l.b16 %v107
  %v204 = vunpack.c.l.b16 %v108
  %v205 = vunpack.c.l.b16 %v109
  %v206 = vunpack.c.l.b16 %v110
  %v207 = vunpack.c.l.b16 %v111
  %v208 = vunpack.c.l.b16 %v112
  %v209 = vunpack.c.l.b16 %v113
  %v210 = vunpack.c.l.b16 %v114
  %v211 = vunpack.c.l.b16 %v115
  %v212 = vunpack.c.l.b16 %v116
  %v213 = vunpack.c.l.b16 %v117
  %v214 = vunpack.c.l.b16 %v118
  %v215 = vunpack.c.l.b16 %v119
  %v216 = vunpack.c.l.b16 %v120
  %v217 = vunpack.c.l.b16 %v121
  %v218 = vunpack.c.l.b16 %v122
  %v219 = vunpack.c.l.b16 %v123
  %v220 = vunpack.c.l.b16 %v124
  %v221 = vunpack.c.l.b16 %v125
  %v222 = vunpack.c.l.b16 %v126
  %v223 = vunpack.c.l.b16 %v127
  %v224 = vunpack.c.l.b16 %v128
  %v225 = vunpack.c.l.b16 %v129
  %v226 = vunpack.c.l.b16 %v130
  %v227 = vunpack.c.l.b16 %v131
  %v228 = vunpack.c.l.b16 %v132
  %v229 = vunpack.c.l.b16 %v133
  %v230 = vunpack.c.l.b16 %v134
  %v231 = vunpack.c.l.b16 %v135
  %v232 = vunpack.c.l.b16 %v136
  %v233 = vunpack.c.l.b16 %v137
  %v234 = vunpack.c.l.b16 %v138
  %v235 = vunpack.c.l.b16 %v139
  %v236 = vunpack.c.l.b16 %v140
  %v237 = vunpack.c.l.b16 %v141
  %v238 = vunpack.c.l.b16 %v142
  %v239 = vunpack.c.l.b16 %v143
  %v240 = vunpack.c.l.b16 %v144
  %v241 = vunpack.c.l.b16 %v145
  %v242 = vunpack.c.l.b16 %v146
  %v243 = vpack.c.b16 %v196, %v195
  %v244 = vpack.c.b16 %v198, %v197
  %v245 = vpack.c.b16 %v200, %v199
  %v246 = vpack.c.b16 %v202, %v201
  %v247 = vpack.c.b16 %v204, %v203
  %v248 = vpack.c.b16 %v206, %v205
  %v249 = vpack.c.b16 %v208, %v207
  %v250 = vpack.c.b16 %v210, %v209
  %v251 = vpack.c.b16 %v212, %v211
  %v252 = vpack.c.b16 %v214, %v213
  %v253 = vpack.c.b16 %v216, %v215
  %v254 = vpack.c.b16 %v218, %v217
  %v255 = vpack.c.b16 %v220, %v219
  %v256 = vpack.c.b16 %v222, %v221
  %v257 = vpack.c.b16 %v224, %v223
  %v258 = vpack.c.b16 %v226, %v225
  %v259 = vpack.c.b16 %v228, %v227
  %v260 = vpack.c.b16 %v230, %v229
  %v261 = vpack.c.b16 %v232, %v231
  %v262 = vpack.c.b16 %v234, %v233
  %v263 = vpack.c.b16 %v236, %v235
  %v264 = vpack.c.b16 %v238, %v237
  %v265 = vpack.c.b16 %v240, %v239
  %v266 = vpack.c.b16 %v242, %v241
  %v275 = vunpack.c.l.b16 %v90
  %v276 = vunpack.c.l.b16 %v91
  %v277 = vunpack.c.l.b16 %v92
  %v278 = vunpack.c.l.b16 %v93
  %v279 = vunpack.c.l.b16 %v94
  %v280 = vunpack.c.l.b16 %v95
  %v281 = vunpack.c.l.b16 %v96
  %v282 = vunpack.c.l.b16 %v97
  %v283 = vpack.c.b16 %v276, %v275
  %v284 = vpack.c.b16 %v278, %v277
  %v285 = vpack.c.b16 %v280, %v279
  %v286 = vpack.c.b16 %v282, %v281
  %vm291 = vcmask 523264
  %v293 = vsel %vm291, %v243, 0
  %v296 = vsel %vm291, %v244, 0
  %v299 = vsel %vm291, %v245, 0
  %v302 = vsel %vm291, %v246, 0
  %v305 = vsel %vm291, %v247, 0
  %v308 = vsel %vm291, %v248, 0
  %v311 = vsel %vm291, %v249, 0
  %v314 = vsel %vm291, %v250, 0
  %v317 = vsel %vm291, %v251, 0
  %v320 = vsel %vm291, %v252, 0
  %v323 = vsel %vm291, %v253, 0
  %v326 = vsel %vm291, %v254, 0
  %v329 = vsel %vm291, %v255, 0
  %v332 = vsel %vm291, %v256, 0
  %v335 = vsel %vm291, %v257, 0
  %v338 = vsel %vm291, %v258, 0
  %v341 = vsel %vm291, %v259, 0
  %v344 = vsel %vm291, %v260, 0
  %v347 = vsel %vm291, %v261, 0
  %v350 = vsel %vm291, %v262, 0
  %v353 = vsel %vm291, %v263, 0
  %v356 = vsel %vm291, %v264, 0
  %v359 = vsel %vm291, %v265, 0
  %v362 = vsel %vm291, %v266, 0
  %364 = vmatpush.bf16.msra.mxu0 0
  %365 = vmatpush.bf16.msra.mxu0 0
  %366 = vmatpush.bf16.msra.mxu0 0
  %367 = vmatpush.bf16.msra.mxu0 0
  %368 = vmatpush.bf16.msra.mxu0 %v286
  %369 = vmatpush.bf16.msra.mxu0 %v285
  %370 = vmatpush.bf16.msra.mxu0 %v284
  %371 = vmatpush.bf16.msra.mxu0 %v283
  %372 = vmatmul.bf16.gmra.mxu0 %v293
  %v373 = vpop.f32.mrf.mxu0
  %v374 = vadd.f32 0.0, %v373
  %v375 = vpop.f32.mrf.mxu0
  %v376 = vadd.f32 0.0, %v375
  %377 = vmatmul.bf16.gmra.mxu0 %v296
  %v378 = vpop.f32.mrf.mxu0
  %v379 = vadd.f32 0.0, %v378
  %v380 = vpop.f32.mrf.mxu0
  %v381 = vadd.f32 0.0, %v380
  %382 = vmatmul.bf16.gmra.mxu0 %v299
  %v383 = vpop.f32.mrf.mxu0
  %v384 = vadd.f32 0.0, %v383
  %v385 = vpop.f32.mrf.mxu0
  %v386 = vadd.f32 0.0, %v385
  %387 = vmatmul.bf16.gmra.mxu0 %v302
  %v388 = vpop.f32.mrf.mxu0
  %v389 = vadd.f32 0.0, %v388
  %v390 = vpop.f32.mrf.mxu0
  %v391 = vadd.f32 0.0, %v390
  %392 = vmatmul.bf16.gmra.mxu0 %v305
  %v393 = vpop.f32.mrf.mxu0
  %v394 = vadd.f32 0.0, %v393
  %v395 = vpop.f32.mrf.mxu0
  %v396 = vadd.f32 0.0, %v395
  %397 = vmatmul.bf16.gmra.mxu0 %v308
  %v398 = vpop.f32.mrf.mxu0
  %v399 = vadd.f32 0.0, %v398
  %v400 = vpop.f32.mrf.mxu0
  %v401 = vadd.f32 0.0, %v400
  %402 = vmatmul.bf16.gmra.mxu0 %v311
  %v403 = vpop.f32.mrf.mxu0
  %v404 = vadd.f32 0.0, %v403
  %v405 = vpop.f32.mrf.mxu0
  %v406 = vadd.f32 0.0, %v405
  %407 = vmatmul.bf16.gmra.mxu0 %v314
  %v408 = vpop.f32.mrf.mxu0
  %v409 = vadd.f32 0.0, %v408
  %v410 = vpop.f32.mrf.mxu0
  %v411 = vadd.f32 0.0, %v410
  %412 = vmatmul.bf16.gmra.mxu0 %v317
  %v413 = vpop.f32.mrf.mxu0
  %v414 = vadd.f32 0.0, %v413
  %v415 = vpop.f32.mrf.mxu0
  %v416 = vadd.f32 0.0, %v415
  %417 = vmatmul.bf16.gmra.mxu0 %v320
  %v418 = vpop.f32.mrf.mxu0
  %v419 = vadd.f32 0.0, %v418
  %v420 = vpop.f32.mrf.mxu0
  %v421 = vadd.f32 0.0, %v420
  %422 = vmatmul.bf16.gmra.mxu0 %v323
  %v423 = vpop.f32.mrf.mxu0
  %v424 = vadd.f32 0.0, %v423
  %v425 = vpop.f32.mrf.mxu0
  %v426 = vadd.f32 0.0, %v425
  %427 = vmatmul.bf16.gmra.mxu0 %v326
  %v428 = vpop.f32.mrf.mxu0
  %v429 = vadd.f32 0.0, %v428
  %v430 = vpop.f32.mrf.mxu0
  %v431 = vadd.f32 0.0, %v430
  %432 = vmatmul.bf16.gmra.mxu0 %v329
  %v433 = vpop.f32.mrf.mxu0
  %v434 = vadd.f32 0.0, %v433
  %v435 = vpop.f32.mrf.mxu0
  %v436 = vadd.f32 0.0, %v435
  %437 = vmatmul.bf16.gmra.mxu0 %v332
  %v438 = vpop.f32.mrf.mxu0
  %v439 = vadd.f32 0.0, %v438
  %v440 = vpop.f32.mrf.mxu0
  %v441 = vadd.f32 0.0, %v440
  %442 = vmatmul.bf16.gmra.mxu0 %v335
  %v443 = vpop.f32.mrf.mxu0
  %v444 = vadd.f32 0.0, %v443
  %v445 = vpop.f32.mrf.mxu0
  %v446 = vadd.f32 0.0, %v445
  %447 = vmatmul.bf16.gmra.mxu0 %v338
  %v448 = vpop.f32.mrf.mxu0
  %v449 = vadd.f32 0.0, %v448
  %v450 = vpop.f32.mrf.mxu0
  %v451 = vadd.f32 0.0, %v450
  %452 = vmatmul.bf16.gmra.mxu0 %v341
  %v453 = vpop.f32.mrf.mxu0
  %v454 = vadd.f32 0.0, %v453
  %v455 = vpop.f32.mrf.mxu0
  %v456 = vadd.f32 0.0, %v455
  %457 = vmatmul.bf16.gmra.mxu0 %v344
  %v458 = vpop.f32.mrf.mxu0
  %v459 = vadd.f32 0.0, %v458
  %v460 = vpop.f32.mrf.mxu0
  %v461 = vadd.f32 0.0, %v460
  %462 = vmatmul.bf16.gmra.mxu0 %v347
  %v463 = vpop.f32.mrf.mxu0
  %v464 = vadd.f32 0.0, %v463
  %v465 = vpop.f32.mrf.mxu0
  %v466 = vadd.f32 0.0, %v465
  %467 = vmatmul.bf16.gmra.mxu0 %v350
  %v468 = vpop.f32.mrf.mxu0
  %v469 = vadd.f32 0.0, %v468
  %v470 = vpop.f32.mrf.mxu0
  %v471 = vadd.f32 0.0, %v470
  %472 = vmatmul.bf16.gmra.mxu0 %v353
  %v473 = vpop.f32.mrf.mxu0
  %v474 = vadd.f32 0.0, %v473
  %v475 = vpop.f32.mrf.mxu0
  %v476 = vadd.f32 0.0, %v475
  %477 = vmatmul.bf16.gmra.mxu0 %v356
  %v478 = vpop.f32.mrf.mxu0
  %v479 = vadd.f32 0.0, %v478
  %v480 = vpop.f32.mrf.mxu0
  %v481 = vadd.f32 0.0, %v480
  %482 = vmatmul.bf16.gmra.mxu0 %v359
  %v483 = vpop.f32.mrf.mxu0
  %v484 = vadd.f32 0.0, %v483
  %v485 = vpop.f32.mrf.mxu0
  %v486 = vadd.f32 0.0, %v485
  %487 = vmatmul.bf16.gmra.mxu0 %v362
  %v488 = vpop.f32.mrf.mxu0
  %v489 = vadd.f32 0.0, %v488
  %v490 = vpop.f32.mrf.mxu0
  %v491 = vadd.f32 0.0, %v490
  %492 = vdwg.mxu0
  %v493 = vpack.c.bf16 %v374, %v374
  %v494 = vpack.c.bf16 %v376, %v376
  %v495 = vpack.c.bf16 %v379, %v379
  %v496 = vpack.c.bf16 %v381, %v381
  %v497 = vpack.c.bf16 %v384, %v384
  %v498 = vpack.c.bf16 %v386, %v386
  %v499 = vpack.c.bf16 %v389, %v389
  %v500 = vpack.c.bf16 %v391, %v391
  %v501 = vpack.c.bf16 %v394, %v394
  %v502 = vpack.c.bf16 %v396, %v396
  %v503 = vpack.c.bf16 %v399, %v399
  %v504 = vpack.c.bf16 %v401, %v401
  %v505 = vpack.c.bf16 %v404, %v404
  %v506 = vpack.c.bf16 %v406, %v406
  %v507 = vpack.c.bf16 %v409, %v409
  %v508 = vpack.c.bf16 %v411, %v411
  %v509 = vpack.c.bf16 %v414, %v414
  %v510 = vpack.c.bf16 %v416, %v416
  %v511 = vpack.c.bf16 %v419, %v419
  %v512 = vpack.c.bf16 %v421, %v421
  %v513 = vpack.c.bf16 %v424, %v424
  %v514 = vpack.c.bf16 %v426, %v426
  %v515 = vpack.c.bf16 %v429, %v429
  %v516 = vpack.c.bf16 %v431, %v431
  %v517 = vpack.c.bf16 %v434, %v434
  %v518 = vpack.c.bf16 %v436, %v436
  %v519 = vpack.c.bf16 %v439, %v439
  %v520 = vpack.c.bf16 %v441, %v441
  %v521 = vpack.c.bf16 %v444, %v444
  %v522 = vpack.c.bf16 %v446, %v446
  %v523 = vpack.c.bf16 %v449, %v449
  %v524 = vpack.c.bf16 %v451, %v451
  %v525 = vpack.c.bf16 %v454, %v454
  %v526 = vpack.c.bf16 %v456, %v456
  %v527 = vpack.c.bf16 %v459, %v459
  %v528 = vpack.c.bf16 %v461, %v461
  %v529 = vpack.c.bf16 %v464, %v464
  %v530 = vpack.c.bf16 %v466, %v466
  %v531 = vpack.c.bf16 %v469, %v469
  %v532 = vpack.c.bf16 %v471, %v471
  %v533 = vpack.c.bf16 %v474, %v474
  %v534 = vpack.c.bf16 %v476, %v476
  %v535 = vpack.c.bf16 %v479, %v479
  %v536 = vpack.c.bf16 %v481, %v481
  %v537 = vpack.c.bf16 %v484, %v484
  %v538 = vpack.c.bf16 %v486, %v486
  %v539 = vpack.c.bf16 %v489, %v489
  %v540 = vpack.c.bf16 %v491, %v491
  %v541 = vld [vmem:[%s4] sm:$0x3]
  %s542 = scalar_lea.vmem %s4, 2
  %v543 = vld [vmem:[%s542] sm:$0x3]
  %v556 = vunpack.c.l.b16 %v505
  %v557 = vunpack.c.l.b16 %v506
  %v558 = vunpack.c.l.b16 %v507
  %v559 = vunpack.c.l.b16 %v508
  %v560 = vunpack.c.l.b16 %v509
  %v561 = vunpack.c.l.b16 %v510
  %v562 = vunpack.c.l.b16 %v511
  %v563 = vunpack.c.l.b16 %v512
  %v564 = vunpack.c.l.b16 %v513
  %v565 = vunpack.c.l.b16 %v514
  %v566 = vunpack.c.l.b16 %v515
  %v567 = vunpack.c.l.b16 %v516
  %v568 = vpack.c.b16 %v557, %v556
  %v569 = vpack.c.b16 %v559, %v558
  %v570 = vpack.c.b16 %v561, %v560
  %v571 = vpack.c.b16 %v563, %v562
  %v572 = vpack.c.b16 %v565, %v564
  %v573 = vpack.c.b16 %v567, %v566
  %vm574 = vcmask 23552
  %v576 = vsel %vm574, %v568, 0
  %v579 = vsel %vm574, %v569, 0
  %v582 = vsel %vm574, %v570, 0
  %v585 = vsel %vm574, %v571, 0
  %v588 = vsel %vm574, %v572, 0
  %v591 = vsel %vm574, %v573, 0
  %vm593 = vcmask 1040384
  %vm594 = vcmask 1041408
  %v595 = vsel %vm593, 4294967295, 65535
  %v596 = vsel %vm594, %v595, 0
  %v598 = vand.u32 %v543, %v596
  %600 = vmatpush.bf16.msra.mxu0 0
  %601 = vmatpush.bf16.msra.mxu0 0
  %602 = vmatpush.bf16.msra.mxu0 0
  %603 = vmatpush.bf16.msra.mxu0 0
  %604 = vmatpush.bf16.msra.mxu0 0
  %605 = vmatpush.bf16.msra.mxu0 0
  %606 = vmatpush.bf16.msra.mxu0 0
  %607 = vmatpush.bf16.msra.mxu0 %v598
  %608 = vmatmul.bf16.gmra.mxu0 %v576
  %v609 = vpop.f32.mrf.mxu0
  %v610 = vadd.f32 0.0, %v609
  %v611 = vpop.f32.mrf.mxu0
  %v612 = vadd.f32 0.0, %v611
  %613 = vmatmul.bf16.gmra.mxu0 %v579
  %v614 = vpop.f32.mrf.mxu0
  %v615 = vadd.f32 0.0, %v614
  %v616 = vpop.f32.mrf.mxu0
  %v617 = vadd.f32 0.0, %v616
  %618 = vmatmul.bf16.gmra.mxu0 %v582
  %v619 = vpop.f32.mrf.mxu0
  %v620 = vadd.f32 0.0, %v619
  %v621 = vpop.f32.mrf.mxu0
  %v622 = vadd.f32 0.0, %v621
  %623 = vmatmul.bf16.gmra.mxu0 %v585
  %v624 = vpop.f32.mrf.mxu0
  %v625 = vadd.f32 0.0, %v624
  %v626 = vpop.f32.mrf.mxu0
  %v627 = vadd.f32 0.0, %v626
  %628 = vmatmul.bf16.gmra.mxu0 %v588
  %v629 = vpop.f32.mrf.mxu0
  %v630 = vadd.f32 0.0, %v629
  %v631 = vpop.f32.mrf.mxu0
  %v632 = vadd.f32 0.0, %v631
  %633 = vmatmul.bf16.gmra.mxu0 %v591
  %v634 = vpop.f32.mrf.mxu0
  %v635 = vadd.f32 0.0, %v634
  %v636 = vpop.f32.mrf.mxu0
  %v637 = vadd.f32 0.0, %v636
  %638 = vdwg.mxu0
  %v651 = vunpack.c.l.b16 %v493
  %v652 = vunpack.c.l.b16 %v494
  %v653 = vunpack.c.l.b16 %v495
  %v654 = vunpack.c.l.b16 %v496
  %v655 = vunpack.c.l.b16 %v497
  %v656 = vunpack.c.l.b16 %v498
  %v657 = vunpack.c.l.b16 %v499
  %v658 = vunpack.c.l.b16 %v500
  %v659 = vunpack.c.l.b16 %v501
  %v660 = vunpack.c.l.b16 %v502
  %v661 = vunpack.c.l.b16 %v503
  %v662 = vunpack.c.l.b16 %v504
  %v663 = vpack.c.b16 %v652, %v651
  %v664 = vpack.c.b16 %v654, %v653
  %v665 = vpack.c.b16 %v656, %v655
  %v666 = vpack.c.b16 %v658, %v657
  %v667 = vpack.c.b16 %v660, %v659
  %v668 = vpack.c.b16 %v662, %v661
  %v670 = vsel %vm574, %v663, 0
  %v673 = vsel %vm574, %v664, 0
  %v676 = vsel %vm574, %v665, 0
  %v679 = vsel %vm574, %v666, 0
  %v682 = vsel %vm574, %v667, 0
  %v685 = vsel %vm574, %v668, 0
  %v688 = vand.u32 %v541, %v596
  %690 = vmatpush.bf16.msra.mxu0 0
  %691 = vmatpush.bf16.msra.mxu0 0
  %692 = vmatpush.bf16.msra.mxu0 0
  %693 = vmatpush.bf16.msra.mxu0 0
  %694 = vmatpush.bf16.msra.mxu0 0
  %695 = vmatpush.bf16.msra.mxu0 0
  %696 = vmatpush.bf16.msra.mxu0 0
  %697 = vmatpush.bf16.msra.mxu0 %v688
  %698 = vmatmul.bf16.gmra.mxu0 %v670
  %v699 = vpop.f32.mrf.mxu0
  %v700 = vadd.f32 %v610, %v699
  %v701 = vpop.f32.mrf.mxu0
  %v702 = vadd.f32 %v612, %v701
  %703 = vmatmul.bf16.gmra.mxu0 %v673
  %v704 = vpop.f32.mrf.mxu0
  %v705 = vadd.f32 %v615, %v704
  %v706 = vpop.f32.mrf.mxu0
  %v707 = vadd.f32 %v617, %v706
  %708 = vmatmul.bf16.gmra.mxu0 %v676
  %v709 = vpop.f32.mrf.mxu0
  %v710 = vadd.f32 %v620, %v709
  %v711 = vpop.f32.mrf.mxu0
  %v712 = vadd.f32 %v622, %v711
  %713 = vmatmul.bf16.gmra.mxu0 %v679
  %v714 = vpop.f32.mrf.mxu0
  %v715 = vadd.f32 %v625, %v714
  %v716 = vpop.f32.mrf.mxu0
  %v717 = vadd.f32 %v627, %v716
  %718 = vmatmul.bf16.gmra.mxu0 %v682
  %v719 = vpop.f32.mrf.mxu0
  %v720 = vadd.f32 %v630, %v719
  %v721 = vpop.f32.mrf.mxu0
  %v722 = vadd.f32 %v632, %v721
  %723 = vmatmul.bf16.gmra.mxu0 %v685
  %v724 = vpop.f32.mrf.mxu0
  %v725 = vadd.f32 %v635, %v724
  %v726 = vpop.f32.mrf.mxu0
  %v727 = vadd.f32 %v637, %v726
  %728 = vdwg.mxu0
  %s729 = scalar_lea.vmem %s4, 4
  %v730 = vld [vmem:[%s729] sm:$0x3]
  %v743 = vunpack.c.l.b16 %v517
  %v744 = vunpack.c.l.b16 %v518
  %v745 = vunpack.c.l.b16 %v519
  %v746 = vunpack.c.l.b16 %v520
  %v747 = vunpack.c.l.b16 %v521
  %v748 = vunpack.c.l.b16 %v522
  %v749 = vunpack.c.l.b16 %v523
  %v750 = vunpack.c.l.b16 %v524
  %v751 = vunpack.c.l.b16 %v525
  %v752 = vunpack.c.l.b16 %v526
  %v753 = vunpack.c.l.b16 %v527
  %v754 = vunpack.c.l.b16 %v528
  %v755 = vpack.c.b16 %v744, %v743
  %v756 = vpack.c.b16 %v746, %v745
  %v757 = vpack.c.b16 %v748, %v747
  %v758 = vpack.c.b16 %v750, %v749
  %v759 = vpack.c.b16 %v752, %v751
  %v760 = vpack.c.b16 %v754, %v753
  %v762 = vsel %vm574, %v755, 0
  %v765 = vsel %vm574, %v756, 0
  %v768 = vsel %vm574, %v757, 0
  %v771 = vsel %vm574, %v758, 0
  %v774 = vsel %vm574, %v759, 0
  %v777 = vsel %vm574, %v760, 0
  %v780 = vand.u32 %v730, %v596
  %782 = vmatpush.bf16.msra.mxu0 0
  %783 = vmatpush.bf16.msra.mxu0 0
  %784 = vmatpush.bf16.msra.mxu0 0
  %785 = vmatpush.bf16.msra.mxu0 0
  %786 = vmatpush.bf16.msra.mxu0 0
  %787 = vmatpush.bf16.msra.mxu0 0
  %788 = vmatpush.bf16.msra.mxu0 0
  %789 = vmatpush.bf16.msra.mxu0 %v780
  %790 = vmatmul.bf16.gmra.mxu0 %v762
  %v791 = vpop.f32.mrf.mxu0
  %v792 = vadd.f32 0.0, %v791
  %v793 = vpop.f32.mrf.mxu0
  %v794 = vadd.f32 0.0, %v793
  %795 = vmatmul.bf16.gmra.mxu0 %v765
  %v796 = vpop.f32.mrf.mxu0
  %v797 = vadd.f32 0.0, %v796
  %v798 = vpop.f32.mrf.mxu0
  %v799 = vadd.f32 0.0, %v798
  %800 = vmatmul.bf16.gmra.mxu0 %v768
  %v801 = vpop.f32.mrf.mxu0
  %v802 = vadd.f32 0.0, %v801
  %v803 = vpop.f32.mrf.mxu0
  %v804 = vadd.f32 0.0, %v803
  %805 = vmatmul.bf16.gmra.mxu0 %v771
  %v806 = vpop.f32.mrf.mxu0
  %v807 = vadd.f32 0.0, %v806
  %v808 = vpop.f32.mrf.mxu0
  %v809 = vadd.f32 0.0, %v808
  %810 = vmatmul.bf16.gmra.mxu0 %v774
  %v811 = vpop.f32.mrf.mxu0
  %v812 = vadd.f32 0.0, %v811
  %v813 = vpop.f32.mrf.mxu0
  %v814 = vadd.f32 0.0, %v813
  %815 = vmatmul.bf16.gmra.mxu0 %v777
  %v816 = vpop.f32.mrf.mxu0
  %v817 = vadd.f32 0.0, %v816
  %v818 = vpop.f32.mrf.mxu0
  %v819 = vadd.f32 0.0, %v818
  %820 = vdwg.mxu0
  %v821 = vadd.f32 %v700, %v792
  %v822 = vadd.f32 %v702, %v794
  %v823 = vadd.f32 %v705, %v797
  %v824 = vadd.f32 %v707, %v799
  %v825 = vadd.f32 %v710, %v802
  %v826 = vadd.f32 %v712, %v804
  %v827 = vadd.f32 %v715, %v807
  %v828 = vadd.f32 %v717, %v809
  %v829 = vadd.f32 %v720, %v812
  %v830 = vadd.f32 %v722, %v814
  %v831 = vadd.f32 %v725, %v817
  %v832 = vadd.f32 %v727, %v819
  %s833 = scalar_lea.vmem %s4, 6
  %v834 = vld [vmem:[%s833] sm:$0x3]
  %v847 = vunpack.c.l.b16 %v529
  %v848 = vunpack.c.l.b16 %v530
  %v849 = vunpack.c.l.b16 %v531
  %v850 = vunpack.c.l.b16 %v532
  %v851 = vunpack.c.l.b16 %v533
  %v852 = vunpack.c.l.b16 %v534
  %v853 = vunpack.c.l.b16 %v535
  %v854 = vunpack.c.l.b16 %v536
  %v855 = vunpack.c.l.b16 %v537
  %v856 = vunpack.c.l.b16 %v538
  %v857 = vunpack.c.l.b16 %v539
  %v858 = vunpack.c.l.b16 %v540
  %v859 = vpack.c.b16 %v848, %v847
  %v860 = vpack.c.b16 %v850, %v849
  %v861 = vpack.c.b16 %v852, %v851
  %v862 = vpack.c.b16 %v854, %v853
  %v863 = vpack.c.b16 %v856, %v855
  %v864 = vpack.c.b16 %v858, %v857
  %v866 = vsel %vm574, %v859, 0
  %v869 = vsel %vm574, %v860, 0
  %v872 = vsel %vm574, %v861, 0
  %v875 = vsel %vm574, %v862, 0
  %v878 = vsel %vm574, %v863, 0
  %v881 = vsel %vm574, %v864, 0
  %v884 = vand.u32 %v834, %v596
  %886 = vmatpush.bf16.msra.mxu0 0
  %887 = vmatpush.bf16.msra.mxu0 0
  %888 = vmatpush.bf16.msra.mxu0 0
  %889 = vmatpush.bf16.msra.mxu0 0
  %890 = vmatpush.bf16.msra.mxu0 0
  %891 = vmatpush.bf16.msra.mxu0 0
  %892 = vmatpush.bf16.msra.mxu0 0
  %893 = vmatpush.bf16.msra.mxu0 %v884
  %894 = vmatmul.bf16.gmra.mxu0 %v866
  %v895 = vpop.f32.mrf.mxu0
  %v896 = vadd.f32 0.0, %v895
  %v897 = vpop.f32.mrf.mxu0
  %v898 = vadd.f32 0.0, %v897
  %899 = vmatmul.bf16.gmra.mxu0 %v869
  %v900 = vpop.f32.mrf.mxu0
  %v901 = vadd.f32 0.0, %v900
  %v902 = vpop.f32.mrf.mxu0
  %v903 = vadd.f32 0.0, %v902
  %904 = vmatmul.bf16.gmra.mxu0 %v872
  %v905 = vpop.f32.mrf.mxu0
  %v906 = vadd.f32 0.0, %v905
  %v907 = vpop.f32.mrf.mxu0
  %v908 = vadd.f32 0.0, %v907
  %909 = vmatmul.bf16.gmra.mxu0 %v875
  %v910 = vpop.f32.mrf.mxu0
  %v911 = vadd.f32 0.0, %v910
  %v912 = vpop.f32.mrf.mxu0
  %v913 = vadd.f32 0.0, %v912
  %914 = vmatmul.bf16.gmra.mxu0 %v878
  %v915 = vpop.f32.mrf.mxu0
  %v916 = vadd.f32 0.0, %v915
  %v917 = vpop.f32.mrf.mxu0
  %v918 = vadd.f32 0.0, %v917
  %919 = vmatmul.bf16.gmra.mxu0 %v881
  %v920 = vpop.f32.mrf.mxu0
  %v921 = vadd.f32 0.0, %v920
  %v922 = vpop.f32.mrf.mxu0
  %v923 = vadd.f32 0.0, %v922
  %924 = vdwg.mxu0
  %v925 = vadd.f32 %v821, %v896
  %v926 = vadd.f32 %v822, %v898
  %v927 = vadd.f32 %v823, %v901
  %v928 = vadd.f32 %v824, %v903
  %v929 = vadd.f32 %v825, %v906
  %v930 = vadd.f32 %v826, %v908
  %v931 = vadd.f32 %v827, %v911
  %v932 = vadd.f32 %v828, %v913
  %v933 = vadd.f32 %v829, %v916
  %v934 = vadd.f32 %v830, %v918
  %v935 = vadd.f32 %v831, %v921
  %v936 = vadd.f32 %v832, %v923
  %v938 = vperm.slane %v98, 0
  %v940 = vadd.f32 %v925, %v938
  %v941 = vadd.f32 %v926, %v938
  %v942 = vadd.f32 %v927, %v938
  %v943 = vadd.f32 %v928, %v938
  %v944 = vadd.f32 %v929, %v938
  %v945 = vadd.f32 %v930, %v938
  %v946 = vadd.f32 %v931, %v938
  %v947 = vadd.f32 %v932, %v938
  %v948 = vadd.f32 %v933, %v938
  %v949 = vadd.f32 %v934, %v938
  %v950 = vadd.f32 %v935, %v938
  %v951 = vadd.f32 %v936, %v938
  %v952 = vmax.f32 %v940, 0.0
  %v953 = vmax.f32 %v941, 0.0
  %v954 = vmax.f32 %v942, 0.0
  %v955 = vmax.f32 %v943, 0.0
  %v956 = vmax.f32 %v944, 0.0
  %v957 = vmax.f32 %v945, 0.0
  %v958 = vmax.f32 %v946, 0.0
  %v959 = vmax.f32 %v947, 0.0
  %v960 = vmax.f32 %v948, 0.0
  %v961 = vmax.f32 %v949, 0.0
  %v962 = vmax.f32 %v950, 0.0
  %v963 = vmax.f32 %v951, 0.0
  %v964 = vpack.c.bf16 %v953, %v952
  %v965 = vpack.c.bf16 %v955, %v954
  %v966 = vpack.c.bf16 %v957, %v956
  %v967 = vpack.c.bf16 %v959, %v958
  %v968 = vpack.c.bf16 %v961, %v960
  %v969 = vpack.c.bf16 %v963, %v962
  %v970 = vld [vmem:[%s8] sm:$0x1]
  %v971 = vld [vmem:[%s6] sm:$0xf]
  %v972 = vld [vmem:[%s6 + $0x4] sm:$0xf]
  %v973 = vld [vmem:[%s6 + $0x8] sm:$0xf]
  %v974 = vld [vmem:[%s6 + $0xc] sm:$0xf]
  %v975 = vld [vmem:[%s6 + $0x10] sm:$0xf]
  %v976 = vld [vmem:[%s6 + $0x14] sm:$0xf]
  %v977 = vld [vmem:[%s6 + $0x18] sm:$0xf]
  %v978 = vld [vmem:[%s6 + $0x1c] sm:$0xf]
  %v979 = vld [vmem:[%s6 + $0x20] sm:$0xf]
  %v980 = vld [vmem:[%s6 + $0x24] sm:$0xf]
  %v981 = vld [vmem:[%s6 + $0x28] sm:$0xf]
  %v982 = vld [vmem:[%s6 + $0x2c] sm:$0xf]
  %v983 = vld [vmem:[%s6 + $0x30] sm:$0xf]
  %v984 = vld [vmem:[%s6 + $0x34] sm:$0xf]
  %v985 = vld [vmem:[%s6 + $0x38] sm:$0xf]
  %v986 = vld [vmem:[%s6 + $0x3c] sm:$0xf]
  %v987 = vld [vmem:[%s6 + $0x40] sm:$0xf]
  %v988 = vld [vmem:[%s6 + $0x44] sm:$0xf]
  %v989 = vld [vmem:[%s6 + $0x48] sm:$0xf]
  %v990 = vld [vmem:[%s6 + $0x4c] sm:$0xf]
  %v991 = vld [vmem:[%s6 + $0x50] sm:$0xf]
  %v992 = vld [vmem:[%s6 + $0x54] sm:$0xf]
  %v993 = vld [vmem:[%s6 + $0x58] sm:$0xf]
  %v994 = vld [vmem:[%s6 + $0x5c] sm:$0xf]
  %v995 = vld [vmem:[%s6 + $0x60] sm:$0xf]
  %v996 = vld [vmem:[%s6 + $0x64] sm:$0xf]
  %v997 = vld [vmem:[%s6 + $0x68] sm:$0xf]
  %v998 = vld [vmem:[%s6 + $0x6c] sm:$0xf]
  %v999 = vld [vmem:[%s6 + $0x70] sm:$0xf]
  %v1000 = vld [vmem:[%s6 + $0x74] sm:$0xf]
  %v1001 = vld [vmem:[%s6 + $0x78] sm:$0xf]
  %v1002 = vld [vmem:[%s6 + $0x7c] sm:$0xf]
  %v1003 = vld [vmem:[%s6 + $0x80] sm:$0xf]
  %v1004 = vld [vmem:[%s6 + $0x84] sm:$0xf]
  %v1005 = vld [vmem:[%s6 + $0x88] sm:$0xf]
  %v1006 = vld [vmem:[%s6 + $0x8c] sm:$0xf]
  %v1007 = vld [vmem:[%s6 + $0x90] sm:$0xf]
  %v1008 = vld [vmem:[%s6 + $0x94] sm:$0xf]
  %v1009 = vld [vmem:[%s6 + $0x98] sm:$0xf]
  %v1010 = vld [vmem:[%s6 + $0x9c] sm:$0xf]
  %v1011 = vld [vmem:[%s6 + $0xa0] sm:$0xf]
  %v1012 = vld [vmem:[%s6 + $0xa4] sm:$0xf]
  %v1013 = vld [vmem:[%s6 + $0xa8] sm:$0xf]
  %v1014 = vld [vmem:[%s6 + $0xac] sm:$0xf]
  %v1015 = vld [vmem:[%s6 + $0xb0] sm:$0xf]
  %v1016 = vld [vmem:[%s6 + $0xb4] sm:$0xf]
  %v1017 = vld [vmem:[%s6 + $0xb8] sm:$0xf]
  %v1018 = vld [vmem:[%s6 + $0xbc] sm:$0xf]
  %v1067 = vunpack.c.l.b16 %v971
  %v1068 = vunpack.c.l.b16 %v972
  %v1069 = vunpack.c.l.b16 %v973
  %v1070 = vunpack.c.l.b16 %v974
  %v1071 = vunpack.c.l.b16 %v975
  %v1072 = vunpack.c.l.b16 %v976
  %v1073 = vunpack.c.l.b16 %v977
  %v1074 = vunpack.c.l.b16 %v978
  %v1075 = vunpack.c.l.b16 %v979
  %v1076 = vunpack.c.l.b16 %v980
  %v1077 = vunpack.c.l.b16 %v981
  %v1078 = vunpack.c.l.b16 %v982
  %v1079 = vunpack.c.l.b16 %v983
  %v1080 = vunpack.c.l.b16 %v984
  %v1081 = vunpack.c.l.b16 %v985
  %v1082 = vunpack.c.l.b16 %v986
  %v1083 = vunpack.c.l.b16 %v987
  %v1084 = vunpack.c.l.b16 %v988
  %v1085 = vunpack.c.l.b16 %v989
  %v1086 = vunpack.c.l.b16 %v990
  %v1087 = vunpack.c.l.b16 %v991
  %v1088 = vunpack.c.l.b16 %v992
  %v1089 = vunpack.c.l.b16 %v993
  %v1090 = vunpack.c.l.b16 %v994
  %v1091 = vunpack.c.l.b16 %v995
  %v1092 = vunpack.c.l.b16 %v996
  %v1093 = vunpack.c.l.b16 %v997
  %v1094 = vunpack.c.l.b16 %v998
  %v1095 = vunpack.c.l.b16 %v999
  %v1096 = vunpack.c.l.b16 %v1000
  %v1097 = vunpack.c.l.b16 %v1001
  %v1098 = vunpack.c.l.b16 %v1002
  %v1099 = vunpack.c.l.b16 %v1003
  %v1100 = vunpack.c.l.b16 %v1004
  %v1101 = vunpack.c.l.b16 %v1005
  %v1102 = vunpack.c.l.b16 %v1006
  %v1103 = vunpack.c.l.b16 %v1007
  %v1104 = vunpack.c.l.b16 %v1008
  %v1105 = vunpack.c.l.b16 %v1009
  %v1106 = vunpack.c.l.b16 %v1010
  %v1107 = vunpack.c.l.b16 %v1011
  %v1108 = vunpack.c.l.b16 %v1012
  %v1109 = vunpack.c.l.b16 %v1013
  %v1110 = vunpack.c.l.b16 %v1014
  %v1111 = vunpack.c.l.b16 %v1015
  %v1112 = vunpack.c.l.b16 %v1016
  %v1113 = vunpack.c.l.b16 %v1017
  %v1114 = vunpack.c.l.b16 %v1018
  %v1115 = vpack.c.b16 %v1068, %v1067
  %v1116 = vpack.c.b16 %v1070, %v1069
  %v1117 = vpack.c.b16 %v1072, %v1071
  %v1118 = vpack.c.b16 %v1074, %v1073
  %v1119 = vpack.c.b16 %v1076, %v1075
  %v1120 = vpack.c.b16 %v1078, %v1077
  %v1121 = vpack.c.b16 %v1080, %v1079
  %v1122 = vpack.c.b16 %v1082, %v1081
  %v1123 = vpack.c.b16 %v1084, %v1083
  %v1124 = vpack.c.b16 %v1086, %v1085
  %v1125 = vpack.c.b16 %v1088, %v1087
  %v1126 = vpack.c.b16 %v1090, %v1089
  %v1127 = vpack.c.b16 %v1092, %v1091
  %v1128 = vpack.c.b16 %v1094, %v1093
  %v1129 = vpack.c.b16 %v1096, %v1095
  %v1130 = vpack.c.b16 %v1098, %v1097
  %v1131 = vpack.c.b16 %v1100, %v1099
  %v1132 = vpack.c.b16 %v1102, %v1101
  %v1133 = vpack.c.b16 %v1104, %v1103
  %v1134 = vpack.c.b16 %v1106, %v1105
  %v1135 = vpack.c.b16 %v1108, %v1107
  %v1136 = vpack.c.b16 %v1110, %v1109
  %v1137 = vpack.c.b16 %v1112, %v1111
  %v1138 = vpack.c.b16 %v1114, %v1113
  %vm1139 = vcmask 785408
  %v1141 = vsel %vm1139, %v1115, 0
  %v1144 = vsel %vm1139, %v1116, 0
  %v1147 = vsel %vm1139, %v1117, 0
  %v1150 = vsel %vm1139, %v1118, 0
  %v1153 = vsel %vm1139, %v1119, 0
  %v1156 = vsel %vm1139, %v1120, 0
  %v1159 = vsel %vm1139, %v1121, 0
  %v1162 = vsel %vm1139, %v1122, 0
  %v1165 = vsel %vm1139, %v1123, 0
  %v1168 = vsel %vm1139, %v1124, 0
  %v1171 = vsel %vm1139, %v1125, 0
  %v1174 = vsel %vm1139, %v1126, 0
  %v1177 = vsel %vm1139, %v1127, 0
  %v1180 = vsel %vm1139, %v1128, 0
  %v1183 = vsel %vm1139, %v1129, 0
  %v1186 = vsel %vm1139, %v1130, 0
  %v1189 = vsel %vm1139, %v1131, 0
  %v1192 = vsel %vm1139, %v1132, 0
  %v1195 = vsel %vm1139, %v1133, 0
  %v1198 = vsel %vm1139, %v1134, 0
  %v1201 = vsel %vm1139, %v1135, 0
  %v1204 = vsel %vm1139, %v1136, 0
  %v1207 = vsel %vm1139, %v1137, 0
  %v1210 = vsel %vm1139, %v1138, 0
  %1212 = vmatpush.bf16.msra.mxu0 0
  %1213 = vmatpush.bf16.msra.mxu0 0
  %1214 = vmatpush.bf16.msra.mxu0 %v969
  %1215 = vmatpush.bf16.msra.mxu0 %v968
  %1216 = vmatpush.bf16.msra.mxu0 %v967
  %1217 = vmatpush.bf16.msra.mxu0 %v966
  %1218 = vmatpush.bf16.msra.mxu0 %v965
  %1219 = vmatpush.bf16.msra.mxu0 %v964
  %1220 = vmatmul.bf16.gmra.mxu0 %v1141
  %v1221 = vpop.f32.mrf.mxu0
  %v1222 = vadd.f32 0.0, %v1221
  %v1223 = vpop.f32.mrf.mxu0
  %v1224 = vadd.f32 0.0, %v1223
  %1225 = vmatmul.bf16.gmra.mxu0 %v1144
  %v1226 = vpop.f32.mrf.mxu0
  %v1227 = vadd.f32 0.0, %v1226
  %v1228 = vpop.f32.mrf.mxu0
  %v1229 = vadd.f32 0.0, %v1228
  %1230 = vmatmul.bf16.gmra.mxu0 %v1147
  %v1231 = vpop.f32.mrf.mxu0
  %v1232 = vadd.f32 0.0, %v1231
  %v1233 = vpop.f32.mrf.mxu0
  %v1234 = vadd.f32 0.0, %v1233
  %1235 = vmatmul.bf16.gmra.mxu0 %v1150
  %v1236 = vpop.f32.mrf.mxu0
  %v1237 = vadd.f32 0.0, %v1236
  %v1238 = vpop.f32.mrf.mxu0
  %v1239 = vadd.f32 0.0, %v1238
  %1240 = vmatmul.bf16.gmra.mxu0 %v1153
  %v1241 = vpop.f32.mrf.mxu0
  %v1242 = vadd.f32 0.0, %v1241
  %v1243 = vpop.f32.mrf.mxu0
  %v1244 = vadd.f32 0.0, %v1243
  %1245 = vmatmul.bf16.gmra.mxu0 %v1156
  %v1246 = vpop.f32.mrf.mxu0
  %v1247 = vadd.f32 0.0, %v1246
  %v1248 = vpop.f32.mrf.mxu0
  %v1249 = vadd.f32 0.0, %v1248
  %1250 = vmatmul.bf16.gmra.mxu0 %v1159
  %v1251 = vpop.f32.mrf.mxu0
  %v1252 = vadd.f32 0.0, %v1251
  %v1253 = vpop.f32.mrf.mxu0
  %v1254 = vadd.f32 0.0, %v1253
  %1255 = vmatmul.bf16.gmra.mxu0 %v1162
  %v1256 = vpop.f32.mrf.mxu0
  %v1257 = vadd.f32 0.0, %v1256
  %v1258 = vpop.f32.mrf.mxu0
  %v1259 = vadd.f32 0.0, %v1258
  %1260 = vmatmul.bf16.gmra.mxu0 %v1165
  %v1261 = vpop.f32.mrf.mxu0
  %v1262 = vadd.f32 0.0, %v1261
  %v1263 = vpop.f32.mrf.mxu0
  %v1264 = vadd.f32 0.0, %v1263
  %1265 = vmatmul.bf16.gmra.mxu0 %v1168
  %v1266 = vpop.f32.mrf.mxu0
  %v1267 = vadd.f32 0.0, %v1266
  %v1268 = vpop.f32.mrf.mxu0
  %v1269 = vadd.f32 0.0, %v1268
  %1270 = vmatmul.bf16.gmra.mxu0 %v1171
  %v1271 = vpop.f32.mrf.mxu0
  %v1272 = vadd.f32 0.0, %v1271
  %v1273 = vpop.f32.mrf.mxu0
  %v1274 = vadd.f32 0.0, %v1273
  %1275 = vmatmul.bf16.gmra.mxu0 %v1174
  %v1276 = vpop.f32.mrf.mxu0
  %v1277 = vadd.f32 0.0, %v1276
  %v1278 = vpop.f32.mrf.mxu0
  %v1279 = vadd.f32 0.0, %v1278
  %1280 = vmatmul.bf16.gmra.mxu0 %v1177
  %v1281 = vpop.f32.mrf.mxu0
  %v1282 = vadd.f32 0.0, %v1281
  %v1283 = vpop.f32.mrf.mxu0
  %v1284 = vadd.f32 0.0, %v1283
  %1285 = vmatmul.bf16.gmra.mxu0 %v1180
  %v1286 = vpop.f32.mrf.mxu0
  %v1287 = vadd.f32 0.0, %v1286
  %v1288 = vpop.f32.mrf.mxu0
  %v1289 = vadd.f32 0.0, %v1288
  %1290 = vmatmul.bf16.gmra.mxu0 %v1183
  %v1291 = vpop.f32.mrf.mxu0
  %v1292 = vadd.f32 0.0, %v1291
  %v1293 = vpop.f32.mrf.mxu0
  %v1294 = vadd.f32 0.0, %v1293
  %1295 = vmatmul.bf16.gmra.mxu0 %v1186
  %v1296 = vpop.f32.mrf.mxu0
  %v1297 = vadd.f32 0.0, %v1296
  %v1298 = vpop.f32.mrf.mxu0
  %v1299 = vadd.f32 0.0, %v1298
  %1300 = vmatmul.bf16.gmra.mxu0 %v1189
  %v1301 = vpop.f32.mrf.mxu0
  %v1302 = vadd.f32 0.0, %v1301
  %v1303 = vpop.f32.mrf.mxu0
  %v1304 = vadd.f32 0.0, %v1303
  %1305 = vmatmul.bf16.gmra.mxu0 %v1192
  %v1306 = vpop.f32.mrf.mxu0
  %v1307 = vadd.f32 0.0, %v1306
  %v1308 = vpop.f32.mrf.mxu0
  %v1309 = vadd.f32 0.0, %v1308
  %1310 = vmatmul.bf16.gmra.mxu0 %v1195
  %v1311 = vpop.f32.mrf.mxu0
  %v1312 = vadd.f32 0.0, %v1311
  %v1313 = vpop.f32.mrf.mxu0
  %v1314 = vadd.f32 0.0, %v1313
  %1315 = vmatmul.bf16.gmra.mxu0 %v1198
  %v1316 = vpop.f32.mrf.mxu0
  %v1317 = vadd.f32 0.0, %v1316
  %v1318 = vpop.f32.mrf.mxu0
  %v1319 = vadd.f32 0.0, %v1318
  %1320 = vmatmul.bf16.gmra.mxu0 %v1201
  %v1321 = vpop.f32.mrf.mxu0
  %v1322 = vadd.f32 0.0, %v1321
  %v1323 = vpop.f32.mrf.mxu0
  %v1324 = vadd.f32 0.0, %v1323
  %1325 = vmatmul.bf16.gmra.mxu0 %v1204
  %v1326 = vpop.f32.mrf.mxu0
  %v1327 = vadd.f32 0.0, %v1326
  %v1328 = vpop.f32.mrf.mxu0
  %v1329 = vadd.f32 0.0, %v1328
  %1330 = vmatmul.bf16.gmra.mxu0 %v1207
  %v1331 = vpop.f32.mrf.mxu0
  %v1332 = vadd.f32 0.0, %v1331
  %v1333 = vpop.f32.mrf.mxu0
  %v1334 = vadd.f32 0.0, %v1333
  %1335 = vmatmul.bf16.gmra.mxu0 %v1210
  %v1336 = vpop.f32.mrf.mxu0
  %v1337 = vadd.f32 0.0, %v1336
  %v1338 = vpop.f32.mrf.mxu0
  %v1339 = vadd.f32 0.0, %v1338
  %1340 = vdwg.mxu0
  %v1341 = vpack.c.bf16 %v1222, %v1222
  %v1342 = vpack.c.bf16 %v1224, %v1224
  %v1343 = vpack.c.bf16 %v1227, %v1227
  %v1344 = vpack.c.bf16 %v1229, %v1229
  %v1345 = vpack.c.bf16 %v1232, %v1232
  %v1346 = vpack.c.bf16 %v1234, %v1234
  %v1347 = vpack.c.bf16 %v1237, %v1237
  %v1348 = vpack.c.bf16 %v1239, %v1239
  %v1349 = vpack.c.bf16 %v1242, %v1242
  %v1350 = vpack.c.bf16 %v1244, %v1244
  %v1351 = vpack.c.bf16 %v1247, %v1247
  %v1352 = vpack.c.bf16 %v1249, %v1249
  %v1353 = vpack.c.bf16 %v1252, %v1252
  %v1354 = vpack.c.bf16 %v1254, %v1254
  %v1355 = vpack.c.bf16 %v1257, %v1257
  %v1356 = vpack.c.bf16 %v1259, %v1259
  %v1357 = vpack.c.bf16 %v1262, %v1262
  %v1358 = vpack.c.bf16 %v1264, %v1264
  %v1359 = vpack.c.bf16 %v1267, %v1267
  %v1360 = vpack.c.bf16 %v1269, %v1269
  %v1361 = vpack.c.bf16 %v1272, %v1272
  %v1362 = vpack.c.bf16 %v1274, %v1274
  %v1363 = vpack.c.bf16 %v1277, %v1277
  %v1364 = vpack.c.bf16 %v1279, %v1279
  %v1365 = vpack.c.bf16 %v1282, %v1282
  %v1366 = vpack.c.bf16 %v1284, %v1284
  %v1367 = vpack.c.bf16 %v1287, %v1287
  %v1368 = vpack.c.bf16 %v1289, %v1289
  %v1369 = vpack.c.bf16 %v1292, %v1292
  %v1370 = vpack.c.bf16 %v1294, %v1294
  %v1371 = vpack.c.bf16 %v1297, %v1297
  %v1372 = vpack.c.bf16 %v1299, %v1299
  %v1373 = vpack.c.bf16 %v1302, %v1302
  %v1374 = vpack.c.bf16 %v1304, %v1304
  %v1375 = vpack.c.bf16 %v1307, %v1307
  %v1376 = vpack.c.bf16 %v1309, %v1309
  %v1377 = vpack.c.bf16 %v1312, %v1312
  %v1378 = vpack.c.bf16 %v1314, %v1314
  %v1379 = vpack.c.bf16 %v1317, %v1317
  %v1380 = vpack.c.bf16 %v1319, %v1319
  %v1381 = vpack.c.bf16 %v1322, %v1322
  %v1382 = vpack.c.bf16 %v1324, %v1324
  %v1383 = vpack.c.bf16 %v1327, %v1327
  %v1384 = vpack.c.bf16 %v1329, %v1329
  %v1385 = vpack.c.bf16 %v1332, %v1332
  %v1386 = vpack.c.bf16 %v1334, %v1334
  %v1387 = vpack.c.bf16 %v1337, %v1337
  %v1388 = vpack.c.bf16 %v1339, %v1339
  %v1389 = vld [vmem:[%s7] sm:$0xf]
  %s1390 = scalar_lea.vmem %s7, 4
  %v1391 = vld [vmem:[%s1390] sm:$0xf]
  %v1408 = vunpack.c.l.b16 %v1357
  %v1409 = vunpack.c.l.b16 %v1358
  %v1410 = vunpack.c.l.b16 %v1359
  %v1411 = vunpack.c.l.b16 %v1360
  %v1412 = vunpack.c.l.b16 %v1361
  %v1413 = vunpack.c.l.b16 %v1362
  %v1414 = vunpack.c.l.b16 %v1363
  %v1415 = vunpack.c.l.b16 %v1364
  %v1416 = vunpack.c.l.b16 %v1365
  %v1417 = vunpack.c.l.b16 %v1366
  %v1418 = vunpack.c.l.b16 %v1367
  %v1419 = vunpack.c.l.b16 %v1368
  %v1420 = vunpack.c.l.b16 %v1369
  %v1421 = vunpack.c.l.b16 %v1370
  %v1422 = vunpack.c.l.b16 %v1371
  %v1423 = vunpack.c.l.b16 %v1372
  %v1424 = vpack.c.b16 %v1409, %v1408
  %v1425 = vpack.c.b16 %v1411, %v1410
  %v1426 = vpack.c.b16 %v1413, %v1412
  %v1427 = vpack.c.b16 %v1415, %v1414
  %v1428 = vpack.c.b16 %v1417, %v1416
  %v1429 = vpack.c.b16 %v1419, %v1418
  %v1430 = vpack.c.b16 %v1421, %v1420
  %v1431 = vpack.c.b16 %v1423, %v1422
  %vm1432 = vcmask 64512
  %v1434 = vsel %vm1432, %v1424, 0
  %v1437 = vsel %vm1432, %v1425, 0
  %v1440 = vsel %vm1432, %v1426, 0
  %v1443 = vsel %vm1432, %v1427, 0
  %v1446 = vsel %vm1432, %v1428, 0
  %v1449 = vsel %vm1432, %v1429, 0
  %v1452 = vsel %vm1432, %v1430, 0
  %v1455 = vsel %vm1432, %v1431, 0
  %vm1457 = vcmask 1043456
  %v1459 = vsel %vm1457, %v1391, 0
  %1461 = vmatpush.bf16.msra.mxu0 0
  %1462 = vmatpush.bf16.msra.mxu0 0
  %1463 = vmatpush.bf16.msra.mxu0 0
  %1464 = vmatpush.bf16.msra.mxu0 0
  %1465 = vmatpush.bf16.msra.mxu0 0
  %1466 = vmatpush.bf16.msra.mxu0 0
  %1467 = vmatpush.bf16.msra.mxu0 0
  %1468 = vmatpush.bf16.msra.mxu0 %v1459
  %1469 = vmatmul.bf16.gmra.mxu0 %v1434
  %v1470 = vpop.f32.mrf.mxu0
  %v1471 = vadd.f32 0.0, %v1470
  %v1472 = vpop.f32.mrf.mxu0
  %v1473 = vadd.f32 0.0, %v1472
  %1474 = vmatmul.bf16.gmra.mxu0 %v1437
  %v1475 = vpop.f32.mrf.mxu0
  %v1476 = vadd.f32 0.0, %v1475
  %v1477 = vpop.f32.mrf.mxu0
  %v1478 = vadd.f32 0.0, %v1477
  %1479 = vmatmul.bf16.gmra.mxu0 %v1440
  %v1480 = vpop.f32.mrf.mxu0
  %v1481 = vadd.f32 0.0, %v1480
  %v1482 = vpop.f32.mrf.mxu0
  %v1483 = vadd.f32 0.0, %v1482
  %1484 = vmatmul.bf16.gmra.mxu0 %v1443
  %v1485 = vpop.f32.mrf.mxu0
  %v1486 = vadd.f32 0.0, %v1485
  %v1487 = vpop.f32.mrf.mxu0
  %v1488 = vadd.f32 0.0, %v1487
  %1489 = vmatmul.bf16.gmra.mxu0 %v1446
  %v1490 = vpop.f32.mrf.mxu0
  %v1491 = vadd.f32 0.0, %v1490
  %v1492 = vpop.f32.mrf.mxu0
  %v1493 = vadd.f32 0.0, %v1492
  %1494 = vmatmul.bf16.gmra.mxu0 %v1449
  %v1495 = vpop.f32.mrf.mxu0
  %v1496 = vadd.f32 0.0, %v1495
  %v1497 = vpop.f32.mrf.mxu0
  %v1498 = vadd.f32 0.0, %v1497
  %1499 = vmatmul.bf16.gmra.mxu0 %v1452
  %v1500 = vpop.f32.mrf.mxu0
  %v1501 = vadd.f32 0.0, %v1500
  %v1502 = vpop.f32.mrf.mxu0
  %v1503 = vadd.f32 0.0, %v1502
  %1504 = vmatmul.bf16.gmra.mxu0 %v1455
  %v1505 = vpop.f32.mrf.mxu0
  %v1506 = vadd.f32 0.0, %v1505
  %v1507 = vpop.f32.mrf.mxu0
  %v1508 = vadd.f32 0.0, %v1507
  %1509 = vdwg.mxu0
  %v1526 = vunpack.c.l.b16 %v1341
  %v1527 = vunpack.c.l.b16 %v1342
  %v1528 = vunpack.c.l.b16 %v1343
  %v1529 = vunpack.c.l.b16 %v1344
  %v1530 = vunpack.c.l.b16 %v1345
  %v1531 = vunpack.c.l.b16 %v1346
  %v1532 = vunpack.c.l.b16 %v1347
  %v1533 = vunpack.c.l.b16 %v1348
  %v1534 = vunpack.c.l.b16 %v1349
  %v1535 = vunpack.c.l.b16 %v1350
  %v1536 = vunpack.c.l.b16 %v1351
  %v1537 = vunpack.c.l.b16 %v1352
  %v1538 = vunpack.c.l.b16 %v1353
  %v1539 = vunpack.c.l.b16 %v1354
  %v1540 = vunpack.c.l.b16 %v1355
  %v1541 = vunpack.c.l.b16 %v1356
  %v1542 = vpack.c.b16 %v1527, %v1526
  %v1543 = vpack.c.b16 %v1529, %v1528
  %v1544 = vpack.c.b16 %v1531, %v1530
  %v1545 = vpack.c.b16 %v1533, %v1532
  %v1546 = vpack.c.b16 %v1535, %v1534
  %v1547 = vpack.c.b16 %v1537, %v1536
  %v1548 = vpack.c.b16 %v1539, %v1538
  %v1549 = vpack.c.b16 %v1541, %v1540
  %v1551 = vsel %vm1432, %v1542, 0
  %v1554 = vsel %vm1432, %v1543, 0
  %v1557 = vsel %vm1432, %v1544, 0
  %v1560 = vsel %vm1432, %v1545, 0
  %v1563 = vsel %vm1432, %v1546, 0
  %v1566 = vsel %vm1432, %v1547, 0
  %v1569 = vsel %vm1432, %v1548, 0
  %v1572 = vsel %vm1432, %v1549, 0
  %v1575 = vsel %vm1457, %v1389, 0
  %1577 = vmatpush.bf16.msra.mxu0 0
  %1578 = vmatpush.bf16.msra.mxu0 0
  %1579 = vmatpush.bf16.msra.mxu0 0
  %1580 = vmatpush.bf16.msra.mxu0 0
  %1581 = vmatpush.bf16.msra.mxu0 0
  %1582 = vmatpush.bf16.msra.mxu0 0
  %1583 = vmatpush.bf16.msra.mxu0 0
  %1584 = vmatpush.bf16.msra.mxu0 %v1575
  %1585 = vmatmul.bf16.gmra.mxu0 %v1551
  %v1586 = vpop.f32.mrf.mxu0
  %v1587 = vadd.f32 %v1471, %v1586
  %v1588 = vpop.f32.mrf.mxu0
  %v1589 = vadd.f32 %v1473, %v1588
  %1590 = vmatmul.bf16.gmra.mxu0 %v1554
  %v1591 = vpop.f32.mrf.mxu0
  %v1592 = vadd.f32 %v1476, %v1591
  %v1593 = vpop.f32.mrf.mxu0
  %v1594 = vadd.f32 %v1478, %v1593
  %1595 = vmatmul.bf16.gmra.mxu0 %v1557
  %v1596 = vpop.f32.mrf.mxu0
  %v1597 = vadd.f32 %v1481, %v1596
  %v1598 = vpop.f32.mrf.mxu0
  %v1599 = vadd.f32 %v1483, %v1598
  %1600 = vmatmul.bf16.gmra.mxu0 %v1560
  %v1601 = vpop.f32.mrf.mxu0
  %v1602 = vadd.f32 %v1486, %v1601
  %v1603 = vpop.f32.mrf.mxu0
  %v1604 = vadd.f32 %v1488, %v1603
  %1605 = vmatmul.bf16.gmra.mxu0 %v1563
  %v1606 = vpop.f32.mrf.mxu0
  %v1607 = vadd.f32 %v1491, %v1606
  %v1608 = vpop.f32.mrf.mxu0
  %v1609 = vadd.f32 %v1493, %v1608
  %1610 = vmatmul.bf16.gmra.mxu0 %v1566
  %v1611 = vpop.f32.mrf.mxu0
  %v1612 = vadd.f32 %v1496, %v1611
  %v1613 = vpop.f32.mrf.mxu0
  %v1614 = vadd.f32 %v1498, %v1613
  %1615 = vmatmul.bf16.gmra.mxu0 %v1569
  %v1616 = vpop.f32.mrf.mxu0
  %v1617 = vadd.f32 %v1501, %v1616
  %v1618 = vpop.f32.mrf.mxu0
  %v1619 = vadd.f32 %v1503, %v1618
  %1620 = vmatmul.bf16.gmra.mxu0 %v1572
  %v1621 = vpop.f32.mrf.mxu0
  %v1622 = vadd.f32 %v1506, %v1621
  %v1623 = vpop.f32.mrf.mxu0
  %v1624 = vadd.f32 %v1508, %v1623
  %1625 = vdwg.mxu0
  %s1626 = scalar_lea.vmem %s7, 8
  %v1627 = vld [vmem:[%s1626] sm:$0xf]
  %v1644 = vunpack.c.l.b16 %v1373
  %v1645 = vunpack.c.l.b16 %v1374
  %v1646 = vunpack.c.l.b16 %v1375
  %v1647 = vunpack.c.l.b16 %v1376
  %v1648 = vunpack.c.l.b16 %v1377
  %v1649 = vunpack.c.l.b16 %v1378
  %v1650 = vunpack.c.l.b16 %v1379
  %v1651 = vunpack.c.l.b16 %v1380
  %v1652 = vunpack.c.l.b16 %v1381
  %v1653 = vunpack.c.l.b16 %v1382
  %v1654 = vunpack.c.l.b16 %v1383
  %v1655 = vunpack.c.l.b16 %v1384
  %v1656 = vunpack.c.l.b16 %v1385
  %v1657 = vunpack.c.l.b16 %v1386
  %v1658 = vunpack.c.l.b16 %v1387
  %v1659 = vunpack.c.l.b16 %v1388
  %v1660 = vpack.c.b16 %v1645, %v1644
  %v1661 = vpack.c.b16 %v1647, %v1646
  %v1662 = vpack.c.b16 %v1649, %v1648
  %v1663 = vpack.c.b16 %v1651, %v1650
  %v1664 = vpack.c.b16 %v1653, %v1652
  %v1665 = vpack.c.b16 %v1655, %v1654
  %v1666 = vpack.c.b16 %v1657, %v1656
  %v1667 = vpack.c.b16 %v1659, %v1658
  %v1669 = vsel %vm1432, %v1660, 0
  %v1672 = vsel %vm1432, %v1661, 0
  %v1675 = vsel %vm1432, %v1662, 0
  %v1678 = vsel %vm1432, %v1663, 0
  %v1681 = vsel %vm1432, %v1664, 0
  %v1684 = vsel %vm1432, %v1665, 0
  %v1687 = vsel %vm1432, %v1666, 0
  %v1690 = vsel %vm1432, %v1667, 0
  %v1693 = vsel %vm1457, %v1627, 0
  %1695 = vmatpush.bf16.msra.mxu0 0
  %1696 = vmatpush.bf16.msra.mxu0 0
  %1697 = vmatpush.bf16.msra.mxu0 0
  %1698 = vmatpush.bf16.msra.mxu0 0
  %1699 = vmatpush.bf16.msra.mxu0 0
  %1700 = vmatpush.bf16.msra.mxu0 0
  %1701 = vmatpush.bf16.msra.mxu0 0
  %1702 = vmatpush.bf16.msra.mxu0 %v1693
  %1703 = vmatmul.bf16.gmra.mxu0 %v1669
  %v1704 = vpop.f32.mrf.mxu0
  %v1705 = vadd.f32 0.0, %v1704
  %v1706 = vpop.f32.mrf.mxu0
  %v1707 = vadd.f32 0.0, %v1706
  %1708 = vmatmul.bf16.gmra.mxu0 %v1672
  %v1709 = vpop.f32.mrf.mxu0
  %v1710 = vadd.f32 0.0, %v1709
  %v1711 = vpop.f32.mrf.mxu0
  %v1712 = vadd.f32 0.0, %v1711
  %1713 = vmatmul.bf16.gmra.mxu0 %v1675
  %v1714 = vpop.f32.mrf.mxu0
  %v1715 = vadd.f32 0.0, %v1714
  %v1716 = vpop.f32.mrf.mxu0
  %v1717 = vadd.f32 0.0, %v1716
  %1718 = vmatmul.bf16.gmra.mxu0 %v1678
  %v1719 = vpop.f32.mrf.mxu0
  %v1720 = vadd.f32 0.0, %v1719
  %v1721 = vpop.f32.mrf.mxu0
  %v1722 = vadd.f32 0.0, %v1721
  %1723 = vmatmul.bf16.gmra.mxu0 %v1681
  %v1724 = vpop.f32.mrf.mxu0
  %v1725 = vadd.f32 0.0, %v1724
  %v1726 = vpop.f32.mrf.mxu0
  %v1727 = vadd.f32 0.0, %v1726
  %1728 = vmatmul.bf16.gmra.mxu0 %v1684
  %v1729 = vpop.f32.mrf.mxu0
  %v1730 = vadd.f32 0.0, %v1729
  %v1731 = vpop.f32.mrf.mxu0
  %v1732 = vadd.f32 0.0, %v1731
  %1733 = vmatmul.bf16.gmra.mxu0 %v1687
  %v1734 = vpop.f32.mrf.mxu0
  %v1735 = vadd.f32 0.0, %v1734
  %v1736 = vpop.f32.mrf.mxu0
  %v1737 = vadd.f32 0.0, %v1736
  %1738 = vmatmul.bf16.gmra.mxu0 %v1690
  %v1739 = vpop.f32.mrf.mxu0
  %v1740 = vadd.f32 0.0, %v1739
  %v1741 = vpop.f32.mrf.mxu0
  %v1742 = vadd.f32 0.0, %v1741
  %1743 = vdwg.mxu0
  %v1744 = vadd.f32 %v1587, %v1705
  %v1745 = vadd.f32 %v1589, %v1707
  %v1746 = vadd.f32 %v1592, %v1710
  %v1747 = vadd.f32 %v1594, %v1712
  %v1748 = vadd.f32 %v1597, %v1715
  %v1749 = vadd.f32 %v1599, %v1717
  %v1750 = vadd.f32 %v1602, %v1720
  %v1751 = vadd.f32 %v1604, %v1722
  %v1752 = vadd.f32 %v1607, %v1725
  %v1753 = vadd.f32 %v1609, %v1727
  %v1754 = vadd.f32 %v1612, %v1730
  %v1755 = vadd.f32 %v1614, %v1732
  %v1756 = vadd.f32 %v1617, %v1735
  %v1757 = vadd.f32 %v1619, %v1737
  %v1758 = vadd.f32 %v1622, %v1740
  %v1759 = vadd.f32 %v1624, %v1742
  %v1761 = vperm.slane %v970, 0
  %v1763 = vadd.f32 %v1744, %v1761
  %v1764 = vadd.f32 %v1745, %v1761
  %v1765 = vadd.f32 %v1746, %v1761
  %v1766 = vadd.f32 %v1747, %v1761
  %v1767 = vadd.f32 %v1748, %v1761
  %v1768 = vadd.f32 %v1749, %v1761
  %v1769 = vadd.f32 %v1750, %v1761
  %v1770 = vadd.f32 %v1751, %v1761
  %v1771 = vadd.f32 %v1752, %v1761
  %v1772 = vadd.f32 %v1753, %v1761
  %v1773 = vadd.f32 %v1754, %v1761
  %v1774 = vadd.f32 %v1755, %v1761
  %v1775 = vadd.f32 %v1756, %v1761
  %v1776 = vadd.f32 %v1757, %v1761
  %v1777 = vadd.f32 %v1758, %v1761
  %v1778 = vadd.f32 %v1759, %v1761
  %v1779 = vmax.f32 %v1763, 0.0
  %v1780 = vmax.f32 %v1764, 0.0
  %v1781 = vmax.f32 %v1765, 0.0
  %v1782 = vmax.f32 %v1766, 0.0
  %v1783 = vmax.f32 %v1767, 0.0
  %v1784 = vmax.f32 %v1768, 0.0
  %v1785 = vmax.f32 %v1769, 0.0
  %v1786 = vmax.f32 %v1770, 0.0
  %v1787 = vmax.f32 %v1771, 0.0
  %v1788 = vmax.f32 %v1772, 0.0
  %v1789 = vmax.f32 %v1773, 0.0
  %v1790 = vmax.f32 %v1774, 0.0
  %v1791 = vmax.f32 %v1775, 0.0
  %v1792 = vmax.f32 %v1776, 0.0
  %v1793 = vmax.f32 %v1777, 0.0
  %v1794 = vmax.f32 %v1778, 0.0
  %v1795 = vpack.c.bf16 %v1780, %v1779
  %v1796 = vpack.c.bf16 %v1782, %v1781
  %v1797 = vpack.c.bf16 %v1784, %v1783
  %v1798 = vpack.c.bf16 %v1786, %v1785
  %v1799 = vpack.c.bf16 %v1788, %v1787
  %v1800 = vpack.c.bf16 %v1790, %v1789
  %v1801 = vpack.c.bf16 %v1792, %v1791
  %v1802 = vpack.c.bf16 %v1794, %v1793
  %v1803 = vld [vmem:[%s11] sm:$0x1]
  %v1804 = vld [vmem:[%s9] sm:$0xf]
  %v1805 = vld [vmem:[%s9 + $0x4] sm:$0xf]
  %v1806 = vld [vmem:[%s9 + $0x8] sm:$0xf]
  %v1807 = vld [vmem:[%s9 + $0xc] sm:$0xf]
  %v1808 = vld [vmem:[%s9 + $0x10] sm:$0xf]
  %v1809 = vld [vmem:[%s9 + $0x14] sm:$0xf]
  %v1810 = vld [vmem:[%s9 + $0x18] sm:$0xf]
  %v1811 = vld [vmem:[%s9 + $0x1c] sm:$0xf]
  %v1812 = vld [vmem:[%s9 + $0x20] sm:$0xf]
  %v1813 = vld [vmem:[%s9 + $0x24] sm:$0xf]
  %v1814 = vld [vmem:[%s9 + $0x28] sm:$0xf]
  %v1815 = vld [vmem:[%s9 + $0x2c] sm:$0xf]
  %v1816 = vld [vmem:[%s9 + $0x30] sm:$0xf]
  %v1817 = vld [vmem:[%s9 + $0x34] sm:$0xf]
  %v1818 = vld [vmem:[%s9 + $0x38] sm:$0xf]
  %v1819 = vld [vmem:[%s9 + $0x3c] sm:$0xf]
  %v1820 = vld [vmem:[%s9 + $0x40] sm:$0xf]
  %v1821 = vld [vmem:[%s9 + $0x44] sm:$0xf]
  %v1822 = vld [vmem:[%s9 + $0x48] sm:$0xf]
  %v1823 = vld [vmem:[%s9 + $0x4c] sm:$0xf]
  %v1824 = vld [vmem:[%s9 + $0x50] sm:$0xf]
  %v1825 = vld [vmem:[%s9 + $0x54] sm:$0xf]
  %v1826 = vld [vmem:[%s9 + $0x58] sm:$0xf]
  %v1827 = vld [vmem:[%s9 + $0x5c] sm:$0xf]
  %v1828 = vld [vmem:[%s9 + $0x60] sm:$0xf]
  %v1829 = vld [vmem:[%s9 + $0x64] sm:$0xf]
  %v1830 = vld [vmem:[%s9 + $0x68] sm:$0xf]
  %v1831 = vld [vmem:[%s9 + $0x6c] sm:$0xf]
  %v1832 = vld [vmem:[%s9 + $0x70] sm:$0xf]
  %v1833 = vld [vmem:[%s9 + $0x74] sm:$0xf]
  %v1834 = vld [vmem:[%s9 + $0x78] sm:$0xf]
  %v1835 = vld [vmem:[%s9 + $0x7c] sm:$0xf]
  %v1836 = vld [vmem:[%s9 + $0x80] sm:$0xf]
  %v1837 = vld [vmem:[%s9 + $0x84] sm:$0xf]
  %v1838 = vld [vmem:[%s9 + $0x88] sm:$0xf]
  %v1839 = vld [vmem:[%s9 + $0x8c] sm:$0xf]
  %v1840 = vld [vmem:[%s9 + $0x90] sm:$0xf]
  %v1841 = vld [vmem:[%s9 + $0x94] sm:$0xf]
  %v1842 = vld [vmem:[%s9 + $0x98] sm:$0xf]
  %v1843 = vld [vmem:[%s9 + $0x9c] sm:$0xf]
  %v1844 = vld [vmem:[%s9 + $0xa0] sm:$0xf]
  %v1845 = vld [vmem:[%s9 + $0xa4] sm:$0xf]
  %v1846 = vld [vmem:[%s9 + $0xa8] sm:$0xf]
  %v1847 = vld [vmem:[%s9 + $0xac] sm:$0xf]
  %v1848 = vld [vmem:[%s9 + $0xb0] sm:$0xf]
  %v1849 = vld [vmem:[%s9 + $0xb4] sm:$0xf]
  %v1850 = vld [vmem:[%s9 + $0xb8] sm:$0xf]
  %v1851 = vld [vmem:[%s9 + $0xbc] sm:$0xf]
  %v1900 = vunpack.c.l.b16 %v1804
  %v1901 = vunpack.c.l.b16 %v1805
  %v1902 = vunpack.c.l.b16 %v1806
  %v1903 = vunpack.c.l.b16 %v1807
  %v1904 = vunpack.c.l.b16 %v1808
  %v1905 = vunpack.c.l.b16 %v1809
  %v1906 = vunpack.c.l.b16 %v1810
  %v1907 = vunpack.c.l.b16 %v1811
  %v1908 = vunpack.c.l.b16 %v1812
  %v1909 = vunpack.c.l.b16 %v1813
  %v1910 = vunpack.c.l.b16 %v1814
  %v1911 = vunpack.c.l.b16 %v1815
  %v1912 = vunpack.c.l.b16 %v1816
  %v1913 = vunpack.c.l.b16 %v1817
  %v1914 = vunpack.c.l.b16 %v1818
  %v1915 = vunpack.c.l.b16 %v1819
  %v1916 = vunpack.c.l.b16 %v1820
  %v1917 = vunpack.c.l.b16 %v1821
  %v1918 = vunpack.c.l.b16 %v1822
  %v1919 = vunpack.c.l.b16 %v1823
  %v1920 = vunpack.c.l.b16 %v1824
  %v1921 = vunpack.c.l.b16 %v1825
  %v1922 = vunpack.c.l.b16 %v1826
  %v1923 = vunpack.c.l.b16 %v1827
  %v1924 = vunpack.c.l.b16 %v1828
  %v1925 = vunpack.c.l.b16 %v1829
  %v1926 = vunpack.c.l.b16 %v1830
  %v1927 = vunpack.c.l.b16 %v1831
  %v1928 = vunpack.c.l.b16 %v1832
  %v1929 = vunpack.c.l.b16 %v1833
  %v1930 = vunpack.c.l.b16 %v1834
  %v1931 = vunpack.c.l.b16 %v1835
  %v1932 = vunpack.c.l.b16 %v1836
  %v1933 = vunpack.c.l.b16 %v1837
  %v1934 = vunpack.c.l.b16 %v1838
  %v1935 = vunpack.c.l.b16 %v1839
  %v1936 = vunpack.c.l.b16 %v1840
  %v1937 = vunpack.c.l.b16 %v1841
  %v1938 = vunpack.c.l.b16 %v1842
  %v1939 = vunpack.c.l.b16 %v1843
  %v1940 = vunpack.c.l.b16 %v1844
  %v1941 = vunpack.c.l.b16 %v1845
  %v1942 = vunpack.c.l.b16 %v1846
  %v1943 = vunpack.c.l.b16 %v1847
  %v1944 = vunpack.c.l.b16 %v1848
  %v1945 = vunpack.c.l.b16 %v1849
  %v1946 = vunpack.c.l.b16 %v1850
  %v1947 = vunpack.c.l.b16 %v1851
  %v1948 = vpack.c.b16 %v1901, %v1900
  %v1949 = vpack.c.b16 %v1903, %v1902
  %v1950 = vpack.c.b16 %v1905, %v1904
  %v1951 = vpack.c.b16 %v1907, %v1906
  %v1952 = vpack.c.b16 %v1909, %v1908
  %v1953 = vpack.c.b16 %v1911, %v1910
  %v1954 = vpack.c.b16 %v1913, %v1912
  %v1955 = vpack.c.b16 %v1915, %v1914
  %v1956 = vpack.c.b16 %v1917, %v1916
  %v1957 = vpack.c.b16 %v1919, %v1918
  %v1958 = vpack.c.b16 %v1921, %v1920
  %v1959 = vpack.c.b16 %v1923, %v1922
  %v1960 = vpack.c.b16 %v1925, %v1924
  %v1961 = vpack.c.b16 %v1927, %v1926
  %v1962 = vpack.c.b16 %v1929, %v1928
  %v1963 = vpack.c.b16 %v1931, %v1930
  %v1964 = vpack.c.b16 %v1933, %v1932
  %v1965 = vpack.c.b16 %v1935, %v1934
  %v1966 = vpack.c.b16 %v1937, %v1936
  %v1967 = vpack.c.b16 %v1939, %v1938
  %v1968 = vpack.c.b16 %v1941, %v1940
  %v1969 = vpack.c.b16 %v1943, %v1942
  %v1970 = vpack.c.b16 %v1945, %v1944
  %v1971 = vpack.c.b16 %v1947, %v1946
  %1996 = vmatpush.bf16.msra.mxu0 %v1802
  %1997 = vmatpush.bf16.msra.mxu0 %v1801
  %1998 = vmatpush.bf16.msra.mxu0 %v1800
  %1999 = vmatpush.bf16.msra.mxu0 %v1799
  %2000 = vmatpush.bf16.msra.mxu0 %v1798
  %2001 = vmatpush.bf16.msra.mxu0 %v1797
  %2002 = vmatpush.bf16.msra.mxu0 %v1796
  %2003 = vmatpush.bf16.msra.mxu0 %v1795
  %2004 = vmatmul.bf16.gmra.mxu0 %v1948
  %v2005 = vpop.f32.mrf.mxu0
  %v2006 = vadd.f32 0.0, %v2005
  %v2007 = vpop.f32.mrf.mxu0
  %v2008 = vadd.f32 0.0, %v2007
  %2009 = vmatmul.bf16.gmra.mxu0 %v1949
  %v2010 = vpop.f32.mrf.mxu0
  %v2011 = vadd.f32 0.0, %v2010
  %v2012 = vpop.f32.mrf.mxu0
  %v2013 = vadd.f32 0.0, %v2012
  %2014 = vmatmul.bf16.gmra.mxu0 %v1950
  %v2015 = vpop.f32.mrf.mxu0
  %v2016 = vadd.f32 0.0, %v2015
  %v2017 = vpop.f32.mrf.mxu0
  %v2018 = vadd.f32 0.0, %v2017
  %2019 = vmatmul.bf16.gmra.mxu0 %v1951
  %v2020 = vpop.f32.mrf.mxu0
  %v2021 = vadd.f32 0.0, %v2020
  %v2022 = vpop.f32.mrf.mxu0
  %v2023 = vadd.f32 0.0, %v2022
  %2024 = vmatmul.bf16.gmra.mxu0 %v1952
  %v2025 = vpop.f32.mrf.mxu0
  %v2026 = vadd.f32 0.0, %v2025
  %v2027 = vpop.f32.mrf.mxu0
  %v2028 = vadd.f32 0.0, %v2027
  %2029 = vmatmul.bf16.gmra.mxu0 %v1953
  %v2030 = vpop.f32.mrf.mxu0
  %v2031 = vadd.f32 0.0, %v2030
  %v2032 = vpop.f32.mrf.mxu0
  %v2033 = vadd.f32 0.0, %v2032
  %2034 = vmatmul.bf16.gmra.mxu0 %v1954
  %v2035 = vpop.f32.mrf.mxu0
  %v2036 = vadd.f32 0.0, %v2035
  %v2037 = vpop.f32.mrf.mxu0
  %v2038 = vadd.f32 0.0, %v2037
  %2039 = vmatmul.bf16.gmra.mxu0 %v1955
  %v2040 = vpop.f32.mrf.mxu0
  %v2041 = vadd.f32 0.0, %v2040
  %v2042 = vpop.f32.mrf.mxu0
  %v2043 = vadd.f32 0.0, %v2042
  %2044 = vmatmul.bf16.gmra.mxu0 %v1956
  %v2045 = vpop.f32.mrf.mxu0
  %v2046 = vadd.f32 0.0, %v2045
  %v2047 = vpop.f32.mrf.mxu0
  %v2048 = vadd.f32 0.0, %v2047
  %2049 = vmatmul.bf16.gmra.mxu0 %v1957
  %v2050 = vpop.f32.mrf.mxu0
  %v2051 = vadd.f32 0.0, %v2050
  %v2052 = vpop.f32.mrf.mxu0
  %v2053 = vadd.f32 0.0, %v2052
  %2054 = vmatmul.bf16.gmra.mxu0 %v1958
  %v2055 = vpop.f32.mrf.mxu0
  %v2056 = vadd.f32 0.0, %v2055
  %v2057 = vpop.f32.mrf.mxu0
  %v2058 = vadd.f32 0.0, %v2057
  %2059 = vmatmul.bf16.gmra.mxu0 %v1959
  %v2060 = vpop.f32.mrf.mxu0
  %v2061 = vadd.f32 0.0, %v2060
  %v2062 = vpop.f32.mrf.mxu0
  %v2063 = vadd.f32 0.0, %v2062
  %2064 = vmatmul.bf16.gmra.mxu0 %v1960
  %v2065 = vpop.f32.mrf.mxu0
  %v2066 = vadd.f32 0.0, %v2065
  %v2067 = vpop.f32.mrf.mxu0
  %v2068 = vadd.f32 0.0, %v2067
  %2069 = vmatmul.bf16.gmra.mxu0 %v1961
  %v2070 = vpop.f32.mrf.mxu0
  %v2071 = vadd.f32 0.0, %v2070
  %v2072 = vpop.f32.mrf.mxu0
  %v2073 = vadd.f32 0.0, %v2072
  %2074 = vmatmul.bf16.gmra.mxu0 %v1962
  %v2075 = vpop.f32.mrf.mxu0
  %v2076 = vadd.f32 0.0, %v2075
  %v2077 = vpop.f32.mrf.mxu0
  %v2078 = vadd.f32 0.0, %v2077
  %2079 = vmatmul.bf16.gmra.mxu0 %v1963
  %v2080 = vpop.f32.mrf.mxu0
  %v2081 = vadd.f32 0.0, %v2080
  %v2082 = vpop.f32.mrf.mxu0
  %v2083 = vadd.f32 0.0, %v2082
  %2084 = vmatmul.bf16.gmra.mxu0 %v1964
  %v2085 = vpop.f32.mrf.mxu0
  %v2086 = vadd.f32 0.0, %v2085
  %v2087 = vpop.f32.mrf.mxu0
  %v2088 = vadd.f32 0.0, %v2087
  %2089 = vmatmul.bf16.gmra.mxu0 %v1965
  %v2090 = vpop.f32.mrf.mxu0
  %v2091 = vadd.f32 0.0, %v2090
  %v2092 = vpop.f32.mrf.mxu0
  %v2093 = vadd.f32 0.0, %v2092
  %2094 = vmatmul.bf16.gmra.mxu0 %v1966
  %v2095 = vpop.f32.mrf.mxu0
  %v2096 = vadd.f32 0.0, %v2095
  %v2097 = vpop.f32.mrf.mxu0
  %v2098 = vadd.f32 0.0, %v2097
  %2099 = vmatmul.bf16.gmra.mxu0 %v1967
  %v2100 = vpop.f32.mrf.mxu0
  %v2101 = vadd.f32 0.0, %v2100
  %v2102 = vpop.f32.mrf.mxu0
  %v2103 = vadd.f32 0.0, %v2102
  %2104 = vmatmul.bf16.gmra.mxu0 %v1968
  %v2105 = vpop.f32.mrf.mxu0
  %v2106 = vadd.f32 0.0, %v2105
  %v2107 = vpop.f32.mrf.mxu0
  %v2108 = vadd.f32 0.0, %v2107
  %2109 = vmatmul.bf16.gmra.mxu0 %v1969
  %v2110 = vpop.f32.mrf.mxu0
  %v2111 = vadd.f32 0.0, %v2110
  %v2112 = vpop.f32.mrf.mxu0
  %v2113 = vadd.f32 0.0, %v2112
  %2114 = vmatmul.bf16.gmra.mxu0 %v1970
  %v2115 = vpop.f32.mrf.mxu0
  %v2116 = vadd.f32 0.0, %v2115
  %v2117 = vpop.f32.mrf.mxu0
  %v2118 = vadd.f32 0.0, %v2117
  %2119 = vmatmul.bf16.gmra.mxu0 %v1971
  %v2120 = vpop.f32.mrf.mxu0
  %v2121 = vadd.f32 0.0, %v2120
  %v2122 = vpop.f32.mrf.mxu0
  %v2123 = vadd.f32 0.0, %v2122
  %2124 = vdwg.mxu0
  %v2125 = vpack.c.bf16 %v2006, %v2006
  %v2126 = vpack.c.bf16 %v2008, %v2008
  %v2127 = vpack.c.bf16 %v2011, %v2011
  %v2128 = vpack.c.bf16 %v2013, %v2013
  %v2129 = vpack.c.bf16 %v2016, %v2016
  %v2130 = vpack.c.bf16 %v2018, %v2018
  %v2131 = vpack.c.bf16 %v2021, %v2021
  %v2132 = vpack.c.bf16 %v2023, %v2023
  %v2133 = vpack.c.bf16 %v2026, %v2026
  %v2134 = vpack.c.bf16 %v2028, %v2028
  %v2135 = vpack.c.bf16 %v2031, %v2031
  %v2136 = vpack.c.bf16 %v2033, %v2033
  %v2137 = vpack.c.bf16 %v2036, %v2036
  %v2138 = vpack.c.bf16 %v2038, %v2038
  %v2139 = vpack.c.bf16 %v2041, %v2041
  %v2140 = vpack.c.bf16 %v2043, %v2043
  %v2141 = vpack.c.bf16 %v2046, %v2046
  %v2142 = vpack.c.bf16 %v2048, %v2048
  %v2143 = vpack.c.bf16 %v2051, %v2051
  %v2144 = vpack.c.bf16 %v2053, %v2053
  %v2145 = vpack.c.bf16 %v2056, %v2056
  %v2146 = vpack.c.bf16 %v2058, %v2058
  %v2147 = vpack.c.bf16 %v2061, %v2061
  %v2148 = vpack.c.bf16 %v2063, %v2063
  %v2149 = vpack.c.bf16 %v2066, %v2066
  %v2150 = vpack.c.bf16 %v2068, %v2068
  %v2151 = vpack.c.bf16 %v2071, %v2071
  %v2152 = vpack.c.bf16 %v2073, %v2073
  %v2153 = vpack.c.bf16 %v2076, %v2076
  %v2154 = vpack.c.bf16 %v2078, %v2078
  %v2155 = vpack.c.bf16 %v2081, %v2081
  %v2156 = vpack.c.bf16 %v2083, %v2083
  %v2157 = vpack.c.bf16 %v2086, %v2086
  %v2158 = vpack.c.bf16 %v2088, %v2088
  %v2159 = vpack.c.bf16 %v2091, %v2091
  %v2160 = vpack.c.bf16 %v2093, %v2093
  %v2161 = vpack.c.bf16 %v2096, %v2096
  %v2162 = vpack.c.bf16 %v2098, %v2098
  %v2163 = vpack.c.bf16 %v2101, %v2101
  %v2164 = vpack.c.bf16 %v2103, %v2103
  %v2165 = vpack.c.bf16 %v2106, %v2106
  %v2166 = vpack.c.bf16 %v2108, %v2108
  %v2167 = vpack.c.bf16 %v2111, %v2111
  %v2168 = vpack.c.bf16 %v2113, %v2113
  %v2169 = vpack.c.bf16 %v2116, %v2116
  %v2170 = vpack.c.bf16 %v2118, %v2118
  %v2171 = vpack.c.bf16 %v2121, %v2121
  %v2172 = vpack.c.bf16 %v2123, %v2123
  %v2173 = vld [vmem:[%s10] sm:$0xf]
  %s2174 = scalar_lea.vmem %s10, 4
  %v2175 = vld [vmem:[%s2174] sm:$0xf]
  %v2188 = vunpack.c.l.b16 %v2137
  %v2189 = vunpack.c.l.b16 %v2138
  %v2190 = vunpack.c.l.b16 %v2139
  %v2191 = vunpack.c.l.b16 %v2140
  %v2192 = vunpack.c.l.b16 %v2141
  %v2193 = vunpack.c.l.b16 %v2142
  %v2194 = vunpack.c.l.b16 %v2143
  %v2195 = vunpack.c.l.b16 %v2144
  %v2196 = vunpack.c.l.b16 %v2145
  %v2197 = vunpack.c.l.b16 %v2146
  %v2198 = vunpack.c.l.b16 %v2147
  %v2199 = vunpack.c.l.b16 %v2148
  %v2200 = vpack.c.b16 %v2189, %v2188
  %v2201 = vpack.c.b16 %v2191, %v2190
  %v2202 = vpack.c.b16 %v2193, %v2192
  %v2203 = vpack.c.b16 %v2195, %v2194
  %v2204 = vpack.c.b16 %v2197, %v2196
  %v2205 = vpack.c.b16 %v2199, %v2198
  %v2207 = vsel %vm1432, %v2200, 0
  %v2210 = vsel %vm1432, %v2201, 0
  %v2213 = vsel %vm1432, %v2202, 0
  %v2216 = vsel %vm1432, %v2203, 0
  %v2219 = vsel %vm1432, %v2204, 0
  %v2222 = vsel %vm1432, %v2205, 0
  %v2225 = vsel %vm1457, %v2175, 0
  %2227 = vmatpush.bf16.msra.mxu0 0
  %2228 = vmatpush.bf16.msra.mxu0 0
  %2229 = vmatpush.bf16.msra.mxu0 0
  %2230 = vmatpush.bf16.msra.mxu0 0
  %2231 = vmatpush.bf16.msra.mxu0 0
  %2232 = vmatpush.bf16.msra.mxu0 0
  %2233 = vmatpush.bf16.msra.mxu0 0
  %2234 = vmatpush.bf16.msra.mxu0 %v2225
  %2235 = vmatmul.bf16.gmra.mxu0 %v2207
  %v2236 = vpop.f32.mrf.mxu0
  %v2237 = vadd.f32 0.0, %v2236
  %v2238 = vpop.f32.mrf.mxu0
  %v2239 = vadd.f32 0.0, %v2238
  %2240 = vmatmul.bf16.gmra.mxu0 %v2210
  %v2241 = vpop.f32.mrf.mxu0
  %v2242 = vadd.f32 0.0, %v2241
  %v2243 = vpop.f32.mrf.mxu0
  %v2244 = vadd.f32 0.0, %v2243
  %2245 = vmatmul.bf16.gmra.mxu0 %v2213
  %v2246 = vpop.f32.mrf.mxu0
  %v2247 = vadd.f32 0.0, %v2246
  %v2248 = vpop.f32.mrf.mxu0
  %v2249 = vadd.f32 0.0, %v2248
  %2250 = vmatmul.bf16.gmra.mxu0 %v2216
  %v2251 = vpop.f32.mrf.mxu0
  %v2252 = vadd.f32 0.0, %v2251
  %v2253 = vpop.f32.mrf.mxu0
  %v2254 = vadd.f32 0.0, %v2253
  %2255 = vmatmul.bf16.gmra.mxu0 %v2219
  %v2256 = vpop.f32.mrf.mxu0
  %v2257 = vadd.f32 0.0, %v2256
  %v2258 = vpop.f32.mrf.mxu0
  %v2259 = vadd.f32 0.0, %v2258
  %2260 = vmatmul.bf16.gmra.mxu0 %v2222
  %v2261 = vpop.f32.mrf.mxu0
  %v2262 = vadd.f32 0.0, %v2261
  %v2263 = vpop.f32.mrf.mxu0
  %v2264 = vadd.f32 0.0, %v2263
  %2265 = vdwg.mxu0
  %v2278 = vunpack.c.l.b16 %v2125
  %v2279 = vunpack.c.l.b16 %v2126
  %v2280 = vunpack.c.l.b16 %v2127
  %v2281 = vunpack.c.l.b16 %v2128
  %v2282 = vunpack.c.l.b16 %v2129
  %v2283 = vunpack.c.l.b16 %v2130
  %v2284 = vunpack.c.l.b16 %v2131
  %v2285 = vunpack.c.l.b16 %v2132
  %v2286 = vunpack.c.l.b16 %v2133
  %v2287 = vunpack.c.l.b16 %v2134
  %v2288 = vunpack.c.l.b16 %v2135
  %v2289 = vunpack.c.l.b16 %v2136
  %v2290 = vpack.c.b16 %v2279, %v2278
  %v2291 = vpack.c.b16 %v2281, %v2280
  %v2292 = vpack.c.b16 %v2283, %v2282
  %v2293 = vpack.c.b16 %v2285, %v2284
  %v2294 = vpack.c.b16 %v2287, %v2286
  %v2295 = vpack.c.b16 %v2289, %v2288
  %v2297 = vsel %vm1432, %v2290, 0
  %v2300 = vsel %vm1432, %v2291, 0
  %v2303 = vsel %vm1432, %v2292, 0
  %v2306 = vsel %vm1432, %v2293, 0
  %v2309 = vsel %vm1432, %v2294, 0
  %v2312 = vsel %vm1432, %v2295, 0
  %v2315 = vsel %vm1457, %v2173, 0
  %2317 = vmatpush.bf16.msra.mxu0 0
  %2318 = vmatpush.bf16.msra.mxu0 0
  %2319 = vmatpush.bf16.msra.mxu0 0
  %2320 = vmatpush.bf16.msra.mxu0 0
  %2321 = vmatpush.bf16.msra.mxu0 0
  %2322 = vmatpush.bf16.msra.mxu0 0
  %2323 = vmatpush.bf16.msra.mxu0 0
  %2324 = vmatpush.bf16.msra.mxu0 %v2315
  %2325 = vmatmul.bf16.gmra.mxu0 %v2297
  %v2326 = vpop.f32.mrf.mxu0
  %v2327 = vadd.f32 %v2237, %v2326
  %v2328 = vpop.f32.mrf.mxu0
  %v2329 = vadd.f32 %v2239, %v2328
  %2330 = vmatmul.bf16.gmra.mxu0 %v2300
  %v2331 = vpop.f32.mrf.mxu0
  %v2332 = vadd.f32 %v2242, %v2331
  %v2333 = vpop.f32.mrf.mxu0
  %v2334 = vadd.f32 %v2244, %v2333
  %2335 = vmatmul.bf16.gmra.mxu0 %v2303
  %v2336 = vpop.f32.mrf.mxu0
  %v2337 = vadd.f32 %v2247, %v2336
  %v2338 = vpop.f32.mrf.mxu0
  %v2339 = vadd.f32 %v2249, %v2338
  %2340 = vmatmul.bf16.gmra.mxu0 %v2306
  %v2341 = vpop.f32.mrf.mxu0
  %v2342 = vadd.f32 %v2252, %v2341
  %v2343 = vpop.f32.mrf.mxu0
  %v2344 = vadd.f32 %v2254, %v2343
  %2345 = vmatmul.bf16.gmra.mxu0 %v2309
  %v2346 = vpop.f32.mrf.mxu0
  %v2347 = vadd.f32 %v2257, %v2346
  %v2348 = vpop.f32.mrf.mxu0
  %v2349 = vadd.f32 %v2259, %v2348
  %2350 = vmatmul.bf16.gmra.mxu0 %v2312
  %v2351 = vpop.f32.mrf.mxu0
  %v2352 = vadd.f32 %v2262, %v2351
  %v2353 = vpop.f32.mrf.mxu0
  %v2354 = vadd.f32 %v2264, %v2353
  %2355 = vdwg.mxu0
  %s2356 = scalar_lea.vmem %s10, 8
  %v2357 = vld [vmem:[%s2356] sm:$0xf]
  %v2370 = vunpack.c.l.b16 %v2149
  %v2371 = vunpack.c.l.b16 %v2150
  %v2372 = vunpack.c.l.b16 %v2151
  %v2373 = vunpack.c.l.b16 %v2152
  %v2374 = vunpack.c.l.b16 %v2153
  %v2375 = vunpack.c.l.b16 %v2154
  %v2376 = vunpack.c.l.b16 %v2155
  %v2377 = vunpack.c.l.b16 %v2156
  %v2378 = vunpack.c.l.b16 %v2157
  %v2379 = vunpack.c.l.b16 %v2158
  %v2380 = vunpack.c.l.b16 %v2159
  %v2381 = vunpack.c.l.b16 %v2160
  %v2382 = vpack.c.b16 %v2371, %v2370
  %v2383 = vpack.c.b16 %v2373, %v2372
  %v2384 = vpack.c.b16 %v2375, %v2374
  %v2385 = vpack.c.b16 %v2377, %v2376
  %v2386 = vpack.c.b16 %v2379, %v2378
  %v2387 = vpack.c.b16 %v2381, %v2380
  %v2389 = vsel %vm1432, %v2382, 0
  %v2392 = vsel %vm1432, %v2383, 0
  %v2395 = vsel %vm1432, %v2384, 0
  %v2398 = vsel %vm1432, %v2385, 0
  %v2401 = vsel %vm1432, %v2386, 0
  %v2404 = vsel %vm1432, %v2387, 0
  %v2407 = vsel %vm1457, %v2357, 0
  %2409 = vmatpush.bf16.msra.mxu0 0
  %2410 = vmatpush.bf16.msra.mxu0 0
  %2411 = vmatpush.bf16.msra.mxu0 0
  %2412 = vmatpush.bf16.msra.mxu0 0
  %2413 = vmatpush.bf16.msra.mxu0 0
  %2414 = vmatpush.bf16.msra.mxu0 0
  %2415 = vmatpush.bf16.msra.mxu0 0
  %2416 = vmatpush.bf16.msra.mxu0 %v2407
  %2417 = vmatmul.bf16.gmra.mxu0 %v2389
  %v2418 = vpop.f32.mrf.mxu0
  %v2419 = vadd.f32 0.0, %v2418
  %v2420 = vpop.f32.mrf.mxu0
  %v2421 = vadd.f32 0.0, %v2420
  %2422 = vmatmul.bf16.gmra.mxu0 %v2392
  %v2423 = vpop.f32.mrf.mxu0
  %v2424 = vadd.f32 0.0, %v2423
  %v2425 = vpop.f32.mrf.mxu0
  %v2426 = vadd.f32 0.0, %v2425
  %2427 = vmatmul.bf16.gmra.mxu0 %v2395
  %v2428 = vpop.f32.mrf.mxu0
  %v2429 = vadd.f32 0.0, %v2428
  %v2430 = vpop.f32.mrf.mxu0
  %v2431 = vadd.f32 0.0, %v2430
  %2432 = vmatmul.bf16.gmra.mxu0 %v2398
  %v2433 = vpop.f32.mrf.mxu0
  %v2434 = vadd.f32 0.0, %v2433
  %v2435 = vpop.f32.mrf.mxu0
  %v2436 = vadd.f32 0.0, %v2435
  %2437 = vmatmul.bf16.gmra.mxu0 %v2401
  %v2438 = vpop.f32.mrf.mxu0
  %v2439 = vadd.f32 0.0, %v2438
  %v2440 = vpop.f32.mrf.mxu0
  %v2441 = vadd.f32 0.0, %v2440
  %2442 = vmatmul.bf16.gmra.mxu0 %v2404
  %v2443 = vpop.f32.mrf.mxu0
  %v2444 = vadd.f32 0.0, %v2443
  %v2445 = vpop.f32.mrf.mxu0
  %v2446 = vadd.f32 0.0, %v2445
  %2447 = vdwg.mxu0
  %v2448 = vadd.f32 %v2327, %v2419
  %v2449 = vadd.f32 %v2329, %v2421
  %v2450 = vadd.f32 %v2332, %v2424
  %v2451 = vadd.f32 %v2334, %v2426
  %v2452 = vadd.f32 %v2337, %v2429
  %v2453 = vadd.f32 %v2339, %v2431
  %v2454 = vadd.f32 %v2342, %v2434
  %v2455 = vadd.f32 %v2344, %v2436
  %v2456 = vadd.f32 %v2347, %v2439
  %v2457 = vadd.f32 %v2349, %v2441
  %v2458 = vadd.f32 %v2352, %v2444
  %v2459 = vadd.f32 %v2354, %v2446
  %s2460 = scalar_lea.vmem %s10, 12
  %v2461 = vld [vmem:[%s2460] sm:$0xf]
  %v2474 = vunpack.c.l.b16 %v2161
  %v2475 = vunpack.c.l.b16 %v2162
  %v2476 = vunpack.c.l.b16 %v2163
  %v2477 = vunpack.c.l.b16 %v2164
  %v2478 = vunpack.c.l.b16 %v2165
  %v2479 = vunpack.c.l.b16 %v2166
  %v2480 = vunpack.c.l.b16 %v2167
  %v2481 = vunpack.c.l.b16 %v2168
  %v2482 = vunpack.c.l.b16 %v2169
  %v2483 = vunpack.c.l.b16 %v2170
  %v2484 = vunpack.c.l.b16 %v2171
  %v2485 = vunpack.c.l.b16 %v2172
  %v2486 = vpack.c.b16 %v2475, %v2474
  %v2487 = vpack.c.b16 %v2477, %v2476
  %v2488 = vpack.c.b16 %v2479, %v2478
  %v2489 = vpack.c.b16 %v2481, %v2480
  %v2490 = vpack.c.b16 %v2483, %v2482
  %v2491 = vpack.c.b16 %v2485, %v2484
  %v2493 = vsel %vm1432, %v2486, 0
  %v2496 = vsel %vm1432, %v2487, 0
  %v2499 = vsel %vm1432, %v2488, 0
  %v2502 = vsel %vm1432, %v2489, 0
  %v2505 = vsel %vm1432, %v2490, 0
  %v2508 = vsel %vm1432, %v2491, 0
  %v2511 = vsel %vm1457, %v2461, 0
  %2513 = vmatpush.bf16.msra.mxu0 0
  %2514 = vmatpush.bf16.msra.mxu0 0
  %2515 = vmatpush.bf16.msra.mxu0 0
  %2516 = vmatpush.bf16.msra.mxu0 0
  %2517 = vmatpush.bf16.msra.mxu0 0
  %2518 = vmatpush.bf16.msra.mxu0 0
  %2519 = vmatpush.bf16.msra.mxu0 0
  %2520 = vmatpush.bf16.msra.mxu0 %v2511
  %2521 = vmatmul.bf16.gmra.mxu0 %v2493
  %v2522 = vpop.f32.mrf.mxu0
  %v2523 = vadd.f32 0.0, %v2522
  %v2524 = vpop.f32.mrf.mxu0
  %v2525 = vadd.f32 0.0, %v2524
  %2526 = vmatmul.bf16.gmra.mxu0 %v2496
  %v2527 = vpop.f32.mrf.mxu0
  %v2528 = vadd.f32 0.0, %v2527
  %v2529 = vpop.f32.mrf.mxu0
  %v2530 = vadd.f32 0.0, %v2529
  %2531 = vmatmul.bf16.gmra.mxu0 %v2499
  %v2532 = vpop.f32.mrf.mxu0
  %v2533 = vadd.f32 0.0, %v2532
  %v2534 = vpop.f32.mrf.mxu0
  %v2535 = vadd.f32 0.0, %v2534
  %2536 = vmatmul.bf16.gmra.mxu0 %v2502
  %v2537 = vpop.f32.mrf.mxu0
  %v2538 = vadd.f32 0.0, %v2537
  %v2539 = vpop.f32.mrf.mxu0
  %v2540 = vadd.f32 0.0, %v2539
  %2541 = vmatmul.bf16.gmra.mxu0 %v2505
  %v2542 = vpop.f32.mrf.mxu0
  %v2543 = vadd.f32 0.0, %v2542
  %v2544 = vpop.f32.mrf.mxu0
  %v2545 = vadd.f32 0.0, %v2544
  %2546 = vmatmul.bf16.gmra.mxu0 %v2508
  %v2547 = vpop.f32.mrf.mxu0
  %v2548 = vadd.f32 0.0, %v2547
  %v2549 = vpop.f32.mrf.mxu0
  %v2550 = vadd.f32 0.0, %v2549
  %2551 = vdwg.mxu0
  %v2552 = vadd.f32 %v2448, %v2523
  %v2553 = vadd.f32 %v2449, %v2525
  %v2554 = vadd.f32 %v2450, %v2528
  %v2555 = vadd.f32 %v2451, %v2530
  %v2556 = vadd.f32 %v2452, %v2533
  %v2557 = vadd.f32 %v2453, %v2535
  %v2558 = vadd.f32 %v2454, %v2538
  %v2559 = vadd.f32 %v2455, %v2540
  %v2560 = vadd.f32 %v2456, %v2543
  %v2561 = vadd.f32 %v2457, %v2545
  %v2562 = vadd.f32 %v2458, %v2548
  %v2563 = vadd.f32 %v2459, %v2550
  %v2565 = vperm.slane %v1803, 0
  %v2567 = vadd.f32 %v2552, %v2565
  %v2568 = vadd.f32 %v2553, %v2565
  %v2569 = vadd.f32 %v2554, %v2565
  %v2570 = vadd.f32 %v2555, %v2565
  %v2571 = vadd.f32 %v2556, %v2565
  %v2572 = vadd.f32 %v2557, %v2565
  %v2573 = vadd.f32 %v2558, %v2565
  %v2574 = vadd.f32 %v2559, %v2565
  %v2575 = vadd.f32 %v2560, %v2565
  %v2576 = vadd.f32 %v2561, %v2565
  %v2577 = vadd.f32 %v2562, %v2565
  %v2578 = vadd.f32 %v2563, %v2565
  %v2579 = vmax.f32 %v2567, 0.0
  %v2580 = vmax.f32 %v2568, 0.0
  %v2581 = vmax.f32 %v2569, 0.0
  %v2582 = vmax.f32 %v2570, 0.0
  %v2583 = vmax.f32 %v2571, 0.0
  %v2584 = vmax.f32 %v2572, 0.0
  %v2585 = vmax.f32 %v2573, 0.0
  %v2586 = vmax.f32 %v2574, 0.0
  %v2587 = vmax.f32 %v2575, 0.0
  %v2588 = vmax.f32 %v2576, 0.0
  %v2589 = vmax.f32 %v2577, 0.0
  %v2590 = vmax.f32 %v2578, 0.0
  %v2591 = vpack.c.bf16 %v2580, %v2579
  %v2592 = vpack.c.bf16 %v2582, %v2581
  %v2593 = vpack.c.bf16 %v2584, %v2583
  %v2594 = vpack.c.bf16 %v2586, %v2585
  %v2595 = vpack.c.bf16 %v2588, %v2587
  %v2596 = vpack.c.bf16 %v2590, %v2589
  %v2597 = vld [vmem:[%s14] sm:$0x1]
  %v2598 = vld [vmem:[%s12] sm:$0xf]
  %v2599 = vld [vmem:[%s12 + $0x4] sm:$0xf]
  %v2600 = vld [vmem:[%s12 + $0x8] sm:$0xf]
  %v2601 = vld [vmem:[%s12 + $0xc] sm:$0xf]
  %v2602 = vld [vmem:[%s12 + $0x10] sm:$0xf]
  %v2603 = vld [vmem:[%s12 + $0x14] sm:$0xf]
  %v2604 = vld [vmem:[%s12 + $0x18] sm:$0xf]
  %v2605 = vld [vmem:[%s12 + $0x1c] sm:$0xf]
  %v2606 = vld [vmem:[%s12 + $0x20] sm:$0xf]
  %v2607 = vld [vmem:[%s12 + $0x24] sm:$0xf]
  %v2608 = vld [vmem:[%s12 + $0x28] sm:$0xf]
  %v2609 = vld [vmem:[%s12 + $0x2c] sm:$0xf]
  %v2610 = vld [vmem:[%s12 + $0x30] sm:$0xf]
  %v2611 = vld [vmem:[%s12 + $0x34] sm:$0xf]
  %v2612 = vld [vmem:[%s12 + $0x38] sm:$0xf]
  %v2613 = vld [vmem:[%s12 + $0x3c] sm:$0xf]
  %v2614 = vld [vmem:[%s12 + $0x40] sm:$0xf]
  %v2615 = vld [vmem:[%s12 + $0x44] sm:$0xf]
  %v2616 = vld [vmem:[%s12 + $0x48] sm:$0xf]
  %v2617 = vld [vmem:[%s12 + $0x4c] sm:$0xf]
  %v2618 = vld [vmem:[%s12 + $0x50] sm:$0xf]
  %v2619 = vld [vmem:[%s12 + $0x54] sm:$0xf]
  %v2620 = vld [vmem:[%s12 + $0x58] sm:$0xf]
  %v2621 = vld [vmem:[%s12 + $0x5c] sm:$0xf]
  %v2622 = vld [vmem:[%s12 + $0x60] sm:$0xf]
  %v2623 = vld [vmem:[%s12 + $0x64] sm:$0xf]
  %v2624 = vld [vmem:[%s12 + $0x68] sm:$0xf]
  %v2625 = vld [vmem:[%s12 + $0x6c] sm:$0xf]
  %v2626 = vld [vmem:[%s12 + $0x70] sm:$0xf]
  %v2627 = vld [vmem:[%s12 + $0x74] sm:$0xf]
  %v2658 = vunpack.c.l.b16 %v2598
  %v2659 = vunpack.c.l.b16 %v2599
  %v2660 = vunpack.c.l.b16 %v2600
  %v2661 = vunpack.c.l.b16 %v2601
  %v2662 = vunpack.c.l.b16 %v2602
  %v2663 = vunpack.c.l.b16 %v2603
  %v2664 = vunpack.c.l.b16 %v2604
  %v2665 = vunpack.c.l.b16 %v2605
  %v2666 = vunpack.c.l.b16 %v2606
  %v2667 = vunpack.c.l.b16 %v2607
  %v2668 = vunpack.c.l.b16 %v2608
  %v2669 = vunpack.c.l.b16 %v2609
  %v2670 = vunpack.c.l.b16 %v2610
  %v2671 = vunpack.c.l.b16 %v2611
  %v2672 = vunpack.c.l.b16 %v2612
  %v2673 = vunpack.c.l.b16 %v2613
  %v2674 = vunpack.c.l.b16 %v2614
  %v2675 = vunpack.c.l.b16 %v2615
  %v2676 = vunpack.c.l.b16 %v2616
  %v2677 = vunpack.c.l.b16 %v2617
  %v2678 = vunpack.c.l.b16 %v2618
  %v2679 = vunpack.c.l.b16 %v2619
  %v2680 = vunpack.c.l.b16 %v2620
  %v2681 = vunpack.c.l.b16 %v2621
  %v2682 = vunpack.c.l.b16 %v2622
  %v2683 = vunpack.c.l.b16 %v2623
  %v2684 = vunpack.c.l.b16 %v2624
  %v2685 = vunpack.c.l.b16 %v2625
  %v2686 = vunpack.c.l.b16 %v2626
  %v2687 = vunpack.c.l.b16 %v2627
  %v2688 = vpack.c.b16 %v2659, %v2658
  %v2689 = vpack.c.b16 %v2661, %v2660
  %v2690 = vpack.c.b16 %v2663, %v2662
  %v2691 = vpack.c.b16 %v2665, %v2664
  %v2692 = vpack.c.b16 %v2667, %v2666
  %v2693 = vpack.c.b16 %v2669, %v2668
  %v2694 = vpack.c.b16 %v2671, %v2670
  %v2695 = vpack.c.b16 %v2673, %v2672
  %v2696 = vpack.c.b16 %v2675, %v2674
  %v2697 = vpack.c.b16 %v2677, %v2676
  %v2698 = vpack.c.b16 %v2679, %v2678
  %v2699 = vpack.c.b16 %v2681, %v2680
  %v2700 = vpack.c.b16 %v2683, %v2682
  %v2701 = vpack.c.b16 %v2685, %v2684
  %v2702 = vpack.c.b16 %v2687, %v2686
  %v2704 = vsel %vm1139, %v2688, 0
  %v2707 = vsel %vm1139, %v2689, 0
  %v2710 = vsel %vm1139, %v2690, 0
  %v2713 = vsel %vm1139, %v2691, 0
  %v2716 = vsel %vm1139, %v2692, 0
  %v2719 = vsel %vm1139, %v2693, 0
  %v2722 = vsel %vm1139, %v2694, 0
  %v2725 = vsel %vm1139, %v2695, 0
  %v2728 = vsel %vm1139, %v2696, 0
  %v2731 = vsel %vm1139, %v2697, 0
  %v2734 = vsel %vm1139, %v2698, 0
  %v2737 = vsel %vm1139, %v2699, 0
  %v2740 = vsel %vm1139, %v2700, 0
  %v2743 = vsel %vm1139, %v2701, 0
  %v2746 = vsel %vm1139, %v2702, 0
  %2748 = vmatpush.bf16.msra.mxu0 0
  %2749 = vmatpush.bf16.msra.mxu0 0
  %2750 = vmatpush.bf16.msra.mxu0 %v2596
  %2751 = vmatpush.bf16.msra.mxu0 %v2595
  %2752 = vmatpush.bf16.msra.mxu0 %v2594
  %2753 = vmatpush.bf16.msra.mxu0 %v2593
  %2754 = vmatpush.bf16.msra.mxu0 %v2592
  %2755 = vmatpush.bf16.msra.mxu0 %v2591
  %2756 = vmatmul.bf16.gmra.mxu0 %v2704
  %v2757 = vpop.f32.mrf.mxu0
  %v2758 = vadd.f32 0.0, %v2757
  %v2759 = vpop.f32.mrf.mxu0
  %v2760 = vadd.f32 0.0, %v2759
  %2761 = vmatmul.bf16.gmra.mxu0 %v2707
  %v2762 = vpop.f32.mrf.mxu0
  %v2763 = vadd.f32 0.0, %v2762
  %v2764 = vpop.f32.mrf.mxu0
  %v2765 = vadd.f32 0.0, %v2764
  %2766 = vmatmul.bf16.gmra.mxu0 %v2710
  %v2767 = vpop.f32.mrf.mxu0
  %v2768 = vadd.f32 0.0, %v2767
  %v2769 = vpop.f32.mrf.mxu0
  %v2770 = vadd.f32 0.0, %v2769
  %2771 = vmatmul.bf16.gmra.mxu0 %v2713
  %v2772 = vpop.f32.mrf.mxu0
  %v2773 = vadd.f32 0.0, %v2772
  %v2774 = vpop.f32.mrf.mxu0
  %v2775 = vadd.f32 0.0, %v2774
  %2776 = vmatmul.bf16.gmra.mxu0 %v2716
  %v2777 = vpop.f32.mrf.mxu0
  %v2778 = vadd.f32 0.0, %v2777
  %v2779 = vpop.f32.mrf.mxu0
  %v2780 = vadd.f32 0.0, %v2779
  %2781 = vmatmul.bf16.gmra.mxu0 %v2719
  %v2782 = vpop.f32.mrf.mxu0
  %v2783 = vadd.f32 0.0, %v2782
  %v2784 = vpop.f32.mrf.mxu0
  %v2785 = vadd.f32 0.0, %v2784
  %2786 = vmatmul.bf16.gmra.mxu0 %v2722
  %v2787 = vpop.f32.mrf.mxu0
  %v2788 = vadd.f32 0.0, %v2787
  %v2789 = vpop.f32.mrf.mxu0
  %v2790 = vadd.f32 0.0, %v2789
  %2791 = vmatmul.bf16.gmra.mxu0 %v2725
  %v2792 = vpop.f32.mrf.mxu0
  %v2793 = vadd.f32 0.0, %v2792
  %v2794 = vpop.f32.mrf.mxu0
  %v2795 = vadd.f32 0.0, %v2794
  %2796 = vmatmul.bf16.gmra.mxu0 %v2728
  %v2797 = vpop.f32.mrf.mxu0
  %v2798 = vadd.f32 0.0, %v2797
  %v2799 = vpop.f32.mrf.mxu0
  %v2800 = vadd.f32 0.0, %v2799
  %2801 = vmatmul.bf16.gmra.mxu0 %v2731
  %v2802 = vpop.f32.mrf.mxu0
  %v2803 = vadd.f32 0.0, %v2802
  %v2804 = vpop.f32.mrf.mxu0
  %v2805 = vadd.f32 0.0, %v2804
  %2806 = vmatmul.bf16.gmra.mxu0 %v2734
  %v2807 = vpop.f32.mrf.mxu0
  %v2808 = vadd.f32 0.0, %v2807
  %v2809 = vpop.f32.mrf.mxu0
  %v2810 = vadd.f32 0.0, %v2809
  %2811 = vmatmul.bf16.gmra.mxu0 %v2737
  %v2812 = vpop.f32.mrf.mxu0
  %v2813 = vadd.f32 0.0, %v2812
  %v2814 = vpop.f32.mrf.mxu0
  %v2815 = vadd.f32 0.0, %v2814
  %2816 = vmatmul.bf16.gmra.mxu0 %v2740
  %v2817 = vpop.f32.mrf.mxu0
  %v2818 = vadd.f32 0.0, %v2817
  %v2819 = vpop.f32.mrf.mxu0
  %v2820 = vadd.f32 0.0, %v2819
  %2821 = vmatmul.bf16.gmra.mxu0 %v2743
  %v2822 = vpop.f32.mrf.mxu0
  %v2823 = vadd.f32 0.0, %v2822
  %v2824 = vpop.f32.mrf.mxu0
  %v2825 = vadd.f32 0.0, %v2824
  %2826 = vmatmul.bf16.gmra.mxu0 %v2746
  %v2827 = vpop.f32.mrf.mxu0
  %v2828 = vadd.f32 0.0, %v2827
  %v2829 = vpop.f32.mrf.mxu0
  %v2830 = vadd.f32 0.0, %v2829
  %2831 = vdwg.mxu0
  %v2832 = vpack.c.bf16 %v2758, %v2758
  %v2833 = vpack.c.bf16 %v2760, %v2760
  %v2834 = vpack.c.bf16 %v2763, %v2763
  %v2835 = vpack.c.bf16 %v2765, %v2765
  %v2836 = vpack.c.bf16 %v2768, %v2768
  %v2837 = vpack.c.bf16 %v2770, %v2770
  %v2838 = vpack.c.bf16 %v2773, %v2773
  %v2839 = vpack.c.bf16 %v2775, %v2775
  %v2840 = vpack.c.bf16 %v2778, %v2778
  %v2841 = vpack.c.bf16 %v2780, %v2780
  %v2842 = vpack.c.bf16 %v2783, %v2783
  %v2843 = vpack.c.bf16 %v2785, %v2785
  %v2844 = vpack.c.bf16 %v2788, %v2788
  %v2845 = vpack.c.bf16 %v2790, %v2790
  %v2846 = vpack.c.bf16 %v2793, %v2793
  %v2847 = vpack.c.bf16 %v2795, %v2795
  %v2848 = vpack.c.bf16 %v2798, %v2798
  %v2849 = vpack.c.bf16 %v2800, %v2800
  %v2850 = vpack.c.bf16 %v2803, %v2803
  %v2851 = vpack.c.bf16 %v2805, %v2805
  %v2852 = vpack.c.bf16 %v2808, %v2808
  %v2853 = vpack.c.bf16 %v2810, %v2810
  %v2854 = vpack.c.bf16 %v2813, %v2813
  %v2855 = vpack.c.bf16 %v2815, %v2815
  %v2856 = vpack.c.bf16 %v2818, %v2818
  %v2857 = vpack.c.bf16 %v2820, %v2820
  %v2858 = vpack.c.bf16 %v2823, %v2823
  %v2859 = vpack.c.bf16 %v2825, %v2825
  %v2860 = vpack.c.bf16 %v2828, %v2828
  %v2861 = vpack.c.bf16 %v2830, %v2830
  %v2862 = vld [vmem:[%s13] sm:$0xf]
  %v2863 = vld [vmem:[%s13 + $0x4] sm:$0xf]
  %s2864 = scalar_lea.vmem %s13, 8
  %v2865 = vld [vmem:[%s2864] sm:$0xf]
  %v2866 = vld [vmem:[%s2864 + $0x4] sm:$0xf]
  %v2877 = vunpack.c.l.b16 %v2842
  %v2878 = vunpack.c.l.b16 %v2843
  %v2879 = vunpack.c.l.b16 %v2844
  %v2880 = vunpack.c.l.b16 %v2845
  %v2881 = vunpack.c.l.b16 %v2846
  %v2882 = vunpack.c.l.b16 %v2847
  %v2883 = vunpack.c.l.b16 %v2848
  %v2884 = vunpack.c.l.b16 %v2849
  %v2885 = vunpack.c.l.b16 %v2850
  %v2886 = vunpack.c.l.b16 %v2851
  %v2887 = vpack.c.b16 %v2878, %v2877
  %v2888 = vpack.c.b16 %v2880, %v2879
  %v2889 = vpack.c.b16 %v2882, %v2881
  %v2890 = vpack.c.b16 %v2884, %v2883
  %v2891 = vpack.c.b16 %v2886, %v2885
  %v2894 = vunpack.c.l.b16 %v2865
  %v2895 = vunpack.c.l.b16 %v2866
  %v2896 = vpack.c.b16 %v2895, %v2894
  %vm2898 = vcmask 130048
  %v2900 = vsel %vm2898, %v2887, 0
  %v2903 = vsel %vm2898, %v2888, 0
  %v2906 = vsel %vm2898, %v2889, 0
  %v2909 = vsel %vm2898, %v2890, 0
  %v2912 = vsel %vm2898, %v2891, 0
  %2914 = vmatpush.bf16.msra.mxu0 0
  %2915 = vmatpush.bf16.msra.mxu0 0
  %2916 = vmatpush.bf16.msra.mxu0 0
  %2917 = vmatpush.bf16.msra.mxu0 0
  %2918 = vmatpush.bf16.msra.mxu0 0
  %2919 = vmatpush.bf16.msra.mxu0 0
  %2920 = vmatpush.bf16.msra.mxu0 0
  %2921 = vmatpush.bf16.msra.mxu0 %v2896
  %2922 = vmatmul.bf16.gmra.mxu0 %v2900
  %v2923 = vpop.f32.mrf.mxu0
  %v2924 = vadd.f32 0.0, %v2923
  %v2925 = vpop.f32.mrf.mxu0
  %v2926 = vadd.f32 0.0, %v2925
  %2927 = vmatmul.bf16.gmra.mxu0 %v2903
  %v2928 = vpop.f32.mrf.mxu0
  %v2929 = vadd.f32 0.0, %v2928
  %v2930 = vpop.f32.mrf.mxu0
  %v2931 = vadd.f32 0.0, %v2930
  %2932 = vmatmul.bf16.gmra.mxu0 %v2906
  %v2933 = vpop.f32.mrf.mxu0
  %v2934 = vadd.f32 0.0, %v2933
  %v2935 = vpop.f32.mrf.mxu0
  %v2936 = vadd.f32 0.0, %v2935
  %2937 = vmatmul.bf16.gmra.mxu0 %v2909
  %v2938 = vpop.f32.mrf.mxu0
  %v2939 = vadd.f32 0.0, %v2938
  %v2940 = vpop.f32.mrf.mxu0
  %v2941 = vadd.f32 0.0, %v2940
  %2942 = vmatmul.bf16.gmra.mxu0 %v2912
  %v2943 = vpop.f32.mrf.mxu0
  %v2944 = vadd.f32 0.0, %v2943
  %v2945 = vpop.f32.mrf.mxu0
  %v2946 = vadd.f32 0.0, %v2945
  %2947 = vdwg.mxu0
  %v2958 = vunpack.c.l.b16 %v2832
  %v2959 = vunpack.c.l.b16 %v2833
  %v2960 = vunpack.c.l.b16 %v2834
  %v2961 = vunpack.c.l.b16 %v2835
  %v2962 = vunpack.c.l.b16 %v2836
  %v2963 = vunpack.c.l.b16 %v2837
  %v2964 = vunpack.c.l.b16 %v2838
  %v2965 = vunpack.c.l.b16 %v2839
  %v2966 = vunpack.c.l.b16 %v2840
  %v2967 = vunpack.c.l.b16 %v2841
  %v2968 = vpack.c.b16 %v2959, %v2958
  %v2969 = vpack.c.b16 %v2961, %v2960
  %v2970 = vpack.c.b16 %v2963, %v2962
  %v2971 = vpack.c.b16 %v2965, %v2964
  %v2972 = vpack.c.b16 %v2967, %v2966
  %v2975 = vunpack.c.l.b16 %v2862
  %v2976 = vunpack.c.l.b16 %v2863
  %v2977 = vpack.c.b16 %v2976, %v2975
  %v2980 = vsel %vm2898, %v2968, 0
  %v2983 = vsel %vm2898, %v2969, 0
  %v2986 = vsel %vm2898, %v2970, 0
  %v2989 = vsel %vm2898, %v2971, 0
  %v2992 = vsel %vm2898, %v2972, 0
  %2994 = vmatpush.bf16.msra.mxu0 0
  %2995 = vmatpush.bf16.msra.mxu0 0
  %2996 = vmatpush.bf16.msra.mxu0 0
  %2997 = vmatpush.bf16.msra.mxu0 0
  %2998 = vmatpush.bf16.msra.mxu0 0
  %2999 = vmatpush.bf16.msra.mxu0 0
  %3000 = vmatpush.bf16.msra.mxu0 0
  %3001 = vmatpush.bf16.msra.mxu0 %v2977
  %3002 = vmatmul.bf16.gmra.mxu0 %v2980
  %v3003 = vpop.f32.mrf.mxu0
  %v3004 = vadd.f32 %v2924, %v3003
  %v3005 = vpop.f32.mrf.mxu0
  %v3006 = vadd.f32 %v2926, %v3005
  %3007 = vmatmul.bf16.gmra.mxu0 %v2983
  %v3008 = vpop.f32.mrf.mxu0
  %v3009 = vadd.f32 %v2929, %v3008
  %v3010 = vpop.f32.mrf.mxu0
  %v3011 = vadd.f32 %v2931, %v3010
  %3012 = vmatmul.bf16.gmra.mxu0 %v2986
  %v3013 = vpop.f32.mrf.mxu0
  %v3014 = vadd.f32 %v2934, %v3013
  %v3015 = vpop.f32.mrf.mxu0
  %v3016 = vadd.f32 %v2936, %v3015
  %3017 = vmatmul.bf16.gmra.mxu0 %v2989
  %v3018 = vpop.f32.mrf.mxu0
  %v3019 = vadd.f32 %v2939, %v3018
  %v3020 = vpop.f32.mrf.mxu0
  %v3021 = vadd.f32 %v2941, %v3020
  %3022 = vmatmul.bf16.gmra.mxu0 %v2992
  %v3023 = vpop.f32.mrf.mxu0
  %v3024 = vadd.f32 %v2944, %v3023
  %v3025 = vpop.f32.mrf.mxu0
  %v3026 = vadd.f32 %v2946, %v3025
  %3027 = vdwg.mxu0
  %s3028 = scalar_lea.vmem %s13, 16
  %v3029 = vld [vmem:[%s3028] sm:$0xf]
  %v3030 = vld [vmem:[%s3028 + $0x4] sm:$0xf]
  %v3041 = vunpack.c.l.b16 %v2852
  %v3042 = vunpack.c.l.b16 %v2853
  %v3043 = vunpack.c.l.b16 %v2854
  %v3044 = vunpack.c.l.b16 %v2855
  %v3045 = vunpack.c.l.b16 %v2856
  %v3046 = vunpack.c.l.b16 %v2857
  %v3047 = vunpack.c.l.b16 %v2858
  %v3048 = vunpack.c.l.b16 %v2859
  %v3049 = vunpack.c.l.b16 %v2860
  %v3050 = vunpack.c.l.b16 %v2861
  %v3051 = vpack.c.b16 %v3042, %v3041
  %v3052 = vpack.c.b16 %v3044, %v3043
  %v3053 = vpack.c.b16 %v3046, %v3045
  %v3054 = vpack.c.b16 %v3048, %v3047
  %v3055 = vpack.c.b16 %v3050, %v3049
  %v3058 = vunpack.c.l.b16 %v3029
  %v3059 = vunpack.c.l.b16 %v3030
  %v3060 = vpack.c.b16 %v3059, %v3058
  %v3063 = vsel %vm2898, %v3051, 0
  %v3066 = vsel %vm2898, %v3052, 0
  %v3069 = vsel %vm2898, %v3053, 0
  %v3072 = vsel %vm2898, %v3054, 0
  %v3075 = vsel %vm2898, %v3055, 0
  %3077 = vmatpush.bf16.msra.mxu0 0
  %3078 = vmatpush.bf16.msra.mxu0 0
  %3079 = vmatpush.bf16.msra.mxu0 0
  %3080 = vmatpush.bf16.msra.mxu0 0
  %3081 = vmatpush.bf16.msra.mxu0 0
  %3082 = vmatpush.bf16.msra.mxu0 0
  %3083 = vmatpush.bf16.msra.mxu0 0
  %3084 = vmatpush.bf16.msra.mxu0 %v3060
  %3085 = vmatmul.bf16.gmra.mxu0 %v3063
  %v3086 = vpop.f32.mrf.mxu0
  %v3087 = vadd.f32 0.0, %v3086
  %v3088 = vpop.f32.mrf.mxu0
  %v3089 = vadd.f32 0.0, %v3088
  %3090 = vmatmul.bf16.gmra.mxu0 %v3066
  %v3091 = vpop.f32.mrf.mxu0
  %v3092 = vadd.f32 0.0, %v3091
  %v3093 = vpop.f32.mrf.mxu0
  %v3094 = vadd.f32 0.0, %v3093
  %3095 = vmatmul.bf16.gmra.mxu0 %v3069
  %v3096 = vpop.f32.mrf.mxu0
  %v3097 = vadd.f32 0.0, %v3096
  %v3098 = vpop.f32.mrf.mxu0
  %v3099 = vadd.f32 0.0, %v3098
  %3100 = vmatmul.bf16.gmra.mxu0 %v3072
  %v3101 = vpop.f32.mrf.mxu0
  %v3102 = vadd.f32 0.0, %v3101
  %v3103 = vpop.f32.mrf.mxu0
  %v3104 = vadd.f32 0.0, %v3103
  %3105 = vmatmul.bf16.gmra.mxu0 %v3075
  %v3106 = vpop.f32.mrf.mxu0
  %v3107 = vadd.f32 0.0, %v3106
  %v3108 = vpop.f32.mrf.mxu0
  %v3109 = vadd.f32 0.0, %v3108
  %3110 = vdwg.mxu0
  %v3111 = vadd.f32 %v3004, %v3087
  %v3112 = vadd.f32 %v3006, %v3089
  %v3113 = vadd.f32 %v3009, %v3092
  %v3114 = vadd.f32 %v3011, %v3094
  %v3115 = vadd.f32 %v3014, %v3097
  %v3116 = vadd.f32 %v3016, %v3099
  %v3117 = vadd.f32 %v3019, %v3102
  %v3118 = vadd.f32 %v3021, %v3104
  %v3119 = vadd.f32 %v3024, %v3107
  %v3120 = vadd.f32 %v3026, %v3109
  %v3122 = vperm.slane %v2597, 0
  %v3124 = vadd.f32 %v3111, %v3122
  %v3125 = vadd.f32 %v3112, %v3122
  %v3126 = vadd.f32 %v3113, %v3122
  %v3127 = vadd.f32 %v3114, %v3122
  %v3128 = vadd.f32 %v3115, %v3122
  %v3129 = vadd.f32 %v3116, %v3122
  %v3130 = vadd.f32 %v3117, %v3122
  %v3131 = vadd.f32 %v3118, %v3122
  %v3132 = vadd.f32 %v3119, %v3122
  %v3133 = vadd.f32 %v3120, %v3122
  %v3134 = vmax.f32 %v3124, 0.0
  %v3135 = vmax.f32 %v3125, 0.0
  %v3136 = vmax.f32 %v3126, 0.0
  %v3137 = vmax.f32 %v3127, 0.0
  %v3138 = vmax.f32 %v3128, 0.0
  %v3139 = vmax.f32 %v3129, 0.0
  %v3140 = vmax.f32 %v3130, 0.0
  %v3141 = vmax.f32 %v3131, 0.0
  %v3142 = vmax.f32 %v3132, 0.0
  %v3143 = vmax.f32 %v3133, 0.0
  %v3144 = vpack.c.bf16 %v3135, %v3134
  %v3145 = vpack.c.bf16 %v3137, %v3136
  %v3146 = vpack.c.bf16 %v3139, %v3138
  %v3147 = vpack.c.bf16 %v3141, %v3140
  %v3148 = vpack.c.bf16 %v3143, %v3142
  %v3149 = vld [vmem:[%s17] sm:$0x1]
  %v3150 = vld [vmem:[%s15] sm:$0xf]
  %v3151 = vld [vmem:[%s15 + $0x4] sm:$0xf]
  %v3152 = vld [vmem:[%s15 + $0x8] sm:$0xf]
  %v3153 = vld [vmem:[%s15 + $0xc] sm:$0xf]
  %v3154 = vld [vmem:[%s15 + $0x10] sm:$0xf]
  %v3155 = vld [vmem:[%s15 + $0x14] sm:$0xf]
  %v3156 = vld [vmem:[%s15 + $0x18] sm:$0xf]
  %v3157 = vld [vmem:[%s15 + $0x1c] sm:$0xf]
  %v3158 = vld [vmem:[%s15 + $0x20] sm:$0xf]
  %v3159 = vld [vmem:[%s15 + $0x24] sm:$0xf]
  %v3160 = vld [vmem:[%s15 + $0x28] sm:$0xf]
  %v3161 = vld [vmem:[%s15 + $0x2c] sm:$0xf]
  %v3162 = vld [vmem:[%s15 + $0x30] sm:$0xf]
  %v3163 = vld [vmem:[%s15 + $0x34] sm:$0xf]
  %v3164 = vld [vmem:[%s15 + $0x38] sm:$0xf]
  %v3165 = vld [vmem:[%s15 + $0x3c] sm:$0xf]
  %v3166 = vld [vmem:[%s15 + $0x40] sm:$0xf]
  %v3167 = vld [vmem:[%s15 + $0x44] sm:$0xf]
  %v3168 = vld [vmem:[%s15 + $0x48] sm:$0xf]
  %v3169 = vld [vmem:[%s15 + $0x4c] sm:$0xf]
  %v3170 = vld [vmem:[%s15 + $0x50] sm:$0xf]
  %v3171 = vld [vmem:[%s15 + $0x54] sm:$0xf]
  %v3172 = vld [vmem:[%s15 + $0x58] sm:$0xf]
  %v3173 = vld [vmem:[%s15 + $0x5c] sm:$0xf]
  %v3174 = vld [vmem:[%s15 + $0x60] sm:$0xf]
  %v3175 = vld [vmem:[%s15 + $0x64] sm:$0xf]
  %v3176 = vld [vmem:[%s15 + $0x68] sm:$0xf]
  %v3177 = vld [vmem:[%s15 + $0x6c] sm:$0xf]
  %v3178 = vld [vmem:[%s15 + $0x70] sm:$0xf]
  %v3179 = vld [vmem:[%s15 + $0x74] sm:$0xf]
  %v3180 = vld [vmem:[%s15 + $0x78] sm:$0xf]
  %v3181 = vld [vmem:[%s15 + $0x7c] sm:$0xf]
  %v3182 = vld [vmem:[%s15 + $0x80] sm:$0xf]
  %v3183 = vld [vmem:[%s15 + $0x84] sm:$0xf]
  %v3184 = vld [vmem:[%s15 + $0x88] sm:$0xf]
  %v3185 = vld [vmem:[%s15 + $0x8c] sm:$0xf]
  %v3222 = vunpack.c.l.b16 %v3150
  %v3223 = vunpack.c.l.b16 %v3151
  %v3224 = vunpack.c.l.b16 %v3152
  %v3225 = vunpack.c.l.b16 %v3153
  %v3226 = vunpack.c.l.b16 %v3154
  %v3227 = vunpack.c.l.b16 %v3155
  %v3228 = vunpack.c.l.b16 %v3156
  %v3229 = vunpack.c.l.b16 %v3157
  %v3230 = vunpack.c.l.b16 %v3158
  %v3231 = vunpack.c.l.b16 %v3159
  %v3232 = vunpack.c.l.b16 %v3160
  %v3233 = vunpack.c.l.b16 %v3161
  %v3234 = vunpack.c.l.b16 %v3162
  %v3235 = vunpack.c.l.b16 %v3163
  %v3236 = vunpack.c.l.b16 %v3164
  %v3237 = vunpack.c.l.b16 %v3165
  %v3238 = vunpack.c.l.b16 %v3166
  %v3239 = vunpack.c.l.b16 %v3167
  %v3240 = vunpack.c.l.b16 %v3168
  %v3241 = vunpack.c.l.b16 %v3169
  %v3242 = vunpack.c.l.b16 %v3170
  %v3243 = vunpack.c.l.b16 %v3171
  %v3244 = vunpack.c.l.b16 %v3172
  %v3245 = vunpack.c.l.b16 %v3173
  %v3246 = vunpack.c.l.b16 %v3174
  %v3247 = vunpack.c.l.b16 %v3175
  %v3248 = vunpack.c.l.b16 %v3176
  %v3249 = vunpack.c.l.b16 %v3177
  %v3250 = vunpack.c.l.b16 %v3178
  %v3251 = vunpack.c.l.b16 %v3179
  %v3252 = vunpack.c.l.b16 %v3180
  %v3253 = vunpack.c.l.b16 %v3181
  %v3254 = vunpack.c.l.b16 %v3182
  %v3255 = vunpack.c.l.b16 %v3183
  %v3256 = vunpack.c.l.b16 %v3184
  %v3257 = vunpack.c.l.b16 %v3185
  %v3258 = vpack.c.b16 %v3223, %v3222
  %v3259 = vpack.c.b16 %v3225, %v3224
  %v3260 = vpack.c.b16 %v3227, %v3226
  %v3261 = vpack.c.b16 %v3229, %v3228
  %v3262 = vpack.c.b16 %v3231, %v3230
  %v3263 = vpack.c.b16 %v3233, %v3232
  %v3264 = vpack.c.b16 %v3235, %v3234
  %v3265 = vpack.c.b16 %v3237, %v3236
  %v3266 = vpack.c.b16 %v3239, %v3238
  %v3267 = vpack.c.b16 %v3241, %v3240
  %v3268 = vpack.c.b16 %v3243, %v3242
  %v3269 = vpack.c.b16 %v3245, %v3244
  %v3270 = vpack.c.b16 %v3247, %v3246
  %v3271 = vpack.c.b16 %v3249, %v3248
  %v3272 = vpack.c.b16 %v3251, %v3250
  %v3273 = vpack.c.b16 %v3253, %v3252
  %v3274 = vpack.c.b16 %v3255, %v3254
  %v3275 = vpack.c.b16 %v3257, %v3256
  %vm3276 = vcmask 654336
  %v3278 = vsel %vm3276, %v3258, 0
  %v3281 = vsel %vm3276, %v3259, 0
  %v3284 = vsel %vm3276, %v3260, 0
  %v3287 = vsel %vm3276, %v3261, 0
  %v3290 = vsel %vm3276, %v3262, 0
  %v3293 = vsel %vm3276, %v3263, 0
  %v3296 = vsel %vm3276, %v3264, 0
  %v3299 = vsel %vm3276, %v3265, 0
  %v3302 = vsel %vm3276, %v3266, 0
  %v3305 = vsel %vm3276, %v3267, 0
  %v3308 = vsel %vm3276, %v3268, 0
  %v3311 = vsel %vm3276, %v3269, 0
  %v3314 = vsel %vm3276, %v3270, 0
  %v3317 = vsel %vm3276, %v3271, 0
  %v3320 = vsel %vm3276, %v3272, 0
  %v3323 = vsel %vm3276, %v3273, 0
  %v3326 = vsel %vm3276, %v3274, 0
  %v3329 = vsel %vm3276, %v3275, 0
  %3331 = vmatpush.bf16.msra.mxu0 0
  %3332 = vmatpush.bf16.msra.mxu0 0
  %3333 = vmatpush.bf16.msra.mxu0 0
  %3334 = vmatpush.bf16.msra.mxu0 %v3148
  %3335 = vmatpush.bf16.msra.mxu0 %v3147
  %3336 = vmatpush.bf16.msra.mxu0 %v3146
  %3337 = vmatpush.bf16.msra.mxu0 %v3145
  %3338 = vmatpush.bf16.msra.mxu0 %v3144
  %3339 = vmatmul.bf16.gmra.mxu0 %v3278
  %v3340 = vpop.f32.mrf.mxu0
  %v3341 = vadd.f32 0.0, %v3340
  %v3342 = vpop.f32.mrf.mxu0
  %v3343 = vadd.f32 0.0, %v3342
  %3344 = vmatmul.bf16.gmra.mxu0 %v3281
  %v3345 = vpop.f32.mrf.mxu0
  %v3346 = vadd.f32 0.0, %v3345
  %v3347 = vpop.f32.mrf.mxu0
  %v3348 = vadd.f32 0.0, %v3347
  %3349 = vmatmul.bf16.gmra.mxu0 %v3284
  %v3350 = vpop.f32.mrf.mxu0
  %v3351 = vadd.f32 0.0, %v3350
  %v3352 = vpop.f32.mrf.mxu0
  %v3353 = vadd.f32 0.0, %v3352
  %3354 = vmatmul.bf16.gmra.mxu0 %v3287
  %v3355 = vpop.f32.mrf.mxu0
  %v3356 = vadd.f32 0.0, %v3355
  %v3357 = vpop.f32.mrf.mxu0
  %v3358 = vadd.f32 0.0, %v3357
  %3359 = vmatmul.bf16.gmra.mxu0 %v3290
  %v3360 = vpop.f32.mrf.mxu0
  %v3361 = vadd.f32 0.0, %v3360
  %v3362 = vpop.f32.mrf.mxu0
  %v3363 = vadd.f32 0.0, %v3362
  %3364 = vmatmul.bf16.gmra.mxu0 %v3293
  %v3365 = vpop.f32.mrf.mxu0
  %v3366 = vadd.f32 0.0, %v3365
  %v3367 = vpop.f32.mrf.mxu0
  %v3368 = vadd.f32 0.0, %v3367
  %3369 = vmatmul.bf16.gmra.mxu0 %v3296
  %v3370 = vpop.f32.mrf.mxu0
  %v3371 = vadd.f32 0.0, %v3370
  %v3372 = vpop.f32.mrf.mxu0
  %v3373 = vadd.f32 0.0, %v3372
  %3374 = vmatmul.bf16.gmra.mxu0 %v3299
  %v3375 = vpop.f32.mrf.mxu0
  %v3376 = vadd.f32 0.0, %v3375
  %v3377 = vpop.f32.mrf.mxu0
  %v3378 = vadd.f32 0.0, %v3377
  %3379 = vmatmul.bf16.gmra.mxu0 %v3302
  %v3380 = vpop.f32.mrf.mxu0
  %v3381 = vadd.f32 0.0, %v3380
  %v3382 = vpop.f32.mrf.mxu0
  %v3383 = vadd.f32 0.0, %v3382
  %3384 = vmatmul.bf16.gmra.mxu0 %v3305
  %v3385 = vpop.f32.mrf.mxu0
  %v3386 = vadd.f32 0.0, %v3385
  %v3387 = vpop.f32.mrf.mxu0
  %v3388 = vadd.f32 0.0, %v3387
  %3389 = vmatmul.bf16.gmra.mxu0 %v3308
  %v3390 = vpop.f32.mrf.mxu0
  %v3391 = vadd.f32 0.0, %v3390
  %v3392 = vpop.f32.mrf.mxu0
  %v3393 = vadd.f32 0.0, %v3392
  %3394 = vmatmul.bf16.gmra.mxu0 %v3311
  %v3395 = vpop.f32.mrf.mxu0
  %v3396 = vadd.f32 0.0, %v3395
  %v3397 = vpop.f32.mrf.mxu0
  %v3398 = vadd.f32 0.0, %v3397
  %3399 = vmatmul.bf16.gmra.mxu0 %v3314
  %v3400 = vpop.f32.mrf.mxu0
  %v3401 = vadd.f32 0.0, %v3400
  %v3402 = vpop.f32.mrf.mxu0
  %v3403 = vadd.f32 0.0, %v3402
  %3404 = vmatmul.bf16.gmra.mxu0 %v3317
  %v3405 = vpop.f32.mrf.mxu0
  %v3406 = vadd.f32 0.0, %v3405
  %v3407 = vpop.f32.mrf.mxu0
  %v3408 = vadd.f32 0.0, %v3407
  %3409 = vmatmul.bf16.gmra.mxu0 %v3320
  %v3410 = vpop.f32.mrf.mxu0
  %v3411 = vadd.f32 0.0, %v3410
  %v3412 = vpop.f32.mrf.mxu0
  %v3413 = vadd.f32 0.0, %v3412
  %3414 = vmatmul.bf16.gmra.mxu0 %v3323
  %v3415 = vpop.f32.mrf.mxu0
  %v3416 = vadd.f32 0.0, %v3415
  %v3417 = vpop.f32.mrf.mxu0
  %v3418 = vadd.f32 0.0, %v3417
  %3419 = vmatmul.bf16.gmra.mxu0 %v3326
  %v3420 = vpop.f32.mrf.mxu0
  %v3421 = vadd.f32 0.0, %v3420
  %v3422 = vpop.f32.mrf.mxu0
  %v3423 = vadd.f32 0.0, %v3422
  %3424 = vmatmul.bf16.gmra.mxu0 %v3329
  %v3425 = vpop.f32.mrf.mxu0
  %v3426 = vadd.f32 0.0, %v3425
  %v3427 = vpop.f32.mrf.mxu0
  %v3428 = vadd.f32 0.0, %v3427
  %3429 = vdwg.mxu0
  %v3430 = vpack.c.bf16 %v3341, %v3341
  %v3431 = vpack.c.bf16 %v3343, %v3343
  %v3432 = vpack.c.bf16 %v3346, %v3346
  %v3433 = vpack.c.bf16 %v3348, %v3348
  %v3434 = vpack.c.bf16 %v3351, %v3351
  %v3435 = vpack.c.bf16 %v3353, %v3353
  %v3436 = vpack.c.bf16 %v3356, %v3356
  %v3437 = vpack.c.bf16 %v3358, %v3358
  %v3438 = vpack.c.bf16 %v3361, %v3361
  %v3439 = vpack.c.bf16 %v3363, %v3363
  %v3440 = vpack.c.bf16 %v3366, %v3366
  %v3441 = vpack.c.bf16 %v3368, %v3368
  %v3442 = vpack.c.bf16 %v3371, %v3371
  %v3443 = vpack.c.bf16 %v3373, %v3373
  %v3444 = vpack.c.bf16 %v3376, %v3376
  %v3445 = vpack.c.bf16 %v3378, %v3378
  %v3446 = vpack.c.bf16 %v3381, %v3381
  %v3447 = vpack.c.bf16 %v3383, %v3383
  %v3448 = vpack.c.bf16 %v3386, %v3386
  %v3449 = vpack.c.bf16 %v3388, %v3388
  %v3450 = vpack.c.bf16 %v3391, %v3391
  %v3451 = vpack.c.bf16 %v3393, %v3393
  %v3452 = vpack.c.bf16 %v3396, %v3396
  %v3453 = vpack.c.bf16 %v3398, %v3398
  %v3454 = vpack.c.bf16 %v3401, %v3401
  %v3455 = vpack.c.bf16 %v3403, %v3403
  %v3456 = vpack.c.bf16 %v3406, %v3406
  %v3457 = vpack.c.bf16 %v3408, %v3408
  %v3458 = vpack.c.bf16 %v3411, %v3411
  %v3459 = vpack.c.bf16 %v3413, %v3413
  %v3460 = vpack.c.bf16 %v3416, %v3416
  %v3461 = vpack.c.bf16 %v3418, %v3418
  %v3462 = vpack.c.bf16 %v3421, %v3421
  %v3463 = vpack.c.bf16 %v3423, %v3423
  %v3464 = vpack.c.bf16 %v3426, %v3426
  %v3465 = vpack.c.bf16 %v3428, %v3428
  %v3466 = vld [vmem:[%s16] sm:$0xf]
  %v3467 = vld [vmem:[%s16 + $0x4] sm:$0xf]
  %s3468 = scalar_lea.vmem %s16, 8
  %v3469 = vld [vmem:[%s3468] sm:$0xf]
  %v3470 = vld [vmem:[%s3468 + $0x4] sm:$0xf]
  %v3475 = vunpack.c.l.b16 %v3434
  %v3476 = vunpack.c.l.b16 %v3435
  %v3477 = vunpack.c.l.b16 %v3436
  %v3478 = vunpack.c.l.b16 %v3437
  %v3479 = vpack.c.b16 %v3476, %v3475
  %v3480 = vpack.c.b16 %v3478, %v3477
  %v3483 = vunpack.c.l.b16 %v3469
  %v3484 = vunpack.c.l.b16 %v3470
  %v3485 = vpack.c.b16 %v3484, %v3483
  %v3488 = vsel %vm2898, %v3479, 0
  %v3491 = vsel %vm2898, %v3480, 0
  %3493 = vmatpush.bf16.msra.mxu0 0
  %3494 = vmatpush.bf16.msra.mxu0 0
  %3495 = vmatpush.bf16.msra.mxu0 0
  %3496 = vmatpush.bf16.msra.mxu0 0
  %3497 = vmatpush.bf16.msra.mxu0 0
  %3498 = vmatpush.bf16.msra.mxu0 0
  %3499 = vmatpush.bf16.msra.mxu0 0
  %3500 = vmatpush.bf16.msra.mxu0 %v3485
  %3501 = vmatmul.bf16.gmra.mxu0 %v3488
  %v3502 = vpop.f32.mrf.mxu0
  %v3503 = vadd.f32 0.0, %v3502
  %v3504 = vpop.f32.mrf.mxu0
  %v3505 = vadd.f32 0.0, %v3504
  %3506 = vmatmul.bf16.gmra.mxu0 %v3491
  %v3507 = vpop.f32.mrf.mxu0
  %v3508 = vadd.f32 0.0, %v3507
  %v3509 = vpop.f32.mrf.mxu0
  %v3510 = vadd.f32 0.0, %v3509
  %3511 = vdwg.mxu0
  %v3516 = vunpack.c.l.b16 %v3430
  %v3517 = vunpack.c.l.b16 %v3431
  %v3518 = vunpack.c.l.b16 %v3432
  %v3519 = vunpack.c.l.b16 %v3433
  %v3520 = vpack.c.b16 %v3517, %v3516
  %v3521 = vpack.c.b16 %v3519, %v3518
  %v3524 = vunpack.c.l.b16 %v3466
  %v3525 = vunpack.c.l.b16 %v3467
  %v3526 = vpack.c.b16 %v3525, %v3524
  %v3529 = vsel %vm2898, %v3520, 0
  %v3532 = vsel %vm2898, %v3521, 0
  %3534 = vmatpush.bf16.msra.mxu0 0
  %3535 = vmatpush.bf16.msra.mxu0 0
  %3536 = vmatpush.bf16.msra.mxu0 0
  %3537 = vmatpush.bf16.msra.mxu0 0
  %3538 = vmatpush.bf16.msra.mxu0 0
  %3539 = vmatpush.bf16.msra.mxu0 0
  %3540 = vmatpush.bf16.msra.mxu0 0
  %3541 = vmatpush.bf16.msra.mxu0 %v3526
  %3542 = vmatmul.bf16.gmra.mxu0 %v3529
  %v3543 = vpop.f32.mrf.mxu0
  %v3544 = vadd.f32 %v3503, %v3543
  %v3545 = vpop.f32.mrf.mxu0
  %v3546 = vadd.f32 %v3505, %v3545
  %3547 = vmatmul.bf16.gmra.mxu0 %v3532
  %v3548 = vpop.f32.mrf.mxu0
  %v3549 = vadd.f32 %v3508, %v3548
  %v3550 = vpop.f32.mrf.mxu0
  %v3551 = vadd.f32 %v3510, %v3550
  %3552 = vdwg.mxu0
  %s3553 = scalar_lea.vmem %s16, 16
  %v3554 = vld [vmem:[%s3553] sm:$0xf]
  %v3555 = vld [vmem:[%s3553 + $0x4] sm:$0xf]
  %v3560 = vunpack.c.l.b16 %v3438
  %v3561 = vunpack.c.l.b16 %v3439
  %v3562 = vunpack.c.l.b16 %v3440
  %v3563 = vunpack.c.l.b16 %v3441
  %v3564 = vpack.c.b16 %v3561, %v3560
  %v3565 = vpack.c.b16 %v3563, %v3562
  %v3568 = vunpack.c.l.b16 %v3554
  %v3569 = vunpack.c.l.b16 %v3555
  %v3570 = vpack.c.b16 %v3569, %v3568
  %v3573 = vsel %vm2898, %v3564, 0
  %v3576 = vsel %vm2898, %v3565, 0
  %3578 = vmatpush.bf16.msra.mxu0 0
  %3579 = vmatpush.bf16.msra.mxu0 0
  %3580 = vmatpush.bf16.msra.mxu0 0
  %3581 = vmatpush.bf16.msra.mxu0 0
  %3582 = vmatpush.bf16.msra.mxu0 0
  %3583 = vmatpush.bf16.msra.mxu0 0
  %3584 = vmatpush.bf16.msra.mxu0 0
  %3585 = vmatpush.bf16.msra.mxu0 %v3570
  %3586 = vmatmul.bf16.gmra.mxu0 %v3573
  %v3587 = vpop.f32.mrf.mxu0
  %v3588 = vadd.f32 0.0, %v3587
  %v3589 = vpop.f32.mrf.mxu0
  %v3590 = vadd.f32 0.0, %v3589
  %3591 = vmatmul.bf16.gmra.mxu0 %v3576
  %v3592 = vpop.f32.mrf.mxu0
  %v3593 = vadd.f32 0.0, %v3592
  %v3594 = vpop.f32.mrf.mxu0
  %v3595 = vadd.f32 0.0, %v3594
  %3596 = vdwg.mxu0
  %v3597 = vadd.f32 %v3544, %v3588
  %v3598 = vadd.f32 %v3546, %v3590
  %v3599 = vadd.f32 %v3549, %v3593
  %v3600 = vadd.f32 %v3551, %v3595
  %s3601 = scalar_lea.vmem %s16, 24
  %v3602 = vld [vmem:[%s3601] sm:$0xf]
  %v3603 = vld [vmem:[%s3601 + $0x4] sm:$0xf]
  %v3608 = vunpack.c.l.b16 %v3442
  %v3609 = vunpack.c.l.b16 %v3443
  %v3610 = vunpack.c.l.b16 %v3444
  %v3611 = vunpack.c.l.b16 %v3445
  %v3612 = vpack.c.b16 %v3609, %v3608
  %v3613 = vpack.c.b16 %v3611, %v3610
  %v3616 = vunpack.c.l.b16 %v3602
  %v3617 = vunpack.c.l.b16 %v3603
  %v3618 = vpack.c.b16 %v3617, %v3616
  %v3621 = vsel %vm2898, %v3612, 0
  %v3624 = vsel %vm2898, %v3613, 0
  %3626 = vmatpush.bf16.msra.mxu0 0
  %3627 = vmatpush.bf16.msra.mxu0 0
  %3628 = vmatpush.bf16.msra.mxu0 0
  %3629 = vmatpush.bf16.msra.mxu0 0
  %3630 = vmatpush.bf16.msra.mxu0 0
  %3631 = vmatpush.bf16.msra.mxu0 0
  %3632 = vmatpush.bf16.msra.mxu0 0
  %3633 = vmatpush.bf16.msra.mxu0 %v3618
  %3634 = vmatmul.bf16.gmra.mxu0 %v3621
  %v3635 = vpop.f32.mrf.mxu0
  %v3636 = vadd.f32 0.0, %v3635
  %v3637 = vpop.f32.mrf.mxu0
  %v3638 = vadd.f32 0.0, %v3637
  %3639 = vmatmul.bf16.gmra.mxu0 %v3624
  %v3640 = vpop.f32.mrf.mxu0
  %v3641 = vadd.f32 0.0, %v3640
  %v3642 = vpop.f32.mrf.mxu0
  %v3643 = vadd.f32 0.0, %v3642
  %3644 = vdwg.mxu0
  %v3645 = vadd.f32 %v3597, %v3636
  %v3646 = vadd.f32 %v3598, %v3638
  %v3647 = vadd.f32 %v3599, %v3641
  %v3648 = vadd.f32 %v3600, %v3643
  %s3649 = scalar_lea.vmem %s16, 32
  %v3650 = vld [vmem:[%s3649] sm:$0xf]
  %v3651 = vld [vmem:[%s3649 + $0x4] sm:$0xf]
  %v3656 = vunpack.c.l.b16 %v3446
  %v3657 = vunpack.c.l.b16 %v3447
  %v3658 = vunpack.c.l.b16 %v3448
  %v3659 = vunpack.c.l.b16 %v3449
  %v3660 = vpack.c.b16 %v3657, %v3656
  %v3661 = vpack.c.b16 %v3659, %v3658
  %v3664 = vunpack.c.l.b16 %v3650
  %v3665 = vunpack.c.l.b16 %v3651
  %v3666 = vpack.c.b16 %v3665, %v3664
  %v3669 = vsel %vm2898, %v3660, 0
  %v3672 = vsel %vm2898, %v3661, 0
  %3674 = vmatpush.bf16.msra.mxu0 0
  %3675 = vmatpush.bf16.msra.mxu0 0
  %3676 = vmatpush.bf16.msra.mxu0 0
  %3677 = vmatpush.bf16.msra.mxu0 0
  %3678 = vmatpush.bf16.msra.mxu0 0
  %3679 = vmatpush.bf16.msra.mxu0 0
  %3680 = vmatpush.bf16.msra.mxu0 0
  %3681 = vmatpush.bf16.msra.mxu0 %v3666
  %3682 = vmatmul.bf16.gmra.mxu0 %v3669
  %v3683 = vpop.f32.mrf.mxu0
  %v3684 = vadd.f32 0.0, %v3683
  %v3685 = vpop.f32.mrf.mxu0
  %v3686 = vadd.f32 0.0, %v3685
  %3687 = vmatmul.bf16.gmra.mxu0 %v3672
  %v3688 = vpop.f32.mrf.mxu0
  %v3689 = vadd.f32 0.0, %v3688
  %v3690 = vpop.f32.mrf.mxu0
  %v3691 = vadd.f32 0.0, %v3690
  %3692 = vdwg.mxu0
  %v3693 = vadd.f32 %v3645, %v3684
  %v3694 = vadd.f32 %v3646, %v3686
  %v3695 = vadd.f32 %v3647, %v3689
  %v3696 = vadd.f32 %v3648, %v3691
  %s3697 = scalar_lea.vmem %s16, 40
  %v3698 = vld [vmem:[%s3697] sm:$0xf]
  %v3699 = vld [vmem:[%s3697 + $0x4] sm:$0xf]
  %v3704 = vunpack.c.l.b16 %v3450
  %v3705 = vunpack.c.l.b16 %v3451
  %v3706 = vunpack.c.l.b16 %v3452
  %v3707 = vunpack.c.l.b16 %v3453
  %v3708 = vpack.c.b16 %v3705, %v3704
  %v3709 = vpack.c.b16 %v3707, %v3706
  %v3712 = vunpack.c.l.b16 %v3698
  %v3713 = vunpack.c.l.b16 %v3699
  %v3714 = vpack.c.b16 %v3713, %v3712
  %v3717 = vsel %vm2898, %v3708, 0
  %v3720 = vsel %vm2898, %v3709, 0
  %3722 = vmatpush.bf16.msra.mxu0 0
  %3723 = vmatpush.bf16.msra.mxu0 0
  %3724 = vmatpush.bf16.msra.mxu0 0
  %3725 = vmatpush.bf16.msra.mxu0 0
  %3726 = vmatpush.bf16.msra.mxu0 0
  %3727 = vmatpush.bf16.msra.mxu0 0
  %3728 = vmatpush.bf16.msra.mxu0 0
  %3729 = vmatpush.bf16.msra.mxu0 %v3714
  %3730 = vmatmul.bf16.gmra.mxu0 %v3717
  %v3731 = vpop.f32.mrf.mxu0
  %v3732 = vadd.f32 0.0, %v3731
  %v3733 = vpop.f32.mrf.mxu0
  %v3734 = vadd.f32 0.0, %v3733
  %3735 = vmatmul.bf16.gmra.mxu0 %v3720
  %v3736 = vpop.f32.mrf.mxu0
  %v3737 = vadd.f32 0.0, %v3736
  %v3738 = vpop.f32.mrf.mxu0
  %v3739 = vadd.f32 0.0, %v3738
  %3740 = vdwg.mxu0
  %v3741 = vadd.f32 %v3693, %v3732
  %v3742 = vadd.f32 %v3694, %v3734
  %v3743 = vadd.f32 %v3695, %v3737
  %v3744 = vadd.f32 %v3696, %v3739
  %s3745 = scalar_lea.vmem %s16, 48
  %v3746 = vld [vmem:[%s3745] sm:$0xf]
  %v3747 = vld [vmem:[%s3745 + $0x4] sm:$0xf]
  %v3752 = vunpack.c.l.b16 %v3454
  %v3753 = vunpack.c.l.b16 %v3455
  %v3754 = vunpack.c.l.b16 %v3456
  %v3755 = vunpack.c.l.b16 %v3457
  %v3756 = vpack.c.b16 %v3753, %v3752
  %v3757 = vpack.c.b16 %v3755, %v3754
  %v3760 = vunpack.c.l.b16 %v3746
  %v3761 = vunpack.c.l.b16 %v3747
  %v3762 = vpack.c.b16 %v3761, %v3760
  %v3765 = vsel %vm2898, %v3756, 0
  %v3768 = vsel %vm2898, %v3757, 0
  %3770 = vmatpush.bf16.msra.mxu0 0
  %3771 = vmatpush.bf16.msra.mxu0 0
  %3772 = vmatpush.bf16.msra.mxu0 0
  %3773 = vmatpush.bf16.msra.mxu0 0
  %3774 = vmatpush.bf16.msra.mxu0 0
  %3775 = vmatpush.bf16.msra.mxu0 0
  %3776 = vmatpush.bf16.msra.mxu0 0
  %3777 = vmatpush.bf16.msra.mxu0 %v3762
  %3778 = vmatmul.bf16.gmra.mxu0 %v3765
  %v3779 = vpop.f32.mrf.mxu0
  %v3780 = vadd.f32 0.0, %v3779
  %v3781 = vpop.f32.mrf.mxu0
  %v3782 = vadd.f32 0.0, %v3781
  %3783 = vmatmul.bf16.gmra.mxu0 %v3768
  %v3784 = vpop.f32.mrf.mxu0
  %v3785 = vadd.f32 0.0, %v3784
  %v3786 = vpop.f32.mrf.mxu0
  %v3787 = vadd.f32 0.0, %v3786
  %3788 = vdwg.mxu0
  %v3789 = vadd.f32 %v3741, %v3780
  %v3790 = vadd.f32 %v3742, %v3782
  %v3791 = vadd.f32 %v3743, %v3785
  %v3792 = vadd.f32 %v3744, %v3787
  %s3793 = scalar_lea.vmem %s16, 56
  %v3794 = vld [vmem:[%s3793] sm:$0xf]
  %v3795 = vld [vmem:[%s3793 + $0x4] sm:$0xf]
  %v3800 = vunpack.c.l.b16 %v3458
  %v3801 = vunpack.c.l.b16 %v3459
  %v3802 = vunpack.c.l.b16 %v3460
  %v3803 = vunpack.c.l.b16 %v3461
  %v3804 = vpack.c.b16 %v3801, %v3800
  %v3805 = vpack.c.b16 %v3803, %v3802
  %v3808 = vunpack.c.l.b16 %v3794
  %v3809 = vunpack.c.l.b16 %v3795
  %v3810 = vpack.c.b16 %v3809, %v3808
  %v3813 = vsel %vm2898, %v3804, 0
  %v3816 = vsel %vm2898, %v3805, 0
  %3818 = vmatpush.bf16.msra.mxu0 0
  %3819 = vmatpush.bf16.msra.mxu0 0
  %3820 = vmatpush.bf16.msra.mxu0 0
  %3821 = vmatpush.bf16.msra.mxu0 0
  %3822 = vmatpush.bf16.msra.mxu0 0
  %3823 = vmatpush.bf16.msra.mxu0 0
  %3824 = vmatpush.bf16.msra.mxu0 0
  %3825 = vmatpush.bf16.msra.mxu0 %v3810
  %3826 = vmatmul.bf16.gmra.mxu0 %v3813
  %v3827 = vpop.f32.mrf.mxu0
  %v3828 = vadd.f32 0.0, %v3827
  %v3829 = vpop.f32.mrf.mxu0
  %v3830 = vadd.f32 0.0, %v3829
  %3831 = vmatmul.bf16.gmra.mxu0 %v3816
  %v3832 = vpop.f32.mrf.mxu0
  %v3833 = vadd.f32 0.0, %v3832
  %v3834 = vpop.f32.mrf.mxu0
  %v3835 = vadd.f32 0.0, %v3834
  %3836 = vdwg.mxu0
  %v3837 = vadd.f32 %v3789, %v3828
  %v3838 = vadd.f32 %v3790, %v3830
  %v3839 = vadd.f32 %v3791, %v3833
  %v3840 = vadd.f32 %v3792, %v3835
  %s3841 = scalar_lea.vmem %s16, 64
  %v3842 = vld [vmem:[%s3841] sm:$0xf]
  %v3843 = vld [vmem:[%s3841 + $0x4] sm:$0xf]
  %v3848 = vunpack.c.l.b16 %v3462
  %v3849 = vunpack.c.l.b16 %v3463
  %v3850 = vunpack.c.l.b16 %v3464
  %v3851 = vunpack.c.l.b16 %v3465
  %v3852 = vpack.c.b16 %v3849, %v3848
  %v3853 = vpack.c.b16 %v3851, %v3850
  %v3856 = vunpack.c.l.b16 %v3842
  %v3857 = vunpack.c.l.b16 %v3843
  %v3858 = vpack.c.b16 %v3857, %v3856
  %v3861 = vsel %vm2898, %v3852, 0
  %v3864 = vsel %vm2898, %v3853, 0
  %3866 = vmatpush.bf16.msra.mxu0 0
  %3867 = vmatpush.bf16.msra.mxu0 0
  %3868 = vmatpush.bf16.msra.mxu0 0
  %3869 = vmatpush.bf16.msra.mxu0 0
  %3870 = vmatpush.bf16.msra.mxu0 0
  %3871 = vmatpush.bf16.msra.mxu0 0
  %3872 = vmatpush.bf16.msra.mxu0 0
  %3873 = vmatpush.bf16.msra.mxu0 %v3858
  %3874 = vmatmul.bf16.gmra.mxu0 %v3861
  %v3875 = vpop.f32.mrf.mxu0
  %v3876 = vadd.f32 0.0, %v3875
  %v3877 = vpop.f32.mrf.mxu0
  %v3878 = vadd.f32 0.0, %v3877
  %3879 = vmatmul.bf16.gmra.mxu0 %v3864
  %v3880 = vpop.f32.mrf.mxu0
  %v3881 = vadd.f32 0.0, %v3880
  %v3882 = vpop.f32.mrf.mxu0
  %v3883 = vadd.f32 0.0, %v3882
  %3884 = vdwg.mxu0
  %v3885 = vadd.f32 %v3837, %v3876
  %v3886 = vadd.f32 %v3838, %v3878
  %v3887 = vadd.f32 %v3839, %v3881
  %v3888 = vadd.f32 %v3840, %v3883
  %v3890 = vperm.slane %v3149, 0
  %v3892 = vadd.f32 %v3885, %v3890
  %v3893 = vadd.f32 %v3886, %v3890
  %v3894 = vadd.f32 %v3887, %v3890
  %v3895 = vadd.f32 %v3888, %v3890
  %v3896 = vmax.f32 %v3892, 0.0
  %v3897 = vmax.f32 %v3893, 0.0
  %v3898 = vmax.f32 %v3894, 0.0
  %v3899 = vmax.f32 %v3895, 0.0
  %v3900 = vpack.c.bf16 %v3897, %v3896
  %v3901 = vpack.c.bf16 %v3899, %v3898
  %v3902 = vld [vmem:[%s18] sm:$0xf]
  %v3903 = vld [vmem:[%s18 + $0x4] sm:$0xf]
  %v3904 = vld [vmem:[%s1] sm:$0xf]
  %v3905 = vld [vmem:[%s1 + $0x4] sm:$0xf]
  %v3906 = vld [vmem:[%s1 + $0x8] sm:$0xf]
  %v3907 = vld [vmem:[%s1 + $0xc] sm:$0xf]
  %s3908 = scalar_lea.vmem %s18, 8
  %v3909 = vld [vmem:[%s3908] sm:$0xf]
  %v3910 = vld [vmem:[%s3908 + $0x4] sm:$0xf]
  %v3915 = vunpack.c.l.b16 %v3904
  %v3916 = vunpack.c.l.b16 %v3905
  %v3917 = vunpack.c.l.b16 %v3906
  %v3918 = vunpack.c.l.b16 %v3907
  %v3919 = vpack.c.b16 %v3916, %v3915
  %v3920 = vpack.c.b16 %v3918, %v3917
  %v3923 = vunpack.c.l.b16 %v3909
  %v3924 = vunpack.c.l.b16 %v3910
  %v3925 = vpack.c.b16 %v3924, %v3923
  %v3928 = vsel %vm2898, %v3919, 0
  %v3931 = vsel %vm2898, %v3920, 0
  %3933 = vmatpush.bf16.msra.mxu0 0
  %3934 = vmatpush.bf16.msra.mxu0 0
  %3935 = vmatpush.bf16.msra.mxu0 0
  %3936 = vmatpush.bf16.msra.mxu0 0
  %3937 = vmatpush.bf16.msra.mxu0 0
  %3938 = vmatpush.bf16.msra.mxu0 0
  %3939 = vmatpush.bf16.msra.mxu0 0
  %3940 = vmatpush.bf16.msra.mxu0 %v3925
  %3941 = vmatmul.bf16.gmra.mxu0 %v3928
  %v3942 = vpop.f32.mrf.mxu0
  %v3943 = vadd.f32 0.0, %v3942
  %v3944 = vpop.f32.mrf.mxu0
  %v3945 = vadd.f32 0.0, %v3944
  %3946 = vmatmul.bf16.gmra.mxu0 %v3931
  %v3947 = vpop.f32.mrf.mxu0
  %v3948 = vadd.f32 0.0, %v3947
  %v3949 = vpop.f32.mrf.mxu0
  %v3950 = vadd.f32 0.0, %v3949
  %3951 = vdwg.mxu0
  %v3954 = vunpack.c.l.b16 %v3902
  %v3955 = vunpack.c.l.b16 %v3903
  %v3956 = vpack.c.b16 %v3955, %v3954
  %v3959 = vsel %vm2898, %v3900, 0
  %v3962 = vsel %vm2898, %v3901, 0
  %3964 = vmatpush.bf16.msra.mxu0 0
  %3965 = vmatpush.bf16.msra.mxu0 0
  %3966 = vmatpush.bf16.msra.mxu0 0
  %3967 = vmatpush.bf16.msra.mxu0 0
  %3968 = vmatpush.bf16.msra.mxu0 0
  %3969 = vmatpush.bf16.msra.mxu0 0
  %3970 = vmatpush.bf16.msra.mxu0 0
  %3971 = vmatpush.bf16.msra.mxu0 %v3956
  %3972 = vmatmul.bf16.gmra.mxu0 %v3959
  %v3973 = vpop.f32.mrf.mxu0
  %v3974 = vadd.f32 %v3943, %v3973
  %v3975 = vpop.f32.mrf.mxu0
  %v3976 = vadd.f32 %v3945, %v3975
  %3977 = vmatmul.bf16.gmra.mxu0 %v3962
  %v3978 = vpop.f32.mrf.mxu0
  %v3979 = vadd.f32 %v3948, %v3978
  %v3980 = vpop.f32.mrf.mxu0
  %v3981 = vadd.f32 %v3950, %v3980
  %3982 = vdwg.mxu0
  %v3983 = vld [vmem:[%s2] sm:$0xf]
  %v3984 = vld [vmem:[%s2 + $0x4] sm:$0xf]
  %v3985 = vld [vmem:[%s2 + $0x8] sm:$0xf]
  %v3986 = vld [vmem:[%s2 + $0xc] sm:$0xf]
  %s3987 = scalar_lea.vmem %s18, 16
  %v3988 = vld [vmem:[%s3987] sm:$0xf]
  %v3989 = vld [vmem:[%s3987 + $0x4] sm:$0xf]
  %v3994 = vunpack.c.l.b16 %v3983
  %v3995 = vunpack.c.l.b16 %v3984
  %v3996 = vunpack.c.l.b16 %v3985
  %v3997 = vunpack.c.l.b16 %v3986
  %v3998 = vpack.c.b16 %v3995, %v3994
  %v3999 = vpack.c.b16 %v3997, %v3996
  %v4002 = vunpack.c.l.b16 %v3988
  %v4003 = vunpack.c.l.b16 %v3989
  %v4004 = vpack.c.b16 %v4003, %v4002
  %v4007 = vsel %vm2898, %v3998, 0
  %v4010 = vsel %vm2898, %v3999, 0
  %4012 = vmatpush.bf16.msra.mxu0 0
  %4013 = vmatpush.bf16.msra.mxu0 0
  %4014 = vmatpush.bf16.msra.mxu0 0
  %4015 = vmatpush.bf16.msra.mxu0 0
  %4016 = vmatpush.bf16.msra.mxu0 0
  %4017 = vmatpush.bf16.msra.mxu0 0
  %4018 = vmatpush.bf16.msra.mxu0 0
  %4019 = vmatpush.bf16.msra.mxu0 %v4004
  %4020 = vmatmul.bf16.gmra.mxu0 %v4007
  %v4021 = vpop.f32.mrf.mxu0
  %v4022 = vadd.f32 0.0, %v4021
  %v4023 = vpop.f32.mrf.mxu0
  %v4024 = vadd.f32 0.0, %v4023
  %4025 = vmatmul.bf16.gmra.mxu0 %v4010
  %v4026 = vpop.f32.mrf.mxu0
  %v4027 = vadd.f32 0.0, %v4026
  %v4028 = vpop.f32.mrf.mxu0
  %v4029 = vadd.f32 0.0, %v4028
  %4030 = vdwg.mxu0
  %v4031 = vadd.f32 %v3974, %v4022
  %v4032 = vadd.f32 %v3976, %v4024
  %v4033 = vadd.f32 %v3979, %v4027
  %v4034 = vadd.f32 %v3981, %v4029
  %v4035 = vpack.c.bf16 %v4032, %v4031
  %v4036 = vpack.c.bf16 %v4034, %v4033
  %v4037 = vld [vmem:[%s21] sm:$0xff]
  %v4038 = vld [vmem:[%s21 + $0x8] sm:$0xff]
  %v4039 = vld [vmem:[%s21 + $0x10] sm:$0xff]
  %v4040 = vld [vmem:[%s21 + $0x18] sm:$0xff]
  %v4041 = vld [vmem:[%s21 + $0x20] sm:$0xff]
  %v4042 = vld [vmem:[%s21 + $0x28] sm:$0xff]
  %v4043 = vld [vmem:[%s21 + $0x30] sm:$0xff]
  %v4044 = vld [vmem:[%s21 + $0x38] sm:$0xff]
  %v4045 = vld [vmem:[%s21 + $0x40] sm:$0xff]
  %v4046 = vld [vmem:[%s21 + $0x48] sm:$0xff]
  %v4047 = vld [vmem:[%s19] sm:$0xf]
  %v4048 = vld [vmem:[%s19 + $0x4] sm:$0xf]
  %v4049 = vld [vmem:[%s19 + $0x8] sm:$0xf]
  %v4050 = vld [vmem:[%s19 + $0xc] sm:$0xf]
  %v4051 = vld [vmem:[%s19 + $0x10] sm:$0xf]
  %v4052 = vld [vmem:[%s19 + $0x14] sm:$0xf]
  %v4053 = vld [vmem:[%s19 + $0x18] sm:$0xf]
  %v4054 = vld [vmem:[%s19 + $0x1c] sm:$0xf]
  %v4055 = vld [vmem:[%s19 + $0x20] sm:$0xf]
  %v4056 = vld [vmem:[%s19 + $0x24] sm:$0xf]
  %v4057 = vld [vmem:[%s19 + $0x28] sm:$0xf]
  %v4058 = vld [vmem:[%s19 + $0x2c] sm:$0xf]
  %v4059 = vld [vmem:[%s19 + $0x30] sm:$0xf]
  %v4060 = vld [vmem:[%s19 + $0x34] sm:$0xf]
  %v4061 = vld [vmem:[%s19 + $0x38] sm:$0xf]
  %v4062 = vld [vmem:[%s19 + $0x3c] sm:$0xf]
  %v4063 = vld [vmem:[%s19 + $0x40] sm:$0xf]
  %v4064 = vld [vmem:[%s19 + $0x44] sm:$0xf]
  %v4065 = vld [vmem:[%s19 + $0x48] sm:$0xf]
  %v4066 = vld [vmem:[%s19 + $0x4c] sm:$0xf]
  %v4067 = vld [vmem:[%s19 + $0x50] sm:$0xf]
  %v4068 = vld [vmem:[%s19 + $0x54] sm:$0xf]
  %v4069 = vld [vmem:[%s19 + $0x58] sm:$0xf]
  %v4070 = vld [vmem:[%s19 + $0x5c] sm:$0xf]
  %v4071 = vld [vmem:[%s19 + $0x60] sm:$0xf]
  %v4072 = vld [vmem:[%s19 + $0x64] sm:$0xf]
  %v4073 = vld [vmem:[%s19 + $0x68] sm:$0xf]
  %v4074 = vld [vmem:[%s19 + $0x6c] sm:$0xf]
  %v4075 = vld [vmem:[%s19 + $0x70] sm:$0xf]
  %v4076 = vld [vmem:[%s19 + $0x74] sm:$0xf]
  %v4077 = vld [vmem:[%s19 + $0x78] sm:$0xf]
  %v4078 = vld [vmem:[%s19 + $0x7c] sm:$0xf]
  %v4079 = vld [vmem:[%s19 + $0x80] sm:$0xf]
  %v4080 = vld [vmem:[%s19 + $0x84] sm:$0xf]
  %v4081 = vld [vmem:[%s19 + $0x88] sm:$0xf]
  %v4082 = vld [vmem:[%s19 + $0x8c] sm:$0xf]
  %v4083 = vld [vmem:[%s19 + $0x90] sm:$0xf]
  %v4084 = vld [vmem:[%s19 + $0x94] sm:$0xf]
  %v4085 = vld [vmem:[%s19 + $0x98] sm:$0xf]
  %v4086 = vld [vmem:[%s19 + $0x9c] sm:$0xf]
  %v4127 = vunpack.c.l.b16 %v4047
  %v4128 = vunpack.c.l.b16 %v4048
  %v4129 = vunpack.c.l.b16 %v4049
  %v4130 = vunpack.c.l.b16 %v4050
  %v4131 = vunpack.c.l.b16 %v4051
  %v4132 = vunpack.c.l.b16 %v4052
  %v4133 = vunpack.c.l.b16 %v4053
  %v4134 = vunpack.c.l.b16 %v4054
  %v4135 = vunpack.c.l.b16 %v4055
  %v4136 = vunpack.c.l.b16 %v4056
  %v4137 = vunpack.c.l.b16 %v4057
  %v4138 = vunpack.c.l.b16 %v4058
  %v4139 = vunpack.c.l.b16 %v4059
  %v4140 = vunpack.c.l.b16 %v4060
  %v4141 = vunpack.c.l.b16 %v4061
  %v4142 = vunpack.c.l.b16 %v4062
  %v4143 = vunpack.c.l.b16 %v4063
  %v4144 = vunpack.c.l.b16 %v4064
  %v4145 = vunpack.c.l.b16 %v4065
  %v4146 = vunpack.c.l.b16 %v4066
  %v4147 = vunpack.c.l.b16 %v4067
  %v4148 = vunpack.c.l.b16 %v4068
  %v4149 = vunpack.c.l.b16 %v4069
  %v4150 = vunpack.c.l.b16 %v4070
  %v4151 = vunpack.c.l.b16 %v4071
  %v4152 = vunpack.c.l.b16 %v4072
  %v4153 = vunpack.c.l.b16 %v4073
  %v4154 = vunpack.c.l.b16 %v4074
  %v4155 = vunpack.c.l.b16 %v4075
  %v4156 = vunpack.c.l.b16 %v4076
  %v4157 = vunpack.c.l.b16 %v4077
  %v4158 = vunpack.c.l.b16 %v4078
  %v4159 = vunpack.c.l.b16 %v4079
  %v4160 = vunpack.c.l.b16 %v4080
  %v4161 = vunpack.c.l.b16 %v4081
  %v4162 = vunpack.c.l.b16 %v4082
  %v4163 = vunpack.c.l.b16 %v4083
  %v4164 = vunpack.c.l.b16 %v4084
  %v4165 = vunpack.c.l.b16 %v4085
  %v4166 = vunpack.c.l.b16 %v4086
  %v4167 = vpack.c.b16 %v4128, %v4127
  %v4168 = vpack.c.b16 %v4130, %v4129
  %v4169 = vpack.c.b16 %v4132, %v4131
  %v4170 = vpack.c.b16 %v4134, %v4133
  %v4171 = vpack.c.b16 %v4136, %v4135
  %v4172 = vpack.c.b16 %v4138, %v4137
  %v4173 = vpack.c.b16 %v4140, %v4139
  %v4174 = vpack.c.b16 %v4142, %v4141
  %v4175 = vpack.c.b16 %v4144, %v4143
  %v4176 = vpack.c.b16 %v4146, %v4145
  %v4177 = vpack.c.b16 %v4148, %v4147
  %v4178 = vpack.c.b16 %v4150, %v4149
  %v4179 = vpack.c.b16 %v4152, %v4151
  %v4180 = vpack.c.b16 %v4154, %v4153
  %v4181 = vpack.c.b16 %v4156, %v4155
  %v4182 = vpack.c.b16 %v4158, %v4157
  %v4183 = vpack.c.b16 %v4160, %v4159
  %v4184 = vpack.c.b16 %v4162, %v4161
  %v4185 = vpack.c.b16 %v4164, %v4163
  %v4186 = vpack.c.b16 %v4166, %v4165
  %vm4187 = vcmask 261120
  %v4189 = vsel %vm4187, %v4167, 0
  %v4192 = vsel %vm4187, %v4168, 0
  %v4195 = vsel %vm4187, %v4169, 0
  %v4198 = vsel %vm4187, %v4170, 0
  %v4201 = vsel %vm4187, %v4171, 0
  %v4204 = vsel %vm4187, %v4172, 0
  %v4207 = vsel %vm4187, %v4173, 0
  %v4210 = vsel %vm4187, %v4174, 0
  %v4213 = vsel %vm4187, %v4175, 0
  %v4216 = vsel %vm4187, %v4176, 0
  %v4219 = vsel %vm4187, %v4177, 0
  %v4222 = vsel %vm4187, %v4178, 0
  %v4225 = vsel %vm4187, %v4179, 0
  %v4228 = vsel %vm4187, %v4180, 0
  %v4231 = vsel %vm4187, %v4181, 0
  %v4234 = vsel %vm4187, %v4182, 0
  %v4237 = vsel %vm4187, %v4183, 0
  %v4240 = vsel %vm4187, %v4184, 0
  %v4243 = vsel %vm4187, %v4185, 0
  %v4246 = vsel %vm4187, %v4186, 0
  %4248 = vmatpush.bf16.msra.mxu0 0
  %4249 = vmatpush.bf16.msra.mxu0 0
  %4250 = vmatpush.bf16.msra.mxu0 0
  %4251 = vmatpush.bf16.msra.mxu0 0
  %4252 = vmatpush.bf16.msra.mxu0 0
  %4253 = vmatpush.bf16.msra.mxu0 0
  %4254 = vmatpush.bf16.msra.mxu0 %v4036
  %4255 = vmatpush.bf16.msra.mxu0 %v4035
  %4256 = vmatmul.bf16.gmra.mxu0 %v4189
  %v4257 = vpop.f32.mrf.mxu0
  %v4258 = vadd.f32 0.0, %v4257
  %v4259 = vpop.f32.mrf.mxu0
  %v4260 = vadd.f32 0.0, %v4259
  %4261 = vmatmul.bf16.gmra.mxu0 %v4192
  %v4262 = vpop.f32.mrf.mxu0
  %v4263 = vadd.f32 0.0, %v4262
  %v4264 = vpop.f32.mrf.mxu0
  %v4265 = vadd.f32 0.0, %v4264
  %4266 = vmatmul.bf16.gmra.mxu0 %v4195
  %v4267 = vpop.f32.mrf.mxu0
  %v4268 = vadd.f32 0.0, %v4267
  %v4269 = vpop.f32.mrf.mxu0
  %v4270 = vadd.f32 0.0, %v4269
  %4271 = vmatmul.bf16.gmra.mxu0 %v4198
  %v4272 = vpop.f32.mrf.mxu0
  %v4273 = vadd.f32 0.0, %v4272
  %v4274 = vpop.f32.mrf.mxu0
  %v4275 = vadd.f32 0.0, %v4274
  %4276 = vmatmul.bf16.gmra.mxu0 %v4201
  %v4277 = vpop.f32.mrf.mxu0
  %v4278 = vadd.f32 0.0, %v4277
  %v4279 = vpop.f32.mrf.mxu0
  %v4280 = vadd.f32 0.0, %v4279
  %4281 = vmatmul.bf16.gmra.mxu0 %v4204
  %v4282 = vpop.f32.mrf.mxu0
  %v4283 = vadd.f32 0.0, %v4282
  %v4284 = vpop.f32.mrf.mxu0
  %v4285 = vadd.f32 0.0, %v4284
  %4286 = vmatmul.bf16.gmra.mxu0 %v4207
  %v4287 = vpop.f32.mrf.mxu0
  %v4288 = vadd.f32 0.0, %v4287
  %v4289 = vpop.f32.mrf.mxu0
  %v4290 = vadd.f32 0.0, %v4289
  %4291 = vmatmul.bf16.gmra.mxu0 %v4210
  %v4292 = vpop.f32.mrf.mxu0
  %v4293 = vadd.f32 0.0, %v4292
  %v4294 = vpop.f32.mrf.mxu0
  %v4295 = vadd.f32 0.0, %v4294
  %4296 = vmatmul.bf16.gmra.mxu0 %v4213
  %v4297 = vpop.f32.mrf.mxu0
  %v4298 = vadd.f32 0.0, %v4297
  %v4299 = vpop.f32.mrf.mxu0
  %v4300 = vadd.f32 0.0, %v4299
  %4301 = vmatmul.bf16.gmra.mxu0 %v4216
  %v4302 = vpop.f32.mrf.mxu0
  %v4303 = vadd.f32 0.0, %v4302
  %v4304 = vpop.f32.mrf.mxu0
  %v4305 = vadd.f32 0.0, %v4304
  %4306 = vmatmul.bf16.gmra.mxu0 %v4219
  %v4307 = vpop.f32.mrf.mxu0
  %v4308 = vadd.f32 0.0, %v4307
  %v4309 = vpop.f32.mrf.mxu0
  %v4310 = vadd.f32 0.0, %v4309
  %4311 = vmatmul.bf16.gmra.mxu0 %v4222
  %v4312 = vpop.f32.mrf.mxu0
  %v4313 = vadd.f32 0.0, %v4312
  %v4314 = vpop.f32.mrf.mxu0
  %v4315 = vadd.f32 0.0, %v4314
  %4316 = vmatmul.bf16.gmra.mxu0 %v4225
  %v4317 = vpop.f32.mrf.mxu0
  %v4318 = vadd.f32 0.0, %v4317
  %v4319 = vpop.f32.mrf.mxu0
  %v4320 = vadd.f32 0.0, %v4319
  %4321 = vmatmul.bf16.gmra.mxu0 %v4228
  %v4322 = vpop.f32.mrf.mxu0
  %v4323 = vadd.f32 0.0, %v4322
  %v4324 = vpop.f32.mrf.mxu0
  %v4325 = vadd.f32 0.0, %v4324
  %4326 = vmatmul.bf16.gmra.mxu0 %v4231
  %v4327 = vpop.f32.mrf.mxu0
  %v4328 = vadd.f32 0.0, %v4327
  %v4329 = vpop.f32.mrf.mxu0
  %v4330 = vadd.f32 0.0, %v4329
  %4331 = vmatmul.bf16.gmra.mxu0 %v4234
  %v4332 = vpop.f32.mrf.mxu0
  %v4333 = vadd.f32 0.0, %v4332
  %v4334 = vpop.f32.mrf.mxu0
  %v4335 = vadd.f32 0.0, %v4334
  %4336 = vmatmul.bf16.gmra.mxu0 %v4237
  %v4337 = vpop.f32.mrf.mxu0
  %v4338 = vadd.f32 0.0, %v4337
  %v4339 = vpop.f32.mrf.mxu0
  %v4340 = vadd.f32 0.0, %v4339
  %4341 = vmatmul.bf16.gmra.mxu0 %v4240
  %v4342 = vpop.f32.mrf.mxu0
  %v4343 = vadd.f32 0.0, %v4342
  %v4344 = vpop.f32.mrf.mxu0
  %v4345 = vadd.f32 0.0, %v4344
  %4346 = vmatmul.bf16.gmra.mxu0 %v4243
  %v4347 = vpop.f32.mrf.mxu0
  %v4348 = vadd.f32 0.0, %v4347
  %v4349 = vpop.f32.mrf.mxu0
  %v4350 = vadd.f32 0.0, %v4349
  %4351 = vmatmul.bf16.gmra.mxu0 %v4246
  %v4352 = vpop.f32.mrf.mxu0
  %v4353 = vadd.f32 0.0, %v4352
  %v4354 = vpop.f32.mrf.mxu0
  %v4355 = vadd.f32 0.0, %v4354
  %4356 = vdwg.mxu0
  %v4357 = vpack.c.bf16 %v4258, %v4258
  %v4358 = vpack.c.bf16 %v4260, %v4260
  %v4359 = vpack.c.bf16 %v4263, %v4263
  %v4360 = vpack.c.bf16 %v4265, %v4265
  %v4361 = vpack.c.bf16 %v4268, %v4268
  %v4362 = vpack.c.bf16 %v4270, %v4270
  %v4363 = vpack.c.bf16 %v4273, %v4273
  %v4364 = vpack.c.bf16 %v4275, %v4275
  %v4365 = vpack.c.bf16 %v4278, %v4278
  %v4366 = vpack.c.bf16 %v4280, %v4280
  %v4367 = vpack.c.bf16 %v4283, %v4283
  %v4368 = vpack.c.bf16 %v4285, %v4285
  %v4369 = vpack.c.bf16 %v4288, %v4288
  %v4370 = vpack.c.bf16 %v4290, %v4290
  %v4371 = vpack.c.bf16 %v4293, %v4293
  %v4372 = vpack.c.bf16 %v4295, %v4295
  %v4373 = vpack.c.bf16 %v4298, %v4298
  %v4374 = vpack.c.bf16 %v4300, %v4300
  %v4375 = vpack.c.bf16 %v4303, %v4303
  %v4376 = vpack.c.bf16 %v4305, %v4305
  %v4377 = vpack.c.bf16 %v4308, %v4308
  %v4378 = vpack.c.bf16 %v4310, %v4310
  %v4379 = vpack.c.bf16 %v4313, %v4313
  %v4380 = vpack.c.bf16 %v4315, %v4315
  %v4381 = vpack.c.bf16 %v4318, %v4318
  %v4382 = vpack.c.bf16 %v4320, %v4320
  %v4383 = vpack.c.bf16 %v4323, %v4323
  %v4384 = vpack.c.bf16 %v4325, %v4325
  %v4385 = vpack.c.bf16 %v4328, %v4328
  %v4386 = vpack.c.bf16 %v4330, %v4330
  %v4387 = vpack.c.bf16 %v4333, %v4333
  %v4388 = vpack.c.bf16 %v4335, %v4335
  %v4389 = vpack.c.bf16 %v4338, %v4338
  %v4390 = vpack.c.bf16 %v4340, %v4340
  %v4391 = vpack.c.bf16 %v4343, %v4343
  %v4392 = vpack.c.bf16 %v4345, %v4345
  %v4393 = vpack.c.bf16 %v4348, %v4348
  %v4394 = vpack.c.bf16 %v4350, %v4350
  %v4395 = vpack.c.bf16 %v4353, %v4353
  %v4396 = vpack.c.bf16 %v4355, %v4355
  %v4397 = vld [vmem:[%s20] sm:$0xf]
  %v4398 = vld [vmem:[%s20 + $0x4] sm:$0xf]
  %v4399 = vld [vmem:[%s20 + $0x8] sm:$0xf]
  %v4400 = vld [vmem:[%s20 + $0xc] sm:$0xf]
  %v4401 = vld [vmem:[%s20 + $0x10] sm:$0xf]
  %v4402 = vld [vmem:[%s20 + $0x14] sm:$0xf]
  %v4403 = vld [vmem:[%s20 + $0x18] sm:$0xf]
  %v4404 = vld [vmem:[%s20 + $0x1c] sm:$0xf]
  %s4405 = scalar_lea.vmem %s20, 32
  %v4406 = vld [vmem:[%s4405] sm:$0xf]
  %v4407 = vld [vmem:[%s4405 + $0x4] sm:$0xf]
  %v4408 = vld [vmem:[%s4405 + $0x8] sm:$0xf]
  %v4409 = vld [vmem:[%s4405 + $0xc] sm:$0xf]
  %v4410 = vld [vmem:[%s4405 + $0x10] sm:$0xf]
  %v4411 = vld [vmem:[%s4405 + $0x14] sm:$0xf]
  %v4412 = vld [vmem:[%s4405 + $0x18] sm:$0xf]
  %v4413 = vld [vmem:[%s4405 + $0x1c] sm:$0xf]
  %v4424 = vunpack.c.l.b16 %v4367
  %v4425 = vunpack.c.l.b16 %v4368
  %v4426 = vunpack.c.l.b16 %v4369
  %v4427 = vunpack.c.l.b16 %v4370
  %v4428 = vunpack.c.l.b16 %v4371
  %v4429 = vunpack.c.l.b16 %v4372
  %v4430 = vunpack.c.l.b16 %v4373
  %v4431 = vunpack.c.l.b16 %v4374
  %v4432 = vunpack.c.l.b16 %v4375
  %v4433 = vunpack.c.l.b16 %v4376
  %v4434 = vpack.c.b16 %v4425, %v4424
  %v4435 = vpack.c.b16 %v4427, %v4426
  %v4436 = vpack.c.b16 %v4429, %v4428
  %v4437 = vpack.c.b16 %v4431, %v4430
  %v4438 = vpack.c.b16 %v4433, %v4432
  %v4447 = vunpack.c.l.b16 %v4406
  %v4448 = vunpack.c.l.b16 %v4407
  %v4449 = vunpack.c.l.b16 %v4408
  %v4450 = vunpack.c.l.b16 %v4409
  %v4451 = vunpack.c.l.b16 %v4410
  %v4452 = vunpack.c.l.b16 %v4411
  %v4453 = vunpack.c.l.b16 %v4412
  %v4454 = vunpack.c.l.b16 %v4413
  %v4455 = vpack.c.b16 %v4448, %v4447
  %v4456 = vpack.c.b16 %v4450, %v4449
  %v4457 = vpack.c.b16 %v4452, %v4451
  %v4458 = vpack.c.b16 %v4454, %v4453
  %v4464 = vsel %vm291, %v4434, 0
  %v4467 = vsel %vm291, %v4435, 0
  %v4470 = vsel %vm291, %v4436, 0
  %v4473 = vsel %vm291, %v4437, 0
  %v4476 = vsel %vm291, %v4438, 0
  %4478 = vmatpush.bf16.msra.mxu0 0
  %4479 = vmatpush.bf16.msra.mxu0 0
  %4480 = vmatpush.bf16.msra.mxu0 0
  %4481 = vmatpush.bf16.msra.mxu0 0
  %4482 = vmatpush.bf16.msra.mxu0 %v4458
  %4483 = vmatpush.bf16.msra.mxu0 %v4457
  %4484 = vmatpush.bf16.msra.mxu0 %v4456
  %4485 = vmatpush.bf16.msra.mxu0 %v4455
  %4486 = vmatmul.bf16.gmra.mxu0 %v4464
  %v4487 = vpop.f32.mrf.mxu0
  %v4488 = vadd.f32 0.0, %v4487
  %v4489 = vpop.f32.mrf.mxu0
  %v4490 = vadd.f32 0.0, %v4489
  %4491 = vmatmul.bf16.gmra.mxu0 %v4467
  %v4492 = vpop.f32.mrf.mxu0
  %v4493 = vadd.f32 0.0, %v4492
  %v4494 = vpop.f32.mrf.mxu0
  %v4495 = vadd.f32 0.0, %v4494
  %4496 = vmatmul.bf16.gmra.mxu0 %v4470
  %v4497 = vpop.f32.mrf.mxu0
  %v4498 = vadd.f32 0.0, %v4497
  %v4499 = vpop.f32.mrf.mxu0
  %v4500 = vadd.f32 0.0, %v4499
  %4501 = vmatmul.bf16.gmra.mxu0 %v4473
  %v4502 = vpop.f32.mrf.mxu0
  %v4503 = vadd.f32 0.0, %v4502
  %v4504 = vpop.f32.mrf.mxu0
  %v4505 = vadd.f32 0.0, %v4504
  %4506 = vmatmul.bf16.gmra.mxu0 %v4476
  %v4507 = vpop.f32.mrf.mxu0
  %v4508 = vadd.f32 0.0, %v4507
  %v4509 = vpop.f32.mrf.mxu0
  %v4510 = vadd.f32 0.0, %v4509
  %4511 = vdwg.mxu0
  %v4522 = vunpack.c.l.b16 %v4357
  %v4523 = vunpack.c.l.b16 %v4358
  %v4524 = vunpack.c.l.b16 %v4359
  %v4525 = vunpack.c.l.b16 %v4360
  %v4526 = vunpack.c.l.b16 %v4361
  %v4527 = vunpack.c.l.b16 %v4362
  %v4528 = vunpack.c.l.b16 %v4363
  %v4529 = vunpack.c.l.b16 %v4364
  %v4530 = vunpack.c.l.b16 %v4365
  %v4531 = vunpack.c.l.b16 %v4366
  %v4532 = vpack.c.b16 %v4523, %v4522
  %v4533 = vpack.c.b16 %v4525, %v4524
  %v4534 = vpack.c.b16 %v4527, %v4526
  %v4535 = vpack.c.b16 %v4529, %v4528
  %v4536 = vpack.c.b16 %v4531, %v4530
  %v4545 = vunpack.c.l.b16 %v4397
  %v4546 = vunpack.c.l.b16 %v4398
  %v4547 = vunpack.c.l.b16 %v4399
  %v4548 = vunpack.c.l.b16 %v4400
  %v4549 = vunpack.c.l.b16 %v4401
  %v4550 = vunpack.c.l.b16 %v4402
  %v4551 = vunpack.c.l.b16 %v4403
  %v4552 = vunpack.c.l.b16 %v4404
  %v4553 = vpack.c.b16 %v4546, %v4545
  %v4554 = vpack.c.b16 %v4548, %v4547
  %v4555 = vpack.c.b16 %v4550, %v4549
  %v4556 = vpack.c.b16 %v4552, %v4551
  %v4562 = vsel %vm291, %v4532, 0
  %v4565 = vsel %vm291, %v4533, 0
  %v4568 = vsel %vm291, %v4534, 0
  %v4571 = vsel %vm291, %v4535, 0
  %v4574 = vsel %vm291, %v4536, 0
  %4576 = vmatpush.bf16.msra.mxu0 0
  %4577 = vmatpush.bf16.msra.mxu0 0
  %4578 = vmatpush.bf16.msra.mxu0 0
  %4579 = vmatpush.bf16.msra.mxu0 0
  %4580 = vmatpush.bf16.msra.mxu0 %v4556
  %4581 = vmatpush.bf16.msra.mxu0 %v4555
  %4582 = vmatpush.bf16.msra.mxu0 %v4554
  %4583 = vmatpush.bf16.msra.mxu0 %v4553
  %4584 = vmatmul.bf16.gmra.mxu0 %v4562
  %v4585 = vpop.f32.mrf.mxu0
  %v4586 = vadd.f32 %v4488, %v4585
  %v4587 = vpop.f32.mrf.mxu0
  %v4588 = vadd.f32 %v4490, %v4587
  %4589 = vmatmul.bf16.gmra.mxu0 %v4565
  %v4590 = vpop.f32.mrf.mxu0
  %v4591 = vadd.f32 %v4493, %v4590
  %v4592 = vpop.f32.mrf.mxu0
  %v4593 = vadd.f32 %v4495, %v4592
  %4594 = vmatmul.bf16.gmra.mxu0 %v4568
  %v4595 = vpop.f32.mrf.mxu0
  %v4596 = vadd.f32 %v4498, %v4595
  %v4597 = vpop.f32.mrf.mxu0
  %v4598 = vadd.f32 %v4500, %v4597
  %4599 = vmatmul.bf16.gmra.mxu0 %v4571
  %v4600 = vpop.f32.mrf.mxu0
  %v4601 = vadd.f32 %v4503, %v4600
  %v4602 = vpop.f32.mrf.mxu0
  %v4603 = vadd.f32 %v4505, %v4602
  %4604 = vmatmul.bf16.gmra.mxu0 %v4574
  %v4605 = vpop.f32.mrf.mxu0
  %v4606 = vadd.f32 %v4508, %v4605
  %v4607 = vpop.f32.mrf.mxu0
  %v4608 = vadd.f32 %v4510, %v4607
  %4609 = vdwg.mxu0
  %s4610 = scalar_lea.vmem %s20, 64
  %v4611 = vld [vmem:[%s4610] sm:$0xf]
  %v4612 = vld [vmem:[%s4610 + $0x4] sm:$0xf]
  %v4613 = vld [vmem:[%s4610 + $0x8] sm:$0xf]
  %v4614 = vld [vmem:[%s4610 + $0xc] sm:$0xf]
  %v4615 = vld [vmem:[%s4610 + $0x10] sm:$0xf]
  %v4616 = vld [vmem:[%s4610 + $0x14] sm:$0xf]
  %v4617 = vld [vmem:[%s4610 + $0x18] sm:$0xf]
  %v4618 = vld [vmem:[%s4610 + $0x1c] sm:$0xf]
  %v4629 = vunpack.c.l.b16 %v4377
  %v4630 = vunpack.c.l.b16 %v4378
  %v4631 = vunpack.c.l.b16 %v4379
  %v4632 = vunpack.c.l.b16 %v4380
  %v4633 = vunpack.c.l.b16 %v4381
  %v4634 = vunpack.c.l.b16 %v4382
  %v4635 = vunpack.c.l.b16 %v4383
  %v4636 = vunpack.c.l.b16 %v4384
  %v4637 = vunpack.c.l.b16 %v4385
  %v4638 = vunpack.c.l.b16 %v4386
  %v4639 = vpack.c.b16 %v4630, %v4629
  %v4640 = vpack.c.b16 %v4632, %v4631
  %v4641 = vpack.c.b16 %v4634, %v4633
  %v4642 = vpack.c.b16 %v4636, %v4635
  %v4643 = vpack.c.b16 %v4638, %v4637
  %v4652 = vunpack.c.l.b16 %v4611
  %v4653 = vunpack.c.l.b16 %v4612
  %v4654 = vunpack.c.l.b16 %v4613
  %v4655 = vunpack.c.l.b16 %v4614
  %v4656 = vunpack.c.l.b16 %v4615
  %v4657 = vunpack.c.l.b16 %v4616
  %v4658 = vunpack.c.l.b16 %v4617
  %v4659 = vunpack.c.l.b16 %v4618
  %v4660 = vpack.c.b16 %v4653, %v4652
  %v4661 = vpack.c.b16 %v4655, %v4654
  %v4662 = vpack.c.b16 %v4657, %v4656
  %v4663 = vpack.c.b16 %v4659, %v4658
  %v4669 = vsel %vm291, %v4639, 0
  %v4672 = vsel %vm291, %v4640, 0
  %v4675 = vsel %vm291, %v4641, 0
  %v4678 = vsel %vm291, %v4642, 0
  %v4681 = vsel %vm291, %v4643, 0
  %4683 = vmatpush.bf16.msra.mxu0 0
  %4684 = vmatpush.bf16.msra.mxu0 0
  %4685 = vmatpush.bf16.msra.mxu0 0
  %4686 = vmatpush.bf16.msra.mxu0 0
  %4687 = vmatpush.bf16.msra.mxu0 %v4663
  %4688 = vmatpush.bf16.msra.mxu0 %v4662
  %4689 = vmatpush.bf16.msra.mxu0 %v4661
  %4690 = vmatpush.bf16.msra.mxu0 %v4660
  %4691 = vmatmul.bf16.gmra.mxu0 %v4669
  %v4692 = vpop.f32.mrf.mxu0
  %v4693 = vadd.f32 0.0, %v4692
  %v4694 = vpop.f32.mrf.mxu0
  %v4695 = vadd.f32 0.0, %v4694
  %4696 = vmatmul.bf16.gmra.mxu0 %v4672
  %v4697 = vpop.f32.mrf.mxu0
  %v4698 = vadd.f32 0.0, %v4697
  %v4699 = vpop.f32.mrf.mxu0
  %v4700 = vadd.f32 0.0, %v4699
  %4701 = vmatmul.bf16.gmra.mxu0 %v4675
  %v4702 = vpop.f32.mrf.mxu0
  %v4703 = vadd.f32 0.0, %v4702
  %v4704 = vpop.f32.mrf.mxu0
  %v4705 = vadd.f32 0.0, %v4704
  %4706 = vmatmul.bf16.gmra.mxu0 %v4678
  %v4707 = vpop.f32.mrf.mxu0
  %v4708 = vadd.f32 0.0, %v4707
  %v4709 = vpop.f32.mrf.mxu0
  %v4710 = vadd.f32 0.0, %v4709
  %4711 = vmatmul.bf16.gmra.mxu0 %v4681
  %v4712 = vpop.f32.mrf.mxu0
  %v4713 = vadd.f32 0.0, %v4712
  %v4714 = vpop.f32.mrf.mxu0
  %v4715 = vadd.f32 0.0, %v4714
  %4716 = vdwg.mxu0
  %v4717 = vadd.f32 %v4586, %v4693
  %v4718 = vadd.f32 %v4588, %v4695
  %v4719 = vadd.f32 %v4591, %v4698
  %v4720 = vadd.f32 %v4593, %v4700
  %v4721 = vadd.f32 %v4596, %v4703
  %v4722 = vadd.f32 %v4598, %v4705
  %v4723 = vadd.f32 %v4601, %v4708
  %v4724 = vadd.f32 %v4603, %v4710
  %v4725 = vadd.f32 %v4606, %v4713
  %v4726 = vadd.f32 %v4608, %v4715
  %s4727 = scalar_lea.vmem %s20, 96
  %v4728 = vld [vmem:[%s4727] sm:$0xf]
  %v4729 = vld [vmem:[%s4727 + $0x4] sm:$0xf]
  %v4730 = vld [vmem:[%s4727 + $0x8] sm:$0xf]
  %v4731 = vld [vmem:[%s4727 + $0xc] sm:$0xf]
  %v4732 = vld [vmem:[%s4727 + $0x10] sm:$0xf]
  %v4733 = vld [vmem:[%s4727 + $0x14] sm:$0xf]
  %v4734 = vld [vmem:[%s4727 + $0x18] sm:$0xf]
  %v4735 = vld [vmem:[%s4727 + $0x1c] sm:$0xf]
  %v4746 = vunpack.c.l.b16 %v4387
  %v4747 = vunpack.c.l.b16 %v4388
  %v4748 = vunpack.c.l.b16 %v4389
  %v4749 = vunpack.c.l.b16 %v4390
  %v4750 = vunpack.c.l.b16 %v4391
  %v4751 = vunpack.c.l.b16 %v4392
  %v4752 = vunpack.c.l.b16 %v4393
  %v4753 = vunpack.c.l.b16 %v4394
  %v4754 = vunpack.c.l.b16 %v4395
  %v4755 = vunpack.c.l.b16 %v4396
  %v4756 = vpack.c.b16 %v4747, %v4746
  %v4757 = vpack.c.b16 %v4749, %v4748
  %v4758 = vpack.c.b16 %v4751, %v4750
  %v4759 = vpack.c.b16 %v4753, %v4752
  %v4760 = vpack.c.b16 %v4755, %v4754
  %v4769 = vunpack.c.l.b16 %v4728
  %v4770 = vunpack.c.l.b16 %v4729
  %v4771 = vunpack.c.l.b16 %v4730
  %v4772 = vunpack.c.l.b16 %v4731
  %v4773 = vunpack.c.l.b16 %v4732
  %v4774 = vunpack.c.l.b16 %v4733
  %v4775 = vunpack.c.l.b16 %v4734
  %v4776 = vunpack.c.l.b16 %v4735
  %v4777 = vpack.c.b16 %v4770, %v4769
  %v4778 = vpack.c.b16 %v4772, %v4771
  %v4779 = vpack.c.b16 %v4774, %v4773
  %v4780 = vpack.c.b16 %v4776, %v4775
  %v4786 = vsel %vm291, %v4756, 0
  %v4789 = vsel %vm291, %v4757, 0
  %v4792 = vsel %vm291, %v4758, 0
  %v4795 = vsel %vm291, %v4759, 0
  %v4798 = vsel %vm291, %v4760, 0
  %4800 = vmatpush.bf16.msra.mxu0 0
  %4801 = vmatpush.bf16.msra.mxu0 0
  %4802 = vmatpush.bf16.msra.mxu0 0
  %4803 = vmatpush.bf16.msra.mxu0 0
  %4804 = vmatpush.bf16.msra.mxu0 %v4780
  %4805 = vmatpush.bf16.msra.mxu0 %v4779
  %4806 = vmatpush.bf16.msra.mxu0 %v4778
  %4807 = vmatpush.bf16.msra.mxu0 %v4777
  %4808 = vmatmul.bf16.gmra.mxu0 %v4786
  %v4809 = vpop.f32.mrf.mxu0
  %v4810 = vadd.f32 0.0, %v4809
  %v4811 = vpop.f32.mrf.mxu0
  %v4812 = vadd.f32 0.0, %v4811
  %4813 = vmatmul.bf16.gmra.mxu0 %v4789
  %v4814 = vpop.f32.mrf.mxu0
  %v4815 = vadd.f32 0.0, %v4814
  %v4816 = vpop.f32.mrf.mxu0
  %v4817 = vadd.f32 0.0, %v4816
  %4818 = vmatmul.bf16.gmra.mxu0 %v4792
  %v4819 = vpop.f32.mrf.mxu0
  %v4820 = vadd.f32 0.0, %v4819
  %v4821 = vpop.f32.mrf.mxu0
  %v4822 = vadd.f32 0.0, %v4821
  %4823 = vmatmul.bf16.gmra.mxu0 %v4795
  %v4824 = vpop.f32.mrf.mxu0
  %v4825 = vadd.f32 0.0, %v4824
  %v4826 = vpop.f32.mrf.mxu0
  %v4827 = vadd.f32 0.0, %v4826
  %4828 = vmatmul.bf16.gmra.mxu0 %v4798
  %v4829 = vpop.f32.mrf.mxu0
  %v4830 = vadd.f32 0.0, %v4829
  %v4831 = vpop.f32.mrf.mxu0
  %v4832 = vadd.f32 0.0, %v4831
  %4833 = vdwg.mxu0
  %v4834 = vadd.f32 %v4717, %v4810
  %v4835 = vadd.f32 %v4718, %v4812
  %v4836 = vadd.f32 %v4719, %v4815
  %v4837 = vadd.f32 %v4720, %v4817
  %v4838 = vadd.f32 %v4721, %v4820
  %v4839 = vadd.f32 %v4722, %v4822
  %v4840 = vadd.f32 %v4723, %v4825
  %v4841 = vadd.f32 %v4724, %v4827
  %v4842 = vadd.f32 %v4725, %v4830
  %v4843 = vadd.f32 %v4726, %v4832
  %v4844 = vadd.f32 %v4834, %v4037
  %v4845 = vadd.f32 %v4835, %v4038
  %v4846 = vadd.f32 %v4836, %v4039
  %v4847 = vadd.f32 %v4837, %v4040
  %v4848 = vadd.f32 %v4838, %v4041
  %v4849 = vadd.f32 %v4839, %v4042
  %v4850 = vadd.f32 %v4840, %v4043
  %v4851 = vadd.f32 %v4841, %v4044
  %v4852 = vadd.f32 %v4842, %v4045
  %v4853 = vadd.f32 %v4843, %v4046
  %v4854 = vmax.f32 %v4844, 0.0
  %v4855 = vmax.f32 %v4845, 0.0
  %v4856 = vmax.f32 %v4846, 0.0
  %v4857 = vmax.f32 %v4847, 0.0
  %v4858 = vmax.f32 %v4848, 0.0
  %v4859 = vmax.f32 %v4849, 0.0
  %v4860 = vmax.f32 %v4850, 0.0
  %v4861 = vmax.f32 %v4851, 0.0
  %v4862 = vmax.f32 %v4852, 0.0
  %v4863 = vmax.f32 %v4853, 0.0
  %v4864 = vpack.c.bf16 %v4855, %v4854
  %v4865 = vpack.c.bf16 %v4857, %v4856
  %v4866 = vpack.c.bf16 %v4859, %v4858
  %v4867 = vpack.c.bf16 %v4861, %v4860
  %v4868 = vpack.c.bf16 %v4863, %v4862
  %v4869 = vld [vmem:[%s24] sm:$0x1]
  %v4870 = vld [vmem:[%s22] sm:$0xf]
  %v4871 = vld [vmem:[%s22 + $0x4] sm:$0xf]
  %v4872 = vld [vmem:[%s22 + $0x8] sm:$0xf]
  %v4873 = vld [vmem:[%s22 + $0xc] sm:$0xf]
  %v4874 = vld [vmem:[%s22 + $0x10] sm:$0xf]
  %v4875 = vld [vmem:[%s22 + $0x14] sm:$0xf]
  %v4876 = vld [vmem:[%s22 + $0x18] sm:$0xf]
  %v4877 = vld [vmem:[%s22 + $0x1c] sm:$0xf]
  %v4878 = vld [vmem:[%s22 + $0x20] sm:$0xf]
  %v4879 = vld [vmem:[%s22 + $0x24] sm:$0xf]
  %v4880 = vld [vmem:[%s22 + $0x28] sm:$0xf]
  %v4881 = vld [vmem:[%s22 + $0x2c] sm:$0xf]
  %v4882 = vld [vmem:[%s22 + $0x30] sm:$0xf]
  %v4883 = vld [vmem:[%s22 + $0x34] sm:$0xf]
  %v4884 = vld [vmem:[%s22 + $0x38] sm:$0xf]
  %v4885 = vld [vmem:[%s22 + $0x3c] sm:$0xf]
  %v4886 = vld [vmem:[%s22 + $0x40] sm:$0xf]
  %v4887 = vld [vmem:[%s22 + $0x44] sm:$0xf]
  %v4888 = vld [vmem:[%s22 + $0x48] sm:$0xf]
  %v4889 = vld [vmem:[%s22 + $0x4c] sm:$0xf]
  %v4890 = vld [vmem:[%s22 + $0x50] sm:$0xf]
  %v4891 = vld [vmem:[%s22 + $0x54] sm:$0xf]
  %v4892 = vld [vmem:[%s22 + $0x58] sm:$0xf]
  %v4893 = vld [vmem:[%s22 + $0x5c] sm:$0xf]
  %v4894 = vld [vmem:[%s22 + $0x60] sm:$0xf]
  %v4895 = vld [vmem:[%s22 + $0x64] sm:$0xf]
  %v4896 = vld [vmem:[%s22 + $0x68] sm:$0xf]
  %v4897 = vld [vmem:[%s22 + $0x6c] sm:$0xf]
  %v4898 = vld [vmem:[%s22 + $0x70] sm:$0xf]
  %v4899 = vld [vmem:[%s22 + $0x74] sm:$0xf]
  %v4900 = vld [vmem:[%s22 + $0x78] sm:$0xf]
  %v4901 = vld [vmem:[%s22 + $0x7c] sm:$0xf]
  %v4934 = vunpack.c.l.b16 %v4870
  %v4935 = vunpack.c.l.b16 %v4871
  %v4936 = vunpack.c.l.b16 %v4872
  %v4937 = vunpack.c.l.b16 %v4873
  %v4938 = vunpack.c.l.b16 %v4874
  %v4939 = vunpack.c.l.b16 %v4875
  %v4940 = vunpack.c.l.b16 %v4876
  %v4941 = vunpack.c.l.b16 %v4877
  %v4942 = vunpack.c.l.b16 %v4878
  %v4943 = vunpack.c.l.b16 %v4879
  %v4944 = vunpack.c.l.b16 %v4880
  %v4945 = vunpack.c.l.b16 %v4881
  %v4946 = vunpack.c.l.b16 %v4882
  %v4947 = vunpack.c.l.b16 %v4883
  %v4948 = vunpack.c.l.b16 %v4884
  %v4949 = vunpack.c.l.b16 %v4885
  %v4950 = vunpack.c.l.b16 %v4886
  %v4951 = vunpack.c.l.b16 %v4887
  %v4952 = vunpack.c.l.b16 %v4888
  %v4953 = vunpack.c.l.b16 %v4889
  %v4954 = vunpack.c.l.b16 %v4890
  %v4955 = vunpack.c.l.b16 %v4891
  %v4956 = vunpack.c.l.b16 %v4892
  %v4957 = vunpack.c.l.b16 %v4893
  %v4958 = vunpack.c.l.b16 %v4894
  %v4959 = vunpack.c.l.b16 %v4895
  %v4960 = vunpack.c.l.b16 %v4896
  %v4961 = vunpack.c.l.b16 %v4897
  %v4962 = vunpack.c.l.b16 %v4898
  %v4963 = vunpack.c.l.b16 %v4899
  %v4964 = vunpack.c.l.b16 %v4900
  %v4965 = vunpack.c.l.b16 %v4901
  %v4966 = vpack.c.b16 %v4935, %v4934
  %v4967 = vpack.c.b16 %v4937, %v4936
  %v4968 = vpack.c.b16 %v4939, %v4938
  %v4969 = vpack.c.b16 %v4941, %v4940
  %v4970 = vpack.c.b16 %v4943, %v4942
  %v4971 = vpack.c.b16 %v4945, %v4944
  %v4972 = vpack.c.b16 %v4947, %v4946
  %v4973 = vpack.c.b16 %v4949, %v4948
  %v4974 = vpack.c.b16 %v4951, %v4950
  %v4975 = vpack.c.b16 %v4953, %v4952
  %v4976 = vpack.c.b16 %v4955, %v4954
  %v4977 = vpack.c.b16 %v4957, %v4956
  %v4978 = vpack.c.b16 %v4959, %v4958
  %v4979 = vpack.c.b16 %v4961, %v4960
  %v4980 = vpack.c.b16 %v4963, %v4962
  %v4981 = vpack.c.b16 %v4965, %v4964
  %v4983 = vsel %vm3276, %v4966, 0
  %v4986 = vsel %vm3276, %v4967, 0
  %v4989 = vsel %vm3276, %v4968, 0
  %v4992 = vsel %vm3276, %v4969, 0
  %v4995 = vsel %vm3276, %v4970, 0
  %v4998 = vsel %vm3276, %v4971, 0
  %v5001 = vsel %vm3276, %v4972, 0
  %v5004 = vsel %vm3276, %v4973, 0
  %v5007 = vsel %vm3276, %v4974, 0
  %v5010 = vsel %vm3276, %v4975, 0
  %v5013 = vsel %vm3276, %v4976, 0
  %v5016 = vsel %vm3276, %v4977, 0
  %v5019 = vsel %vm3276, %v4978, 0
  %v5022 = vsel %vm3276, %v4979, 0
  %v5025 = vsel %vm3276, %v4980, 0
  %v5028 = vsel %vm3276, %v4981, 0
  %5030 = vmatpush.bf16.msra.mxu0 0
  %5031 = vmatpush.bf16.msra.mxu0 0
  %5032 = vmatpush.bf16.msra.mxu0 0
  %5033 = vmatpush.bf16.msra.mxu0 %v4868
  %5034 = vmatpush.bf16.msra.mxu0 %v4867
  %5035 = vmatpush.bf16.msra.mxu0 %v4866
  %5036 = vmatpush.bf16.msra.mxu0 %v4865
  %5037 = vmatpush.bf16.msra.mxu0 %v4864
  %5038 = vmatmul.bf16.gmra.mxu0 %v4983
  %v5039 = vpop.f32.mrf.mxu0
  %v5040 = vadd.f32 0.0, %v5039
  %v5041 = vpop.f32.mrf.mxu0
  %v5042 = vadd.f32 0.0, %v5041
  %5043 = vmatmul.bf16.gmra.mxu0 %v4986
  %v5044 = vpop.f32.mrf.mxu0
  %v5045 = vadd.f32 0.0, %v5044
  %v5046 = vpop.f32.mrf.mxu0
  %v5047 = vadd.f32 0.0, %v5046
  %5048 = vmatmul.bf16.gmra.mxu0 %v4989
  %v5049 = vpop.f32.mrf.mxu0
  %v5050 = vadd.f32 0.0, %v5049
  %v5051 = vpop.f32.mrf.mxu0
  %v5052 = vadd.f32 0.0, %v5051
  %5053 = vmatmul.bf16.gmra.mxu0 %v4992
  %v5054 = vpop.f32.mrf.mxu0
  %v5055 = vadd.f32 0.0, %v5054
  %v5056 = vpop.f32.mrf.mxu0
  %v5057 = vadd.f32 0.0, %v5056
  %5058 = vmatmul.bf16.gmra.mxu0 %v4995
  %v5059 = vpop.f32.mrf.mxu0
  %v5060 = vadd.f32 0.0, %v5059
  %v5061 = vpop.f32.mrf.mxu0
  %v5062 = vadd.f32 0.0, %v5061
  %5063 = vmatmul.bf16.gmra.mxu0 %v4998
  %v5064 = vpop.f32.mrf.mxu0
  %v5065 = vadd.f32 0.0, %v5064
  %v5066 = vpop.f32.mrf.mxu0
  %v5067 = vadd.f32 0.0, %v5066
  %5068 = vmatmul.bf16.gmra.mxu0 %v5001
  %v5069 = vpop.f32.mrf.mxu0
  %v5070 = vadd.f32 0.0, %v5069
  %v5071 = vpop.f32.mrf.mxu0
  %v5072 = vadd.f32 0.0, %v5071
  %5073 = vmatmul.bf16.gmra.mxu0 %v5004
  %v5074 = vpop.f32.mrf.mxu0
  %v5075 = vadd.f32 0.0, %v5074
  %v5076 = vpop.f32.mrf.mxu0
  %v5077 = vadd.f32 0.0, %v5076
  %5078 = vmatmul.bf16.gmra.mxu0 %v5007
  %v5079 = vpop.f32.mrf.mxu0
  %v5080 = vadd.f32 0.0, %v5079
  %v5081 = vpop.f32.mrf.mxu0
  %v5082 = vadd.f32 0.0, %v5081
  %5083 = vmatmul.bf16.gmra.mxu0 %v5010
  %v5084 = vpop.f32.mrf.mxu0
  %v5085 = vadd.f32 0.0, %v5084
  %v5086 = vpop.f32.mrf.mxu0
  %v5087 = vadd.f32 0.0, %v5086
  %5088 = vmatmul.bf16.gmra.mxu0 %v5013
  %v5089 = vpop.f32.mrf.mxu0
  %v5090 = vadd.f32 0.0, %v5089
  %v5091 = vpop.f32.mrf.mxu0
  %v5092 = vadd.f32 0.0, %v5091
  %5093 = vmatmul.bf16.gmra.mxu0 %v5016
  %v5094 = vpop.f32.mrf.mxu0
  %v5095 = vadd.f32 0.0, %v5094
  %v5096 = vpop.f32.mrf.mxu0
  %v5097 = vadd.f32 0.0, %v5096
  %5098 = vmatmul.bf16.gmra.mxu0 %v5019
  %v5099 = vpop.f32.mrf.mxu0
  %v5100 = vadd.f32 0.0, %v5099
  %v5101 = vpop.f32.mrf.mxu0
  %v5102 = vadd.f32 0.0, %v5101
  %5103 = vmatmul.bf16.gmra.mxu0 %v5022
  %v5104 = vpop.f32.mrf.mxu0
  %v5105 = vadd.f32 0.0, %v5104
  %v5106 = vpop.f32.mrf.mxu0
  %v5107 = vadd.f32 0.0, %v5106
  %5108 = vmatmul.bf16.gmra.mxu0 %v5025
  %v5109 = vpop.f32.mrf.mxu0
  %v5110 = vadd.f32 0.0, %v5109
  %v5111 = vpop.f32.mrf.mxu0
  %v5112 = vadd.f32 0.0, %v5111
  %5113 = vmatmul.bf16.gmra.mxu0 %v5028
  %v5114 = vpop.f32.mrf.mxu0
  %v5115 = vadd.f32 0.0, %v5114
  %v5116 = vpop.f32.mrf.mxu0
  %v5117 = vadd.f32 0.0, %v5116
  %5118 = vdwg.mxu0
  %v5119 = vpack.c.bf16 %v5040, %v5040
  %v5120 = vpack.c.bf16 %v5042, %v5042
  %v5121 = vpack.c.bf16 %v5045, %v5045
  %v5122 = vpack.c.bf16 %v5047, %v5047
  %v5123 = vpack.c.bf16 %v5050, %v5050
  %v5124 = vpack.c.bf16 %v5052, %v5052
  %v5125 = vpack.c.bf16 %v5055, %v5055
  %v5126 = vpack.c.bf16 %v5057, %v5057
  %v5127 = vpack.c.bf16 %v5060, %v5060
  %v5128 = vpack.c.bf16 %v5062, %v5062
  %v5129 = vpack.c.bf16 %v5065, %v5065
  %v5130 = vpack.c.bf16 %v5067, %v5067
  %v5131 = vpack.c.bf16 %v5070, %v5070
  %v5132 = vpack.c.bf16 %v5072, %v5072
  %v5133 = vpack.c.bf16 %v5075, %v5075
  %v5134 = vpack.c.bf16 %v5077, %v5077
  %v5135 = vpack.c.bf16 %v5080, %v5080
  %v5136 = vpack.c.bf16 %v5082, %v5082
  %v5137 = vpack.c.bf16 %v5085, %v5085
  %v5138 = vpack.c.bf16 %v5087, %v5087
  %v5139 = vpack.c.bf16 %v5090, %v5090
  %v5140 = vpack.c.bf16 %v5092, %v5092
  %v5141 = vpack.c.bf16 %v5095, %v5095
  %v5142 = vpack.c.bf16 %v5097, %v5097
  %v5143 = vpack.c.bf16 %v5100, %v5100
  %v5144 = vpack.c.bf16 %v5102, %v5102
  %v5145 = vpack.c.bf16 %v5105, %v5105
  %v5146 = vpack.c.bf16 %v5107, %v5107
  %v5147 = vpack.c.bf16 %v5110, %v5110
  %v5148 = vpack.c.bf16 %v5112, %v5112
  %v5149 = vpack.c.bf16 %v5115, %v5115
  %v5150 = vpack.c.bf16 %v5117, %v5117
  %v5151 = vld [vmem:[%s23] sm:$0xf]
  %v5152 = vld [vmem:[%s23 + $0x4] sm:$0xf]
  %v5153 = vld [vmem:[%s23 + $0x8] sm:$0xf]
  %v5154 = vld [vmem:[%s23 + $0xc] sm:$0xf]
  %v5155 = vld [vmem:[%s23 + $0x10] sm:$0xf]
  %v5156 = vld [vmem:[%s23 + $0x14] sm:$0xf]
  %v5157 = vld [vmem:[%s23 + $0x18] sm:$0xf]
  %v5158 = vld [vmem:[%s23 + $0x1c] sm:$0xf]
  %s5159 = scalar_lea.vmem %s23, 32
  %v5160 = vld [vmem:[%s5159] sm:$0xf]
  %v5161 = vld [vmem:[%s5159 + $0x4] sm:$0xf]
  %v5162 = vld [vmem:[%s5159 + $0x8] sm:$0xf]
  %v5163 = vld [vmem:[%s5159 + $0xc] sm:$0xf]
  %v5164 = vld [vmem:[%s5159 + $0x10] sm:$0xf]
  %v5165 = vld [vmem:[%s5159 + $0x14] sm:$0xf]
  %v5166 = vld [vmem:[%s5159 + $0x18] sm:$0xf]
  %v5167 = vld [vmem:[%s5159 + $0x1c] sm:$0xf]
  %v5176 = vunpack.c.l.b16 %v5127
  %v5177 = vunpack.c.l.b16 %v5128
  %v5178 = vunpack.c.l.b16 %v5129
  %v5179 = vunpack.c.l.b16 %v5130
  %v5180 = vunpack.c.l.b16 %v5131
  %v5181 = vunpack.c.l.b16 %v5132
  %v5182 = vunpack.c.l.b16 %v5133
  %v5183 = vunpack.c.l.b16 %v5134
  %v5184 = vpack.c.b16 %v5177, %v5176
  %v5185 = vpack.c.b16 %v5179, %v5178
  %v5186 = vpack.c.b16 %v5181, %v5180
  %v5187 = vpack.c.b16 %v5183, %v5182
  %v5196 = vunpack.c.l.b16 %v5160
  %v5197 = vunpack.c.l.b16 %v5161
  %v5198 = vunpack.c.l.b16 %v5162
  %v5199 = vunpack.c.l.b16 %v5163
  %v5200 = vunpack.c.l.b16 %v5164
  %v5201 = vunpack.c.l.b16 %v5165
  %v5202 = vunpack.c.l.b16 %v5166
  %v5203 = vunpack.c.l.b16 %v5167
  %v5204 = vpack.c.b16 %v5197, %v5196
  %v5205 = vpack.c.b16 %v5199, %v5198
  %v5206 = vpack.c.b16 %v5201, %v5200
  %v5207 = vpack.c.b16 %v5203, %v5202
  %v5213 = vsel %vm291, %v5184, 0
  %v5216 = vsel %vm291, %v5185, 0
  %v5219 = vsel %vm291, %v5186, 0
  %v5222 = vsel %vm291, %v5187, 0
  %5224 = vmatpush.bf16.msra.mxu0 0
  %5225 = vmatpush.bf16.msra.mxu0 0
  %5226 = vmatpush.bf16.msra.mxu0 0
  %5227 = vmatpush.bf16.msra.mxu0 0
  %5228 = vmatpush.bf16.msra.mxu0 %v5207
  %5229 = vmatpush.bf16.msra.mxu0 %v5206
  %5230 = vmatpush.bf16.msra.mxu0 %v5205
  %5231 = vmatpush.bf16.msra.mxu0 %v5204
  %5232 = vmatmul.bf16.gmra.mxu0 %v5213
  %v5233 = vpop.f32.mrf.mxu0
  %v5234 = vadd.f32 0.0, %v5233
  %v5235 = vpop.f32.mrf.mxu0
  %v5236 = vadd.f32 0.0, %v5235
  %5237 = vmatmul.bf16.gmra.mxu0 %v5216
  %v5238 = vpop.f32.mrf.mxu0
  %v5239 = vadd.f32 0.0, %v5238
  %v5240 = vpop.f32.mrf.mxu0
  %v5241 = vadd.f32 0.0, %v5240
  %5242 = vmatmul.bf16.gmra.mxu0 %v5219
  %v5243 = vpop.f32.mrf.mxu0
  %v5244 = vadd.f32 0.0, %v5243
  %v5245 = vpop.f32.mrf.mxu0
  %v5246 = vadd.f32 0.0, %v5245
  %5247 = vmatmul.bf16.gmra.mxu0 %v5222
  %v5248 = vpop.f32.mrf.mxu0
  %v5249 = vadd.f32 0.0, %v5248
  %v5250 = vpop.f32.mrf.mxu0
  %v5251 = vadd.f32 0.0, %v5250
  %5252 = vdwg.mxu0
  %v5261 = vunpack.c.l.b16 %v5119
  %v5262 = vunpack.c.l.b16 %v5120
  %v5263 = vunpack.c.l.b16 %v5121
  %v5264 = vunpack.c.l.b16 %v5122
  %v5265 = vunpack.c.l.b16 %v5123
  %v5266 = vunpack.c.l.b16 %v5124
  %v5267 = vunpack.c.l.b16 %v5125
  %v5268 = vunpack.c.l.b16 %v5126
  %v5269 = vpack.c.b16 %v5262, %v5261
  %v5270 = vpack.c.b16 %v5264, %v5263
  %v5271 = vpack.c.b16 %v5266, %v5265
  %v5272 = vpack.c.b16 %v5268, %v5267
  %v5281 = vunpack.c.l.b16 %v5151
  %v5282 = vunpack.c.l.b16 %v5152
  %v5283 = vunpack.c.l.b16 %v5153
  %v5284 = vunpack.c.l.b16 %v5154
  %v5285 = vunpack.c.l.b16 %v5155
  %v5286 = vunpack.c.l.b16 %v5156
  %v5287 = vunpack.c.l.b16 %v5157
  %v5288 = vunpack.c.l.b16 %v5158
  %v5289 = vpack.c.b16 %v5282, %v5281
  %v5290 = vpack.c.b16 %v5284, %v5283
  %v5291 = vpack.c.b16 %v5286, %v5285
  %v5292 = vpack.c.b16 %v5288, %v5287
  %v5298 = vsel %vm291, %v5269, 0
  %v5301 = vsel %vm291, %v5270, 0
  %v5304 = vsel %vm291, %v5271, 0
  %v5307 = vsel %vm291, %v5272, 0
  %5309 = vmatpush.bf16.msra.mxu0 0
  %5310 = vmatpush.bf16.msra.mxu0 0
  %5311 = vmatpush.bf16.msra.mxu0 0
  %5312 = vmatpush.bf16.msra.mxu0 0
  %5313 = vmatpush.bf16.msra.mxu0 %v5292
  %5314 = vmatpush.bf16.msra.mxu0 %v5291
  %5315 = vmatpush.bf16.msra.mxu0 %v5290
  %5316 = vmatpush.bf16.msra.mxu0 %v5289
  %5317 = vmatmul.bf16.gmra.mxu0 %v5298
  %v5318 = vpop.f32.mrf.mxu0
  %v5319 = vadd.f32 %v5234, %v5318
  %v5320 = vpop.f32.mrf.mxu0
  %v5321 = vadd.f32 %v5236, %v5320
  %5322 = vmatmul.bf16.gmra.mxu0 %v5301
  %v5323 = vpop.f32.mrf.mxu0
  %v5324 = vadd.f32 %v5239, %v5323
  %v5325 = vpop.f32.mrf.mxu0
  %v5326 = vadd.f32 %v5241, %v5325
  %5327 = vmatmul.bf16.gmra.mxu0 %v5304
  %v5328 = vpop.f32.mrf.mxu0
  %v5329 = vadd.f32 %v5244, %v5328
  %v5330 = vpop.f32.mrf.mxu0
  %v5331 = vadd.f32 %v5246, %v5330
  %5332 = vmatmul.bf16.gmra.mxu0 %v5307
  %v5333 = vpop.f32.mrf.mxu0
  %v5334 = vadd.f32 %v5249, %v5333
  %v5335 = vpop.f32.mrf.mxu0
  %v5336 = vadd.f32 %v5251, %v5335
  %5337 = vdwg.mxu0
  %s5338 = scalar_lea.vmem %s23, 64
  %v5339 = vld [vmem:[%s5338] sm:$0xf]
  %v5340 = vld [vmem:[%s5338 + $0x4] sm:$0xf]
  %v5341 = vld [vmem:[%s5338 + $0x8] sm:$0xf]
  %v5342 = vld [vmem:[%s5338 + $0xc] sm:$0xf]
  %v5343 = vld [vmem:[%s5338 + $0x10] sm:$0xf]
  %v5344 = vld [vmem:[%s5338 + $0x14] sm:$0xf]
  %v5345 = vld [vmem:[%s5338 + $0x18] sm:$0xf]
  %v5346 = vld [vmem:[%s5338 + $0x1c] sm:$0xf]
  %v5355 = vunpack.c.l.b16 %v5135
  %v5356 = vunpack.c.l.b16 %v5136
  %v5357 = vunpack.c.l.b16 %v5137
  %v5358 = vunpack.c.l.b16 %v5138
  %v5359 = vunpack.c.l.b16 %v5139
  %v5360 = vunpack.c.l.b16 %v5140
  %v5361 = vunpack.c.l.b16 %v5141
  %v5362 = vunpack.c.l.b16 %v5142
  %v5363 = vpack.c.b16 %v5356, %v5355
  %v5364 = vpack.c.b16 %v5358, %v5357
  %v5365 = vpack.c.b16 %v5360, %v5359
  %v5366 = vpack.c.b16 %v5362, %v5361
  %v5375 = vunpack.c.l.b16 %v5339
  %v5376 = vunpack.c.l.b16 %v5340
  %v5377 = vunpack.c.l.b16 %v5341
  %v5378 = vunpack.c.l.b16 %v5342
  %v5379 = vunpack.c.l.b16 %v5343
  %v5380 = vunpack.c.l.b16 %v5344
  %v5381 = vunpack.c.l.b16 %v5345
  %v5382 = vunpack.c.l.b16 %v5346
  %v5383 = vpack.c.b16 %v5376, %v5375
  %v5384 = vpack.c.b16 %v5378, %v5377
  %v5385 = vpack.c.b16 %v5380, %v5379
  %v5386 = vpack.c.b16 %v5382, %v5381
  %v5392 = vsel %vm291, %v5363, 0
  %v5395 = vsel %vm291, %v5364, 0
  %v5398 = vsel %vm291, %v5365, 0
  %v5401 = vsel %vm291, %v5366, 0
  %5403 = vmatpush.bf16.msra.mxu0 0
  %5404 = vmatpush.bf16.msra.mxu0 0
  %5405 = vmatpush.bf16.msra.mxu0 0
  %5406 = vmatpush.bf16.msra.mxu0 0
  %5407 = vmatpush.bf16.msra.mxu0 %v5386
  %5408 = vmatpush.bf16.msra.mxu0 %v5385
  %5409 = vmatpush.bf16.msra.mxu0 %v5384
  %5410 = vmatpush.bf16.msra.mxu0 %v5383
  %5411 = vmatmul.bf16.gmra.mxu0 %v5392
  %v5412 = vpop.f32.mrf.mxu0
  %v5413 = vadd.f32 0.0, %v5412
  %v5414 = vpop.f32.mrf.mxu0
  %v5415 = vadd.f32 0.0, %v5414
  %5416 = vmatmul.bf16.gmra.mxu0 %v5395
  %v5417 = vpop.f32.mrf.mxu0
  %v5418 = vadd.f32 0.0, %v5417
  %v5419 = vpop.f32.mrf.mxu0
  %v5420 = vadd.f32 0.0, %v5419
  %5421 = vmatmul.bf16.gmra.mxu0 %v5398
  %v5422 = vpop.f32.mrf.mxu0
  %v5423 = vadd.f32 0.0, %v5422
  %v5424 = vpop.f32.mrf.mxu0
  %v5425 = vadd.f32 0.0, %v5424
  %5426 = vmatmul.bf16.gmra.mxu0 %v5401
  %v5427 = vpop.f32.mrf.mxu0
  %v5428 = vadd.f32 0.0, %v5427
  %v5429 = vpop.f32.mrf.mxu0
  %v5430 = vadd.f32 0.0, %v5429
  %5431 = vdwg.mxu0
  %v5432 = vadd.f32 %v5319, %v5413
  %v5433 = vadd.f32 %v5321, %v5415
  %v5434 = vadd.f32 %v5324, %v5418
  %v5435 = vadd.f32 %v5326, %v5420
  %v5436 = vadd.f32 %v5329, %v5423
  %v5437 = vadd.f32 %v5331, %v5425
  %v5438 = vadd.f32 %v5334, %v5428
  %v5439 = vadd.f32 %v5336, %v5430
  %s5440 = scalar_lea.vmem %s23, 96
  %v5441 = vld [vmem:[%s5440] sm:$0xf]
  %v5442 = vld [vmem:[%s5440 + $0x4] sm:$0xf]
  %v5443 = vld [vmem:[%s5440 + $0x8] sm:$0xf]
  %v5444 = vld [vmem:[%s5440 + $0xc] sm:$0xf]
  %v5445 = vld [vmem:[%s5440 + $0x10] sm:$0xf]
  %v5446 = vld [vmem:[%s5440 + $0x14] sm:$0xf]
  %v5447 = vld [vmem:[%s5440 + $0x18] sm:$0xf]
  %v5448 = vld [vmem:[%s5440 + $0x1c] sm:$0xf]
  %v5457 = vunpack.c.l.b16 %v5143
  %v5458 = vunpack.c.l.b16 %v5144
  %v5459 = vunpack.c.l.b16 %v5145
  %v5460 = vunpack.c.l.b16 %v5146
  %v5461 = vunpack.c.l.b16 %v5147
  %v5462 = vunpack.c.l.b16 %v5148
  %v5463 = vunpack.c.l.b16 %v5149
  %v5464 = vunpack.c.l.b16 %v5150
  %v5465 = vpack.c.b16 %v5458, %v5457
  %v5466 = vpack.c.b16 %v5460, %v5459
  %v5467 = vpack.c.b16 %v5462, %v5461
  %v5468 = vpack.c.b16 %v5464, %v5463
  %v5477 = vunpack.c.l.b16 %v5441
  %v5478 = vunpack.c.l.b16 %v5442
  %v5479 = vunpack.c.l.b16 %v5443
  %v5480 = vunpack.c.l.b16 %v5444
  %v5481 = vunpack.c.l.b16 %v5445
  %v5482 = vunpack.c.l.b16 %v5446
  %v5483 = vunpack.c.l.b16 %v5447
  %v5484 = vunpack.c.l.b16 %v5448
  %v5485 = vpack.c.b16 %v5478, %v5477
  %v5486 = vpack.c.b16 %v5480, %v5479
  %v5487 = vpack.c.b16 %v5482, %v5481
  %v5488 = vpack.c.b16 %v5484, %v5483
  %v5494 = vsel %vm291, %v5465, 0
  %v5497 = vsel %vm291, %v5466, 0
  %v5500 = vsel %vm291, %v5467, 0
  %v5503 = vsel %vm291, %v5468, 0
  %5505 = vmatpush.bf16.msra.mxu0 0
  %5506 = vmatpush.bf16.msra.mxu0 0
  %5507 = vmatpush.bf16.msra.mxu0 0
  %5508 = vmatpush.bf16.msra.mxu0 0
  %5509 = vmatpush.bf16.msra.mxu0 %v5488
  %5510 = vmatpush.bf16.msra.mxu0 %v5487
  %5511 = vmatpush.bf16.msra.mxu0 %v5486
  %5512 = vmatpush.bf16.msra.mxu0 %v5485
  %5513 = vmatmul.bf16.gmra.mxu0 %v5494
  %v5514 = vpop.f32.mrf.mxu0
  %v5515 = vadd.f32 0.0, %v5514
  %v5516 = vpop.f32.mrf.mxu0
  %v5517 = vadd.f32 0.0, %v5516
  %5518 = vmatmul.bf16.gmra.mxu0 %v5497
  %v5519 = vpop.f32.mrf.mxu0
  %v5520 = vadd.f32 0.0, %v5519
  %v5521 = vpop.f32.mrf.mxu0
  %v5522 = vadd.f32 0.0, %v5521
  %5523 = vmatmul.bf16.gmra.mxu0 %v5500
  %v5524 = vpop.f32.mrf.mxu0
  %v5525 = vadd.f32 0.0, %v5524
  %v5526 = vpop.f32.mrf.mxu0
  %v5527 = vadd.f32 0.0, %v5526
  %5528 = vmatmul.bf16.gmra.mxu0 %v5503
  %v5529 = vpop.f32.mrf.mxu0
  %v5530 = vadd.f32 0.0, %v5529
  %v5531 = vpop.f32.mrf.mxu0
  %v5532 = vadd.f32 0.0, %v5531
  %5533 = vdwg.mxu0
  %v5534 = vadd.f32 %v5432, %v5515
  %v5535 = vadd.f32 %v5433, %v5517
  %v5536 = vadd.f32 %v5434, %v5520
  %v5537 = vadd.f32 %v5435, %v5522
  %v5538 = vadd.f32 %v5436, %v5525
  %v5539 = vadd.f32 %v5437, %v5527
  %v5540 = vadd.f32 %v5438, %v5530
  %v5541 = vadd.f32 %v5439, %v5532
  %v5543 = vperm.slane %v4869, 0
  %v5545 = vadd.f32 %v5534, %v5543
  %v5546 = vadd.f32 %v5535, %v5543
  %v5547 = vadd.f32 %v5536, %v5543
  %v5548 = vadd.f32 %v5537, %v5543
  %v5549 = vadd.f32 %v5538, %v5543
  %v5550 = vadd.f32 %v5539, %v5543
  %v5551 = vadd.f32 %v5540, %v5543
  %v5552 = vadd.f32 %v5541, %v5543
  %v5553 = vmax.f32 %v5545, 0.0
  %v5554 = vmax.f32 %v5546, 0.0
  %v5555 = vmax.f32 %v5547, 0.0
  %v5556 = vmax.f32 %v5548, 0.0
  %v5557 = vmax.f32 %v5549, 0.0
  %v5558 = vmax.f32 %v5550, 0.0
  %v5559 = vmax.f32 %v5551, 0.0
  %v5560 = vmax.f32 %v5552, 0.0
  %v5561 = vpack.c.bf16 %v5554, %v5553
  %v5562 = vpack.c.bf16 %v5556, %v5555
  %v5563 = vpack.c.bf16 %v5558, %v5557
  %v5564 = vpack.c.bf16 %v5560, %v5559
  %v5565 = vld [vmem:[%s27] sm:$0x1]
  %v5566 = vld [vmem:[%s25] sm:$0xf]
  %v5567 = vld [vmem:[%s25 + $0x4] sm:$0xf]
  %v5568 = vld [vmem:[%s25 + $0x8] sm:$0xf]
  %v5569 = vld [vmem:[%s25 + $0xc] sm:$0xf]
  %v5570 = vld [vmem:[%s25 + $0x10] sm:$0xf]
  %v5571 = vld [vmem:[%s25 + $0x14] sm:$0xf]
  %v5572 = vld [vmem:[%s25 + $0x18] sm:$0xf]
  %v5573 = vld [vmem:[%s25 + $0x1c] sm:$0xf]
  %v5574 = vld [vmem:[%s25 + $0x20] sm:$0xf]
  %v5575 = vld [vmem:[%s25 + $0x24] sm:$0xf]
  %v5576 = vld [vmem:[%s25 + $0x28] sm:$0xf]
  %v5577 = vld [vmem:[%s25 + $0x2c] sm:$0xf]
  %v5578 = vld [vmem:[%s25 + $0x30] sm:$0xf]
  %v5579 = vld [vmem:[%s25 + $0x34] sm:$0xf]
  %v5580 = vld [vmem:[%s25 + $0x38] sm:$0xf]
  %v5581 = vld [vmem:[%s25 + $0x3c] sm:$0xf]
  %v5598 = vunpack.c.l.b16 %v5566
  %v5599 = vunpack.c.l.b16 %v5567
  %v5600 = vunpack.c.l.b16 %v5568
  %v5601 = vunpack.c.l.b16 %v5569
  %v5602 = vunpack.c.l.b16 %v5570
  %v5603 = vunpack.c.l.b16 %v5571
  %v5604 = vunpack.c.l.b16 %v5572
  %v5605 = vunpack.c.l.b16 %v5573
  %v5606 = vunpack.c.l.b16 %v5574
  %v5607 = vunpack.c.l.b16 %v5575
  %v5608 = vunpack.c.l.b16 %v5576
  %v5609 = vunpack.c.l.b16 %v5577
  %v5610 = vunpack.c.l.b16 %v5578
  %v5611 = vunpack.c.l.b16 %v5579
  %v5612 = vunpack.c.l.b16 %v5580
  %v5613 = vunpack.c.l.b16 %v5581
  %v5614 = vpack.c.b16 %v5599, %v5598
  %v5615 = vpack.c.b16 %v5601, %v5600
  %v5616 = vpack.c.b16 %v5603, %v5602
  %v5617 = vpack.c.b16 %v5605, %v5604
  %v5618 = vpack.c.b16 %v5607, %v5606
  %v5619 = vpack.c.b16 %v5609, %v5608
  %v5620 = vpack.c.b16 %v5611, %v5610
  %v5621 = vpack.c.b16 %v5613, %v5612
  %v5623 = vsel %vm291, %v5614, 0
  %v5626 = vsel %vm291, %v5615, 0
  %v5629 = vsel %vm291, %v5616, 0
  %v5632 = vsel %vm291, %v5617, 0
  %v5635 = vsel %vm291, %v5618, 0
  %v5638 = vsel %vm291, %v5619, 0
  %v5641 = vsel %vm291, %v5620, 0
  %v5644 = vsel %vm291, %v5621, 0
  %5646 = vmatpush.bf16.msra.mxu0 0
  %5647 = vmatpush.bf16.msra.mxu0 0
  %5648 = vmatpush.bf16.msra.mxu0 0
  %5649 = vmatpush.bf16.msra.mxu0 0
  %5650 = vmatpush.bf16.msra.mxu0 %v5564
  %5651 = vmatpush.bf16.msra.mxu0 %v5563
  %5652 = vmatpush.bf16.msra.mxu0 %v5562
  %5653 = vmatpush.bf16.msra.mxu0 %v5561
  %5654 = vmatmul.bf16.gmra.mxu0 %v5623
  %v5655 = vpop.f32.mrf.mxu0
  %v5656 = vadd.f32 0.0, %v5655
  %v5657 = vpop.f32.mrf.mxu0
  %v5658 = vadd.f32 0.0, %v5657
  %5659 = vmatmul.bf16.gmra.mxu0 %v5626
  %v5660 = vpop.f32.mrf.mxu0
  %v5661 = vadd.f32 0.0, %v5660
  %v5662 = vpop.f32.mrf.mxu0
  %v5663 = vadd.f32 0.0, %v5662
  %5664 = vmatmul.bf16.gmra.mxu0 %v5629
  %v5665 = vpop.f32.mrf.mxu0
  %v5666 = vadd.f32 0.0, %v5665
  %v5667 = vpop.f32.mrf.mxu0
  %v5668 = vadd.f32 0.0, %v5667
  %5669 = vmatmul.bf16.gmra.mxu0 %v5632
  %v5670 = vpop.f32.mrf.mxu0
  %v5671 = vadd.f32 0.0, %v5670
  %v5672 = vpop.f32.mrf.mxu0
  %v5673 = vadd.f32 0.0, %v5672
  %5674 = vmatmul.bf16.gmra.mxu0 %v5635
  %v5675 = vpop.f32.mrf.mxu0
  %v5676 = vadd.f32 0.0, %v5675
  %v5677 = vpop.f32.mrf.mxu0
  %v5678 = vadd.f32 0.0, %v5677
  %5679 = vmatmul.bf16.gmra.mxu0 %v5638
  %v5680 = vpop.f32.mrf.mxu0
  %v5681 = vadd.f32 0.0, %v5680
  %v5682 = vpop.f32.mrf.mxu0
  %v5683 = vadd.f32 0.0, %v5682
  %5684 = vmatmul.bf16.gmra.mxu0 %v5641
  %v5685 = vpop.f32.mrf.mxu0
  %v5686 = vadd.f32 0.0, %v5685
  %v5687 = vpop.f32.mrf.mxu0
  %v5688 = vadd.f32 0.0, %v5687
  %5689 = vmatmul.bf16.gmra.mxu0 %v5644
  %v5690 = vpop.f32.mrf.mxu0
  %v5691 = vadd.f32 0.0, %v5690
  %v5692 = vpop.f32.mrf.mxu0
  %v5693 = vadd.f32 0.0, %v5692
  %5694 = vdwg.mxu0
  %v5695 = vpack.c.bf16 %v5656, %v5656
  %v5696 = vpack.c.bf16 %v5658, %v5658
  %v5697 = vpack.c.bf16 %v5661, %v5661
  %v5698 = vpack.c.bf16 %v5663, %v5663
  %v5699 = vpack.c.bf16 %v5666, %v5666
  %v5700 = vpack.c.bf16 %v5668, %v5668
  %v5701 = vpack.c.bf16 %v5671, %v5671
  %v5702 = vpack.c.bf16 %v5673, %v5673
  %v5703 = vpack.c.bf16 %v5676, %v5676
  %v5704 = vpack.c.bf16 %v5678, %v5678
  %v5705 = vpack.c.bf16 %v5681, %v5681
  %v5706 = vpack.c.bf16 %v5683, %v5683
  %v5707 = vpack.c.bf16 %v5686, %v5686
  %v5708 = vpack.c.bf16 %v5688, %v5688
  %v5709 = vpack.c.bf16 %v5691, %v5691
  %v5710 = vpack.c.bf16 %v5693, %v5693
  %v5711 = vld [vmem:[%s26] sm:$0xf]
  %v5712 = vld [vmem:[%s26 + $0x4] sm:$0xf]
  %v5713 = vld [vmem:[%s26 + $0x8] sm:$0xf]
  %v5714 = vld [vmem:[%s26 + $0xc] sm:$0xf]
  %v5715 = vld [vmem:[%s26 + $0x10] sm:$0xf]
  %v5716 = vld [vmem:[%s26 + $0x14] sm:$0xf]
  %v5717 = vld [vmem:[%s26 + $0x18] sm:$0xf]
  %v5718 = vld [vmem:[%s26 + $0x1c] sm:$0xf]
  %s5719 = scalar_lea.vmem %s26, 32
  %v5720 = vld [vmem:[%s5719] sm:$0xf]
  %v5721 = vld [vmem:[%s5719 + $0x4] sm:$0xf]
  %v5722 = vld [vmem:[%s5719 + $0x8] sm:$0xf]
  %v5723 = vld [vmem:[%s5719 + $0xc] sm:$0xf]
  %v5724 = vld [vmem:[%s5719 + $0x10] sm:$0xf]
  %v5725 = vld [vmem:[%s5719 + $0x14] sm:$0xf]
  %v5726 = vld [vmem:[%s5719 + $0x18] sm:$0xf]
  %v5727 = vld [vmem:[%s5719 + $0x1c] sm:$0xf]
  %v5732 = vunpack.c.l.b16 %v5699
  %v5733 = vunpack.c.l.b16 %v5700
  %v5734 = vunpack.c.l.b16 %v5701
  %v5735 = vunpack.c.l.b16 %v5702
  %v5736 = vpack.c.b16 %v5733, %v5732
  %v5737 = vpack.c.b16 %v5735, %v5734
  %v5746 = vunpack.c.l.b16 %v5720
  %v5747 = vunpack.c.l.b16 %v5721
  %v5748 = vunpack.c.l.b16 %v5722
  %v5749 = vunpack.c.l.b16 %v5723
  %v5750 = vunpack.c.l.b16 %v5724
  %v5751 = vunpack.c.l.b16 %v5725
  %v5752 = vunpack.c.l.b16 %v5726
  %v5753 = vunpack.c.l.b16 %v5727
  %v5754 = vpack.c.b16 %v5747, %v5746
  %v5755 = vpack.c.b16 %v5749, %v5748
  %v5756 = vpack.c.b16 %v5751, %v5750
  %v5757 = vpack.c.b16 %v5753, %v5752
  %v5763 = vsel %vm291, %v5736, 0
  %v5766 = vsel %vm291, %v5737, 0
  %5768 = vmatpush.bf16.msra.mxu0 0
  %5769 = vmatpush.bf16.msra.mxu0 0
  %5770 = vmatpush.bf16.msra.mxu0 0
  %5771 = vmatpush.bf16.msra.mxu0 0
  %5772 = vmatpush.bf16.msra.mxu0 %v5757
  %5773 = vmatpush.bf16.msra.mxu0 %v5756
  %5774 = vmatpush.bf16.msra.mxu0 %v5755
  %5775 = vmatpush.bf16.msra.mxu0 %v5754
  %5776 = vmatmul.bf16.gmra.mxu0 %v5763
  %v5777 = vpop.f32.mrf.mxu0
  %v5778 = vadd.f32 0.0, %v5777
  %v5779 = vpop.f32.mrf.mxu0
  %v5780 = vadd.f32 0.0, %v5779
  %5781 = vmatmul.bf16.gmra.mxu0 %v5766
  %v5782 = vpop.f32.mrf.mxu0
  %v5783 = vadd.f32 0.0, %v5782
  %v5784 = vpop.f32.mrf.mxu0
  %v5785 = vadd.f32 0.0, %v5784
  %5786 = vdwg.mxu0
  %v5791 = vunpack.c.l.b16 %v5695
  %v5792 = vunpack.c.l.b16 %v5696
  %v5793 = vunpack.c.l.b16 %v5697
  %v5794 = vunpack.c.l.b16 %v5698
  %v5795 = vpack.c.b16 %v5792, %v5791
  %v5796 = vpack.c.b16 %v5794, %v5793
  %v5805 = vunpack.c.l.b16 %v5711
  %v5806 = vunpack.c.l.b16 %v5712
  %v5807 = vunpack.c.l.b16 %v5713
  %v5808 = vunpack.c.l.b16 %v5714
  %v5809 = vunpack.c.l.b16 %v5715
  %v5810 = vunpack.c.l.b16 %v5716
  %v5811 = vunpack.c.l.b16 %v5717
  %v5812 = vunpack.c.l.b16 %v5718
  %v5813 = vpack.c.b16 %v5806, %v5805
  %v5814 = vpack.c.b16 %v5808, %v5807
  %v5815 = vpack.c.b16 %v5810, %v5809
  %v5816 = vpack.c.b16 %v5812, %v5811
  %v5822 = vsel %vm291, %v5795, 0
  %v5825 = vsel %vm291, %v5796, 0
  %5827 = vmatpush.bf16.msra.mxu0 0
  %5828 = vmatpush.bf16.msra.mxu0 0
  %5829 = vmatpush.bf16.msra.mxu0 0
  %5830 = vmatpush.bf16.msra.mxu0 0
  %5831 = vmatpush.bf16.msra.mxu0 %v5816
  %5832 = vmatpush.bf16.msra.mxu0 %v5815
  %5833 = vmatpush.bf16.msra.mxu0 %v5814
  %5834 = vmatpush.bf16.msra.mxu0 %v5813
  %5835 = vmatmul.bf16.gmra.mxu0 %v5822
  %v5836 = vpop.f32.mrf.mxu0
  %v5837 = vadd.f32 %v5778, %v5836
  %v5838 = vpop.f32.mrf.mxu0
  %v5839 = vadd.f32 %v5780, %v5838
  %5840 = vmatmul.bf16.gmra.mxu0 %v5825
  %v5841 = vpop.f32.mrf.mxu0
  %v5842 = vadd.f32 %v5783, %v5841
  %v5843 = vpop.f32.mrf.mxu0
  %v5844 = vadd.f32 %v5785, %v5843
  %5845 = vdwg.mxu0
  %s5846 = scalar_lea.vmem %s26, 64
  %v5847 = vld [vmem:[%s5846] sm:$0xf]
  %v5848 = vld [vmem:[%s5846 + $0x4] sm:$0xf]
  %v5849 = vld [vmem:[%s5846 + $0x8] sm:$0xf]
  %v5850 = vld [vmem:[%s5846 + $0xc] sm:$0xf]
  %v5851 = vld [vmem:[%s5846 + $0x10] sm:$0xf]
  %v5852 = vld [vmem:[%s5846 + $0x14] sm:$0xf]
  %v5853 = vld [vmem:[%s5846 + $0x18] sm:$0xf]
  %v5854 = vld [vmem:[%s5846 + $0x1c] sm:$0xf]
  %v5859 = vunpack.c.l.b16 %v5703
  %v5860 = vunpack.c.l.b16 %v5704
  %v5861 = vunpack.c.l.b16 %v5705
  %v5862 = vunpack.c.l.b16 %v5706
  %v5863 = vpack.c.b16 %v5860, %v5859
  %v5864 = vpack.c.b16 %v5862, %v5861
  %v5873 = vunpack.c.l.b16 %v5847
  %v5874 = vunpack.c.l.b16 %v5848
  %v5875 = vunpack.c.l.b16 %v5849
  %v5876 = vunpack.c.l.b16 %v5850
  %v5877 = vunpack.c.l.b16 %v5851
  %v5878 = vunpack.c.l.b16 %v5852
  %v5879 = vunpack.c.l.b16 %v5853
  %v5880 = vunpack.c.l.b16 %v5854
  %v5881 = vpack.c.b16 %v5874, %v5873
  %v5882 = vpack.c.b16 %v5876, %v5875
  %v5883 = vpack.c.b16 %v5878, %v5877
  %v5884 = vpack.c.b16 %v5880, %v5879
  %v5890 = vsel %vm291, %v5863, 0
  %v5893 = vsel %vm291, %v5864, 0
  %5895 = vmatpush.bf16.msra.mxu0 0
  %5896 = vmatpush.bf16.msra.mxu0 0
  %5897 = vmatpush.bf16.msra.mxu0 0
  %5898 = vmatpush.bf16.msra.mxu0 0
  %5899 = vmatpush.bf16.msra.mxu0 %v5884
  %5900 = vmatpush.bf16.msra.mxu0 %v5883
  %5901 = vmatpush.bf16.msra.mxu0 %v5882
  %5902 = vmatpush.bf16.msra.mxu0 %v5881
  %5903 = vmatmul.bf16.gmra.mxu0 %v5890
  %v5904 = vpop.f32.mrf.mxu0
  %v5905 = vadd.f32 0.0, %v5904
  %v5906 = vpop.f32.mrf.mxu0
  %v5907 = vadd.f32 0.0, %v5906
  %5908 = vmatmul.bf16.gmra.mxu0 %v5893
  %v5909 = vpop.f32.mrf.mxu0
  %v5910 = vadd.f32 0.0, %v5909
  %v5911 = vpop.f32.mrf.mxu0
  %v5912 = vadd.f32 0.0, %v5911
  %5913 = vdwg.mxu0
  %v5914 = vadd.f32 %v5837, %v5905
  %v5915 = vadd.f32 %v5839, %v5907
  %v5916 = vadd.f32 %v5842, %v5910
  %v5917 = vadd.f32 %v5844, %v5912
  %s5918 = scalar_lea.vmem %s26, 96
  %v5919 = vld [vmem:[%s5918] sm:$0xf]
  %v5920 = vld [vmem:[%s5918 + $0x4] sm:$0xf]
  %v5921 = vld [vmem:[%s5918 + $0x8] sm:$0xf]
  %v5922 = vld [vmem:[%s5918 + $0xc] sm:$0xf]
  %v5923 = vld [vmem:[%s5918 + $0x10] sm:$0xf]
  %v5924 = vld [vmem:[%s5918 + $0x14] sm:$0xf]
  %v5925 = vld [vmem:[%s5918 + $0x18] sm:$0xf]
  %v5926 = vld [vmem:[%s5918 + $0x1c] sm:$0xf]
  %v5931 = vunpack.c.l.b16 %v5707
  %v5932 = vunpack.c.l.b16 %v5708
  %v5933 = vunpack.c.l.b16 %v5709
  %v5934 = vunpack.c.l.b16 %v5710
  %v5935 = vpack.c.b16 %v5932, %v5931
  %v5936 = vpack.c.b16 %v5934, %v5933
  %v5945 = vunpack.c.l.b16 %v5919
  %v5946 = vunpack.c.l.b16 %v5920
  %v5947 = vunpack.c.l.b16 %v5921
  %v5948 = vunpack.c.l.b16 %v5922
  %v5949 = vunpack.c.l.b16 %v5923
  %v5950 = vunpack.c.l.b16 %v5924
  %v5951 = vunpack.c.l.b16 %v5925
  %v5952 = vunpack.c.l.b16 %v5926
  %v5953 = vpack.c.b16 %v5946, %v5945
  %v5954 = vpack.c.b16 %v5948, %v5947
  %v5955 = vpack.c.b16 %v5950, %v5949
  %v5956 = vpack.c.b16 %v5952, %v5951
  %v5962 = vsel %vm291, %v5935, 0
  %v5965 = vsel %vm291, %v5936, 0
  %5967 = vmatpush.bf16.msra.mxu0 0
  %5968 = vmatpush.bf16.msra.mxu0 0
  %5969 = vmatpush.bf16.msra.mxu0 0
  %5970 = vmatpush.bf16.msra.mxu0 0
  %5971 = vmatpush.bf16.msra.mxu0 %v5956
  %5972 = vmatpush.bf16.msra.mxu0 %v5955
  %5973 = vmatpush.bf16.msra.mxu0 %v5954
  %5974 = vmatpush.bf16.msra.mxu0 %v5953
  %5975 = vmatmul.bf16.gmra.mxu0 %v5962
  %v5976 = vpop.f32.mrf.mxu0
  %v5977 = vadd.f32 0.0, %v5976
  %v5978 = vpop.f32.mrf.mxu0
  %v5979 = vadd.f32 0.0, %v5978
  %5980 = vmatmul.bf16.gmra.mxu0 %v5965
  %v5981 = vpop.f32.mrf.mxu0
  %v5982 = vadd.f32 0.0, %v5981
  %v5983 = vpop.f32.mrf.mxu0
  %v5984 = vadd.f32 0.0, %v5983
  %5985 = vdwg.mxu0
  %v5986 = vadd.f32 %v5914, %v5977
  %v5987 = vadd.f32 %v5915, %v5979
  %v5988 = vadd.f32 %v5916, %v5982
  %v5989 = vadd.f32 %v5917, %v5984
  %v5991 = vperm.slane %v5565, 0
  %v5993 = vadd.f32 %v5986, %v5991
  %v5994 = vadd.f32 %v5987, %v5991
  %v5995 = vadd.f32 %v5988, %v5991
  %v5996 = vadd.f32 %v5989, %v5991
  %v5997 = vsub.f32 0.0, %v5993
  %v5998 = vsub.f32 0.0, %v5994
  %v5999 = vsub.f32 0.0, %v5995
  %v6000 = vsub.f32 0.0, %v5996
  %v6001 = vmul.f32 %v5997, 1.442695
  %v6002 = vpow.pop %v6001
  %v6003 = vmul.f32 %v5998, 1.442695
  %v6004 = vpow.pop %v6003
  %v6005 = vmul.f32 %v5999, 1.442695
  %v6006 = vpow.pop %v6005
  %v6007 = vmul.f32 %v6000, 1.442695
  %v6008 = vpow.pop %v6007
  %v6009 = vadd.f32 %v6002, 1.0
  %v6010 = vadd.f32 %v6004, 1.0
  %v6011 = vadd.f32 %v6006, 1.0
  %v6012 = vadd.f32 %v6008, 1.0
  %v6013 = vrcp.pop %v6009
  %v6014 = vmul.f32 %v6009, %v6013
  %v6015 = vsub.f32 1.0, %v6014
  %v6016 = vmul.f32 %v6013, %v6015
  %v6017 = vadd.f32 %v6013, %v6016
  %vm6018 = vweird.f32 %v6009
  %vm6019 = vweird.f32 %v6013
  %vm6020 = vmor %vm6018, %vm6019
  %v6021 = vsel %vm6020, %v6013, %v6017
  %v6022 = vand.u32 2147483647, %v6009
  %vm6023 = vcmp.eq.f32.partialorder %v6022, 8.507059e+37
  %v6024 = vand.u32 %v6009, 2147483648
  %v6025 = vor.u32 1.1754944e-38, %v6024
  %v6026 = vsel %vm6023, %v6025, %v6021
  %v6027 = vmul.f32 1.0, %v6026
  %v6028 = vrcp.pop %v6010
  %v6029 = vmul.f32 %v6010, %v6028
  %v6030 = vsub.f32 1.0, %v6029
  %v6031 = vmul.f32 %v6028, %v6030
  %v6032 = vadd.f32 %v6028, %v6031
  %vm6033 = vweird.f32 %v6010
  %vm6034 = vweird.f32 %v6028
  %vm6035 = vmor %vm6033, %vm6034
  %v6036 = vsel %vm6035, %v6028, %v6032
  %v6037 = vand.u32 2147483647, %v6010
  %vm6038 = vcmp.eq.f32.partialorder %v6037, 8.507059e+37
  %v6039 = vand.u32 %v6010, 2147483648
  %v6040 = vor.u32 1.1754944e-38, %v6039
  %v6041 = vsel %vm6038, %v6040, %v6036
  %v6042 = vmul.f32 1.0, %v6041
  %v6043 = vrcp.pop %v6011
  %v6044 = vmul.f32 %v6011, %v6043
  %v6045 = vsub.f32 1.0, %v6044
  %v6046 = vmul.f32 %v6043, %v6045
  %v6047 = vadd.f32 %v6043, %v6046
  %vm6048 = vweird.f32 %v6011
  %vm6049 = vweird.f32 %v6043
  %vm6050 = vmor %vm6048, %vm6049
  %v6051 = vsel %vm6050, %v6043, %v6047
  %v6052 = vand.u32 2147483647, %v6011
  %vm6053 = vcmp.eq.f32.partialorder %v6052, 8.507059e+37
  %v6054 = vand.u32 %v6011, 2147483648
  %v6055 = vor.u32 1.1754944e-38, %v6054
  %v6056 = vsel %vm6053, %v6055, %v6051
  %v6057 = vmul.f32 1.0, %v6056
  %v6058 = vrcp.pop %v6012
  %v6059 = vmul.f32 %v6012, %v6058
  %v6060 = vsub.f32 1.0, %v6059
  %v6061 = vmul.f32 %v6058, %v6060
  %v6062 = vadd.f32 %v6058, %v6061
  %vm6063 = vweird.f32 %v6012
  %vm6064 = vweird.f32 %v6058
  %vm6065 = vmor %vm6063, %vm6064
  %v6066 = vsel %vm6065, %v6058, %v6062
  %v6067 = vand.u32 2147483647, %v6012
  %vm6068 = vcmp.eq.f32.partialorder %v6067, 8.507059e+37
  %v6069 = vand.u32 %v6012, 2147483648
  %v6070 = vor.u32 1.1754944e-38, %v6069
  %v6071 = vsel %vm6068, %v6070, %v6066
  %v6072 = vmul.f32 1.0, %v6071
  %6073 = vst.msk [vmem:[%s28] sm:$0xff] %vm1432, %v6027
  %6074 = vst.msk [vmem:[%s28 + $0x8] sm:$0xff] %vm1432, %v6042
  %6075 = vst.msk [vmem:[%s28 + $0x10] sm:$0xff] %vm1432, %v6057
  %6076 = vst.msk [vmem:[%s28 + $0x18] sm:$0xff] %vm1432, %v6072
  // Predicated region
  $region114: #{net4group3_forward.1} parent=0 // pred_check
    _
  $region115: #{net4group3_forward.1} parent=0 // pred_check_branch
    %6078 = sbr.rel (0) target = $region117
  $region116: #{net4group3_forward.1} parent=0 // pred_region
    _
  $region117: #{net4group3_forward.1} parent=0 // pred_fallthru
    _
  // Predicated region
  $region118: #{net4group3_forward.1} parent=0 // pred_check
    _
  $region119: #{net4group3_forward.1} parent=0 // pred_check_branch
    %6080 = sbr.rel (0) target = $region121
  $region120: #{net4group3_forward.1} parent=0 // pred_region
    _
  $region121: #{net4group3_forward.1} parent=0 // pred_fallthru
    _

</llo_original>
